<compile_context>
chip_gen: v7x
topology: tpu7x:2x2x1
jax: 0.10.0
libtpu: 0.0.40
codegen_flags: <defaults>
</compile_context>

<pallas_src>
import functools

import numpy as np

import jax
import jax.numpy as jnp
from jax import lax
from jax.experimental import pallas as pl
from jax.experimental.pallas import tpu as pltpu

# --------------------------------------------------------------------------
# Genotype / cell wiring (static Python metadata, mirrors Cell._compile)
# --------------------------------------------------------------------------
OP_NAMES = ('sep_conv_3x3', 'skip_connect',
            'dil_conv_3x3', 'avg_pool_3x3',
            'max_pool_3x3', 'skip_connect',
            'sep_conv_3x3', 'skip_connect')
INDICES = (0, 1, 2, 0, 1, 2, 3, 0)
CONCAT = (2, 3, 4, 5)
NUM_NODES = len(OP_NAMES) // 2
BN_EPS = 1e-5
_DMAX = 2 if 'dil_conv_3x3' in OP_NAMES else 1   # largest depthwise dilation


def _op_param_slots():
    """Per-op (dw_idx, pw_idx, bias_idx) start slots (bias 0/1 = preprocess0/1)."""
    slots, dw_i, pw_i, b_i = [], 0, 0, 2
    for name in OP_NAMES:
        if name == 'sep_conv_3x3':
            slots.append((dw_i, pw_i, b_i))
            dw_i += 2
            pw_i += 2
            b_i += 2
        elif name == 'dil_conv_3x3':
            slots.append((dw_i, pw_i, b_i))
            dw_i += 1
            pw_i += 1
            b_i += 1
        else:  # skip_connect / pooling: no parameters
            slots.append(None)
    return tuple(slots)


# --------------------------------------------------------------------------
# Fused whole-cell Pallas kernel (one grid step = one batch element)
# --------------------------------------------------------------------------
def _cell_kernel(s0_ref, s1_ref, p0w_ref, p1w_ref, b_ref, pw_ref, dw_ref,
                 icnt_ref, out_ref, xpad_ref, *, H, W, C, pad_r, pad_l, op_slots):
    """Whole-cell forward for one batch element.

    Activation layout: (H, W*C), lane-dense.  1x1 convs (+folded BN) are
    (H, W*Cin) @ block_diag matmuls; depthwise convs / pools are 9 shifted-slice
    taps read from an aligned, padded VMEM scratch buffer.
    """
    WC = W * C
    ph = H + 2 * pad_r
    pwl = WC + 2 * pad_l

    def relu(x):
        return jnp.maximum(x, 0.0)

    def conv1x1_bn(x, w, b_idx):
        # BN scale is pre-folded into w's columns; epilogue is just +bias.
        y = jnp.dot(x, w, preferred_element_type=jnp.float32)
        return y + b_ref[b_idx]                       # (1, WC) broadcast over rows

    # Trace-time cache of the current halo pad value: the interior store always
    # overwrites the interior, so the full-buffer fill is only needed when the
    # halo's pad value actually changes (0.0 <-> -inf).  Static Python state.
    cur_pad = [None]

    def fill_padded(x, pad_val):
        if cur_pad[0] != pad_val:
            xpad_ref[...] = jnp.full((ph, pwl), pad_val, jnp.float32)
            cur_pad[0] = pad_val
        # aligned interior store (interior starts at (8,128)-aligned offsets)
        xpad_ref[pad_r:pad_r + H, pad_l:pad_l + WC] = x

    def dw_conv3x3(x, dw_idx, d):
        # ReLU -> 3x3 depthwise conv, stride 1, padding=d, dilation=d.
        fill_padded(relu(x), 0.0)
        # start from the aligned center tap (i=j=1) to save one add + zero-init
        acc = xpad_ref[pad_r:pad_r + H, pad_l:pad_l + WC] * dw_ref[dw_idx, 4]
        for i in range(3):
            for j in range(3):
                if i == 1 and j == 1:
                    continue
                r0 = pad_r + (i - 1) * d
                c0 = pad_l + (j - 1) * d * C
                acc = acc + (xpad_ref[r0:r0 + H, c0:c0 + WC]
                             * dw_ref[dw_idx, 3 * i + j])
        return acc

    def pool3x3(x, mode):
        if mode == 'max':
            fill_padded(x, -jnp.inf)
            acc = jnp.full((H, WC), -jnp.inf, jnp.float32)
        else:
            fill_padded(x, 0.0)
            acc = jnp.zeros((H, WC), jnp.float32)
        for i in range(3):
            for j in range(3):
                patch = xpad_ref[pad_r + i - 1:pad_r + i - 1 + H,
                                 pad_l + (j - 1) * C:pad_l + (j - 1) * C + WC]
                acc = jnp.maximum(acc, patch) if mode == 'max' else acc + patch
        if mode == 'avg':                              # count_include_pad=False
            acc = acc * icnt_ref[...]
        return acc

    def apply_op(name, x, slots):
        if name == 'skip_connect':                     # Identity (stride 1)
            return x
        if name == 'avg_pool_3x3':
            return pool3x3(x, 'avg')
        if name == 'max_pool_3x3':
            return pool3x3(x, 'max')
        dw_i, pw_i, b_i = slots
        if name == 'sep_conv_3x3':
            y = conv1x1_bn(dw_conv3x3(x, dw_i, 1), pw_ref[pw_i], b_i)
            y = conv1x1_bn(dw_conv3x3(y, dw_i + 1, 1), pw_ref[pw_i + 1], b_i + 1)
            return y
        if name == 'dil_conv_3x3':
            return conv1x1_bn(dw_conv3x3(x, dw_i, 2), pw_ref[pw_i], b_i)
        raise ValueError(name)

    # preprocess0 / preprocess1: ReLU -> 1x1 conv -> BN (affine=False, folded)
    s0 = conv1x1_bn(relu(s0_ref[...]), p0w_ref[...], 0)
    s1 = conv1x1_bn(relu(s1_ref[...]), p1w_ref[...], 1)

    states = [s0, s1]
    for n in range(NUM_NODES):
        h1 = apply_op(OP_NAMES[2 * n], states[INDICES[2 * n]], op_slots[2 * n])
        h2 = apply_op(OP_NAMES[2 * n + 1], states[INDICES[2 * n + 1]],
                      op_slots[2 * n + 1])
        states.append(h1 + h2)

    for k, si in enumerate(CONCAT):
        out_ref[k] = states[si]


# --------------------------------------------------------------------------
# Parameter repacking (lane-dense layouts for the fused kernel)
# --------------------------------------------------------------------------
def pack_cell_params(params, H, W):
    C = params['pre0_w'].shape[1]
    WC = W * C
    eye_w = jnp.eye(W, dtype=jnp.float32)

    def blockdiag(w, scale):          # (Cin,Cout),(Cout,) -> (W*Cin, W*Cout)
        return jnp.kron(eye_w, w * scale[None, :])

    def tile_vec(v):                  # (C,) -> (1, W*C)
        return jnp.tile(v, W)[None, :]

    def tile_dw(w):                   # (3,3,C) -> (9, W*C)
        return jnp.tile(w.reshape(9, C), (1, W))

    biases = [tile_vec(params['pre0_b']), tile_vec(params['pre1_b'])]
    dws, pws = [], []
    for name, p in zip(OP_NAMES, params['ops']):
        if name == 'sep_conv_3x3':
            dws += [tile_dw(p['dw1']), tile_dw(p['dw2'])]
            pws += [blockdiag(p['pw1'], p['s1']), blockdiag(p['pw2'], p['s2'])]
            biases += [tile_vec(p['b1']), tile_vec(p['b2'])]
        elif name == 'dil_conv_3x3':
            dws += [tile_dw(p['dw'])]
            pws += [blockdiag(p['pw'], p['s'])]
            biases += [tile_vec(p['b'])]
    if not dws:  # genotype without parametric ops: keep stacks non-empty
        dws = [jnp.zeros((9, WC), jnp.float32)]
        pws = [jnp.zeros((WC, WC), jnp.float32)]

    # avg-pool 3x3 reciprocal valid-count (count_include_pad=False), (H, W*C) layout
    ones_p = np.pad(np.ones((H, W), np.float32), 1)
    cnt = sum(ones_p[i:i + H, j:j + W] for i in range(3) for j in range(3))
    inv_cnt = jnp.asarray(np.repeat((1.0 / cnt).astype(np.float32), C, axis=1))

    return dict(
        pre0_w=blockdiag(params['pre0_w'], params['pre0_s']),   # (W*Cpp, W*C)
        pre1_w=blockdiag(params['pre1_w'], params['pre1_s']),   # (W*Cprev, W*C)
        bias=jnp.stack(biases),                                 # (NB, 1, W*C)
        pw=jnp.stack(pws),                                      # (NP, W*C, W*C)
        dw=jnp.stack(dws),                                      # (ND, 9, W*C)
        inv_cnt=inv_cnt,                                        # (H, W*C)
    )


# --------------------------------------------------------------------------
# Fused cell forward (single pallas_call)
# --------------------------------------------------------------------------
def cell_forward(s0, s1, packed):
    N, H, W, Cpp = s0.shape
    Cprev = s1.shape[-1]
    WC = packed['pre0_w'].shape[1]
    C = WC // W
    K = len(CONCAT)

    pad_r = ((_DMAX + 7) // 8) * 8                 # sublane-aligned row halo
    pad_l = ((_DMAX * C + 127) // 128) * 128       # lane-aligned column halo

    kernel = functools.partial(
        _cell_kernel, H=H, W=W, C=C, pad_r=pad_r, pad_l=pad_l,
        op_slots=_op_param_slots())

    out = pl.pallas_call(
        kernel,
        out_shape=jax.ShapeDtypeStruct((N, K, H, WC), jnp.float32),
        grid=(N,),
        in_specs=[
            pl.BlockSpec((None, H, W * Cpp), lambda n: (n, 0, 0)),
            pl.BlockSpec((None, H, W * Cprev), lambda n: (n, 0, 0)),
            pl.BlockSpec(packed['pre0_w'].shape, lambda n: (0, 0)),
            pl.BlockSpec(packed['pre1_w'].shape, lambda n: (0, 0)),
            pl.BlockSpec(packed['bias'].shape, lambda n: (0, 0, 0)),
            pl.BlockSpec(packed['pw'].shape, lambda n: (0, 0, 0)),
            pl.BlockSpec(packed['dw'].shape, lambda n: (0, 0, 0)),
            pl.BlockSpec(packed['inv_cnt'].shape, lambda n: (0, 0)),
        ],
        out_specs=pl.BlockSpec((None, K, H, WC), lambda n: (n, 0, 0, 0)),
        scratch_shapes=[
            pltpu.VMEM((H + 2 * pad_r, WC + 2 * pad_l), jnp.float32)],
        compiler_params=pltpu.CompilerParams(
            dimension_semantics=("parallel",)),    # batch axis -> both TCs on v7x
    )(s0.reshape(N, H, W * Cpp), s1.reshape(N, H, W * Cprev),
      packed['pre0_w'], packed['pre1_w'], packed['bias'],
      packed['pw'], packed['dw'], packed['inv_cnt'])

    # un-interleave: (N, K, H, W*C) -> channel concat (N, H, W, K*C)
    return (out.reshape(N, K, H, W, C)
               .transpose(0, 2, 3, 1, 4)
               .reshape(N, H, W, K * C))


# --------------------------------------------------------------------------
# Parameter construction (deterministic, synthetic; BN folded for inference)
# --------------------------------------------------------------------------
def _bn_fold(gamma, beta, mean, var, eps=BN_EPS):
    scale = gamma / jnp.sqrt(var + eps)
    bias = beta - mean * scale
    return scale, bias


def _make_bn(key, C, affine):
    k1, k2, k3, k4 = jax.random.split(key, 4)
    mean = 0.1 * jax.random.normal(k1, (C,), jnp.float32)
    var = 1.0 + 0.1 * jax.random.uniform(k2, (C,), jnp.float32)
    if affine:
        gamma = 1.0 + 0.1 * jax.random.normal(k3, (C,), jnp.float32)
        beta = 0.1 * jax.random.normal(k4, (C,), jnp.float32)
    else:
        gamma = jnp.ones((C,), jnp.float32)
        beta = jnp.zeros((C,), jnp.float32)
    return _bn_fold(gamma, beta, mean, var)


def _make_sep_conv(key, C):
    ks = jax.random.split(key, 6)
    s1, b1 = _make_bn(ks[4], C, affine=True)
    s2, b2 = _make_bn(ks[5], C, affine=True)
    return dict(
        dw1=0.2 * jax.random.normal(ks[0], (3, 3, C), jnp.float32),
        pw1=0.2 * jax.random.normal(ks[1], (C, C), jnp.float32),
        dw2=0.2 * jax.random.normal(ks[2], (3, 3, C), jnp.float32),
        pw2=0.2 * jax.random.normal(ks[3], (C, C), jnp.float32),
        s1=s1, b1=b1, s2=s2, b2=b2)


def _make_dil_conv(key, C):
    ks = jax.random.split(key, 3)
    s, b = _make_bn(ks[2], C, affine=True)
    return dict(
        dw=0.2 * jax.random.normal(ks[0], (3, 3, C), jnp.float32),
        pw=0.2 * jax.random.normal(ks[1], (C, C), jnp.float32),
        s=s, b=b)


def make_cell_params(key, C_prev_prev, C_prev, C):
    keys = jax.random.split(key, 4 + len(OP_NAMES))
    s0s, s0b = _make_bn(keys[1], C, affine=False)   # ReLUConvBN(affine=False)
    s1s, s1b = _make_bn(keys[3], C, affine=False)
    params = dict(
        pre0_w=0.2 * jax.random.normal(keys[0], (C_prev_prev, C), jnp.float32),
        pre0_s=s0s, pre0_b=s0b,
        pre1_w=0.2 * jax.random.normal(keys[2], (C_prev, C), jnp.float32),
        pre1_s=s1s, pre1_b=s1b,
        ops=[])
    for idx, name in enumerate(OP_NAMES):
        k = keys[4 + idx]
        if name == 'sep_conv_3x3':
            params['ops'].append(_make_sep_conv(k, C))
        elif name == 'dil_conv_3x3':
            params['ops'].append(_make_dil_conv(k, C))
        else:  # pooling / skip_connect have no parameters
            params['ops'].append({})
    return params


# --------------------------------------------------------------------------
# Pure-JAX reference (mirrors the PyTorch Cell.forward semantics, NHWC)
# --------------------------------------------------------------------------
def _ref_pointwise_bn(x, w, s, b, relu):
    if relu:
        x = jnp.maximum(x, 0.0)
    y = jnp.einsum('nhwc,cd->nhwd', x, w, precision=lax.Precision.HIGHEST)
    return y * s + b


def _ref_dwconv(x, w, d, relu):
    if relu:
        x = jnp.maximum(x, 0.0)
    _, H, W, _ = x.shape
    xp = jnp.pad(x, ((0, 0), (d, d), (d, d), (0, 0)))
    acc = jnp.zeros_like(x)
    for i in range(3):
        for j in range(3):
            acc = acc + xp[:, i * d:i * d + H, j * d:j * d + W, :] * w[i, j]
    return acc


def _ref_pool(x, mode):
    _, H, W, _ = x.shape
    padv = -jnp.inf if mode == 'max' else 0.0
    xp = jnp.pad(x, ((0, 0), (1, 1), (1, 1), (0, 0)), constant_values=padv)
    if mode == 'max':
        acc = jnp.full_like(x, -jnp.inf)
        for i in range(3):
            for j in range(3):
                acc = jnp.maximum(acc, xp[:, i:i + H, j:j + W, :])
        return acc
    acc = sum(xp[:, i:i + H, j:j + W, :] for i in range(3) for j in range(3))
    ones = jnp.pad(jnp.ones((H, W), jnp.float32), 1)
    cnt = sum(ones[i:i + H, j:j + W] for i in range(3) for j in range(3))
    return acc / cnt[None, :, :, None]


def _ref_apply_op(name, x, p):
    if name == 'skip_connect':
        return x
    if name == 'avg_pool_3x3':
        return _ref_pool(x, 'avg')
    if name == 'max_pool_3x3':
        return _ref_pool(x, 'max')
    if name == 'sep_conv_3x3':
        y = _ref_dwconv(x, p['dw1'], 1, True)
        y = _ref_pointwise_bn(y, p['pw1'], p['s1'], p['b1'], False)
        y = _ref_dwconv(y, p['dw2'], 1, True)
        y = _ref_pointwise_bn(y, p['pw2'], p['s2'], p['b2'], False)
        return y
    if name == 'dil_conv_3x3':
        y = _ref_dwconv(x, p['dw'], 2, True)
        return _ref_pointwise_bn(y, p['pw'], p['s'], p['b'], False)
    raise ValueError(name)


def cell_forward_reference(s0, s1, params):
    s0 = _ref_pointwise_bn(s0, params['pre0_w'], params['pre0_s'],
                           params['pre0_b'], True)
    s1 = _ref_pointwise_bn(s1, params['pre1_w'], params['pre1_s'],
                           params['pre1_b'], True)
    states = [s0, s1]
    for i in range(NUM_NODES):
        h1 = _ref_apply_op(OP_NAMES[2 * i], states[INDICES[2 * i]],
                           params['ops'][2 * i])
        h2 = _ref_apply_op(OP_NAMES[2 * i + 1], states[INDICES[2 * i + 1]],
                           params['ops'][2 * i + 1])
        states.append(h1 + h2)
    return jnp.concatenate([states[i] for i in CONCAT], axis=-1)


# --------------------------------------------------------------------------
# Main
# --------------------------------------------------------------------------
if __name__ == "__main__":
    N, H, W = 2, 16, 16
    C_prev_prev, C_prev, C = 8, 8, 8

    key = jax.random.PRNGKey(0)
    k_s0, k_s1, k_p = jax.random.split(key, 3)
    s0 = jax.random.normal(k_s0, (N, H, W, C_prev_prev), jnp.float32)
    s1 = jax.random.normal(k_s1, (N, H, W, C_prev), jnp.float32)

    params = make_cell_params(k_p, C_prev_prev, C_prev, C)
    packed = pack_cell_params(params, H, W)     # one-time weight repack

    out = jax.jit(cell_forward)(s0, s1, packed)
    out = jax.block_until_ready(out)

    assert out.shape == (N, H, W, C * len(CONCAT)), out.shape
    assert bool(jnp.all(jnp.isfinite(out)))

    # cross-check the fused kernel against a straightforward jnp reference
    ref = jax.block_until_ready(jax.jit(cell_forward_reference)(s0, s1, params))
    max_err = float(jnp.max(jnp.abs(out - ref)))
    assert max_err < 2e-2, f"mismatch vs reference: {max_err}"

    print("KERNEL_OK")
</pallas_src>

<mosaic_0001>
module attributes {stable_mosaic.version = 11 : i64} {
  func.func @_cell_kernel(%arg0: i32, %arg1: memref<1x16x128xf32, #tpu.memory_space<vmem>>, %arg2: memref<1x16x128xf32, #tpu.memory_space<vmem>>, %arg3: memref<128x128xf32, #tpu.memory_space<vmem>>, %arg4: memref<128x128xf32, #tpu.memory_space<vmem>>, %arg5: memref<7x1x128xf32, #tpu.memory_space<vmem>>, %arg6: memref<5x128x128xf32, #tpu.memory_space<vmem>>, %arg7: memref<5x9x128xf32, #tpu.memory_space<vmem>>, %arg8: memref<16x128xf32, #tpu.memory_space<vmem>>, %arg9: memref<1x4x16x128xf32, #tpu.memory_space<vmem>>, %arg10: memref<32x384xf32, #tpu.memory_space<vmem>>) attributes {dimension_semantics = [#tpu.dimension_semantics<parallel>], iteration_bounds = array<i64: 2>, scalar_prefetch = 0 : i64, scratch_operands = 1 : i64, tpu.core_type = #tpu.core_type<tc>, window_params = [{transform_indices = @transform_0, window_bounds = array<i64: 1, 16, 128>}, {transform_indices = @transform_1, window_bounds = array<i64: 1, 16, 128>}, {pipeline_mode = #tpu.pipeline_mode<synchronous>, transform_indices = @transform_2, window_bounds = array<i64: 128, 128>}, {pipeline_mode = #tpu.pipeline_mode<synchronous>, transform_indices = @transform_3, window_bounds = array<i64: 128, 128>}, {pipeline_mode = #tpu.pipeline_mode<synchronous>, transform_indices = @transform_4, window_bounds = array<i64: 7, 1, 128>}, {pipeline_mode = #tpu.pipeline_mode<synchronous>, transform_indices = @transform_5, window_bounds = array<i64: 5, 128, 128>}, {pipeline_mode = #tpu.pipeline_mode<synchronous>, transform_indices = @transform_6, window_bounds = array<i64: 5, 9, 128>}, {pipeline_mode = #tpu.pipeline_mode<synchronous>, transform_indices = @transform_7, window_bounds = array<i64: 16, 128>}, {transform_indices = @transform_8, window_bounds = array<i64: 1, 4, 16, 128>}]} {
    %c0 = arith.constant 0 : index
    %c0_0 = arith.constant 0 : index
    %c0_1 = arith.constant 0 : index
    %0 = vector.load %arg1[%c0, %c0_0, %c0_1] : memref<1x16x128xf32, #tpu.memory_space<vmem>>, vector<1x16x128xf32>
    %1 = vector.shape_cast %0 : vector<1x16x128xf32> to vector<16x128xf32>
    %cst = arith.constant 0.000000e+00 : f32
    %2 = vector.broadcast %cst : f32 to vector<16x128xf32>
    %3 = arith.maximumf %1, %2 : vector<16x128xf32>
    %c0_2 = arith.constant 0 : index
    %c0_3 = arith.constant 0 : index
    %4 = vector.load %arg3[%c0_2, %c0_3] : memref<128x128xf32, #tpu.memory_space<vmem>>, vector<128x128xf32>
    %cst_4 = arith.constant dense<0.000000e+00> : vector<16x128xf32>
    %5 = tpu.matmul %3, %4, %cst_4 {dimension_numbers = #tpu.dot_dimension_numbers<[1], [0], [0], [1], [0, 0, 1, 1], [], []>} : vector<16x128xf32>, vector<128x128xf32>, vector<16x128xf32> -> vector<16x128xf32>
    %c0_5 = arith.constant 0 : index
    %c0_6 = arith.constant 0 : index
    %c0_7 = arith.constant 0 : index
    %6 = vector.load %arg5[%c0_5, %c0_6, %c0_7] : memref<7x1x128xf32, #tpu.memory_space<vmem>>, vector<1x1x128xf32>
    %7 = vector.shape_cast %6 : vector<1x1x128xf32> to vector<1x128xf32>
    %8 = vector.broadcast %7 : vector<1x128xf32> to vector<16x128xf32>
    %9 = arith.addf %5, %8 : vector<16x128xf32>
    %c0_8 = arith.constant 0 : index
    %c0_9 = arith.constant 0 : index
    %c0_10 = arith.constant 0 : index
    %10 = vector.load %arg2[%c0_8, %c0_9, %c0_10] : memref<1x16x128xf32, #tpu.memory_space<vmem>>, vector<1x16x128xf32>
    %11 = vector.shape_cast %10 : vector<1x16x128xf32> to vector<16x128xf32>
    %cst_11 = arith.constant 0.000000e+00 : f32
    %12 = vector.broadcast %cst_11 : f32 to vector<16x128xf32>
    %13 = arith.maximumf %11, %12 : vector<16x128xf32>
    %c0_12 = arith.constant 0 : index
    %c0_13 = arith.constant 0 : index
    %14 = vector.load %arg4[%c0_12, %c0_13] : memref<128x128xf32, #tpu.memory_space<vmem>>, vector<128x128xf32>
    %cst_14 = arith.constant dense<0.000000e+00> : vector<16x128xf32>
    %15 = tpu.matmul %13, %14, %cst_14 {dimension_numbers = #tpu.dot_dimension_numbers<[1], [0], [0], [1], [0, 0, 1, 1], [], []>} : vector<16x128xf32>, vector<128x128xf32>, vector<16x128xf32> -> vector<16x128xf32>
    %c1 = arith.constant 1 : index
    %c0_15 = arith.constant 0 : index
    %c0_16 = arith.constant 0 : index
    %16 = vector.load %arg5[%c1, %c0_15, %c0_16] : memref<7x1x128xf32, #tpu.memory_space<vmem>>, vector<1x1x128xf32>
    %17 = vector.shape_cast %16 : vector<1x1x128xf32> to vector<1x128xf32>
    %18 = vector.broadcast %17 : vector<1x128xf32> to vector<16x128xf32>
    %19 = arith.addf %15, %18 : vector<16x128xf32>
    %cst_17 = arith.constant 0.000000e+00 : f32
    %20 = vector.broadcast %cst_17 : f32 to vector<16x128xf32>
    %21 = arith.maximumf %9, %20 : vector<16x128xf32>
    %cst_18 = arith.constant 0.000000e+00 : f32
    %22 = vector.broadcast %cst_18 : f32 to vector<32x384xf32>
    %c0_19 = arith.constant 0 : index
    %c0_20 = arith.constant 0 : index
    %23 = vector.load %arg10[%c0_19, %c0_20] : memref<32x384xf32, #tpu.memory_space<vmem>>, vector<32x384xf32>
    tpu.vector_store %arg10[%c0_19, %c0_20], %22 {strides = array<i32>} : memref<32x384xf32, #tpu.memory_space<vmem>>, vector<32x384xf32>,
    %c8 = arith.constant 8 : index
    %c128 = arith.constant 128 : index
    %24 = vector.load %arg10[%c8, %c128] : memref<32x384xf32, #tpu.memory_space<vmem>>, vector<16x128xf32>
    tpu.vector_store %arg10[%c8, %c128], %21 {strides = array<i32>} : memref<32x384xf32, #tpu.memory_space<vmem>>, vector<16x128xf32>,
    %c8_21 = arith.constant 8 : index
    %c128_22 = arith.constant 128 : index
    %25 = vector.load %arg10[%c8_21, %c128_22] : memref<32x384xf32, #tpu.memory_space<vmem>>, vector<16x128xf32>
    %c0_23 = arith.constant 0 : index
    %c4 = arith.constant 4 : index
    %c0_24 = arith.constant 0 : index
    %26 = vector.load %arg7[%c0_23, %c4, %c0_24] : memref<5x9x128xf32, #tpu.memory_space<vmem>>, vector<1x1x128xf32>
    %27 = vector.shape_cast %26 : vector<1x1x128xf32> to vector<128xf32>
    %28 = vector.shape_cast %27 : vector<128xf32> to vector<1x128xf32>
    %29 = vector.broadcast %28 : vector<1x128xf32> to vector<16x128xf32>
    %30 = arith.mulf %25, %29 : vector<16x128xf32>
    %c7 = arith.constant 7 : index
    %c120 = arith.constant 120 : index
    %31 = vector.load %arg10[%c7, %c120] : memref<32x384xf32, #tpu.memory_space<vmem>>, vector<16x128xf32>
    %c0_25 = arith.constant 0 : index
    %c0_26 = arith.constant 0 : index
    %c0_27 = arith.constant 0 : index
    %32 = vector.load %arg7[%c0_25, %c0_26, %c0_27] : memref<5x9x128xf32, #tpu.memory_space<vmem>>, vector<1x1x128xf32>
    %33 = vector.shape_cast %32 : vector<1x1x128xf32> to vector<128xf32>
    %34 = vector.shape_cast %33 : vector<128xf32> to vector<1x128xf32>
    %35 = vector.broadcast %34 : vector<1x128xf32> to vector<16x128xf32>
    %36 = arith.mulf %31, %35 : vector<16x128xf32>
    %37 = arith.addf %30, %36 : vector<16x128xf32>
    %c7_28 = arith.constant 7 : index
    %c128_29 = arith.constant 128 : index
    %38 = vector.load %arg10[%c7_28, %c128_29] : memref<32x384xf32, #tpu.memory_space<vmem>>, vector<16x128xf32>
    %c0_30 = arith.constant 0 : index
    %c1_31 = arith.constant 1 : index
    %c0_32 = arith.constant 0 : index
    %39 = vector.load %arg7[%c0_30, %c1_31, %c0_32] : memref<5x9x128xf32, #tpu.memory_space<vmem>>, vector<1x1x128xf32>
    %40 = vector.shape_cast %39 : vector<1x1x128xf32> to vector<128xf32>
    %41 = vector.shape_cast %40 : vector<128xf32> to vector<1x128xf32>
    %42 = vector.broadcast %41 : vector<1x128xf32> to vector<16x128xf32>
    %43 = arith.mulf %38, %42 : vector<16x128xf32>
    %44 = arith.addf %37, %43 : vector<16x128xf32>
    %c7_33 = arith.constant 7 : index
    %c136 = arith.constant 136 : index
    %45 = vector.load %arg10[%c7_33, %c136] : memref<32x384xf32, #tpu.memory_space<vmem>>, vector<16x128xf32>
    %c0_34 = arith.constant 0 : index
    %c2 = arith.constant 2 : index
    %c0_35 = arith.constant 0 : index
    %46 = vector.load %arg7[%c0_34, %c2, %c0_35] : memref<5x9x128xf32, #tpu.memory_space<vmem>>, vector<1x1x128xf32>
    %47 = vector.shape_cast %46 : vector<1x1x128xf32> to vector<128xf32>
    %48 = vector.shape_cast %47 : vector<128xf32> to vector<1x128xf32>
    %49 = vector.broadcast %48 : vector<1x128xf32> to vector<16x128xf32>
    %50 = arith.mulf %45, %49 : vector<16x128xf32>
    %51 = arith.addf %44, %50 : vector<16x128xf32>
    %c8_36 = arith.constant 8 : index
    %c120_37 = arith.constant 120 : index
    %52 = vector.load %arg10[%c8_36, %c120_37] : memref<32x384xf32, #tpu.memory_space<vmem>>, vector<16x128xf32>
    %c0_38 = arith.constant 0 : index
    %c3 = arith.constant 3 : index
    %c0_39 = arith.constant 0 : index
    %53 = vector.load %arg7[%c0_38, %c3, %c0_39] : memref<5x9x128xf32, #tpu.memory_space<vmem>>, vector<1x1x128xf32>
    %54 = vector.shape_cast %53 : vector<1x1x128xf32> to vector<128xf32>
    %55 = vector.shape_cast %54 : vector<128xf32> to vector<1x128xf32>
    %56 = vector.broadcast %55 : vector<1x128xf32> to vector<16x128xf32>
    %57 = arith.mulf %52, %56 : vector<16x128xf32>
    %58 = arith.addf %51, %57 : vector<16x128xf32>
    %c8_40 = arith.constant 8 : index
    %c136_41 = arith.constant 136 : index
    %59 = vector.load %arg10[%c8_40, %c136_41] : memref<32x384xf32, #tpu.memory_space<vmem>>, vector<16x128xf32>
    %c0_42 = arith.constant 0 : index
    %c5 = arith.constant 5 : index
    %c0_43 = arith.constant 0 : index
    %60 = vector.load %arg7[%c0_42, %c5, %c0_43] : memref<5x9x128xf32, #tpu.memory_space<vmem>>, vector<1x1x128xf32>
    %61 = vector.shape_cast %60 : vector<1x1x128xf32> to vector<128xf32>
    %62 = vector.shape_cast %61 : vector<128xf32> to vector<1x128xf32>
    %63 = vector.broadcast %62 : vector<1x128xf32> to vector<16x128xf32>
    %64 = arith.mulf %59, %63 : vector<16x128xf32>
    %65 = arith.addf %58, %64 : vector<16x128xf32>
    %c9 = arith.constant 9 : index
    %c120_44 = arith.constant 120 : index
    %66 = vector.load %arg10[%c9, %c120_44] : memref<32x384xf32, #tpu.memory_space<vmem>>, vector<16x128xf32>
    %c0_45 = arith.constant 0 : index
    %c6 = arith.constant 6 : index
    %c0_46 = arith.constant 0 : index
    %67 = vector.load %arg7[%c0_45, %c6, %c0_46] : memref<5x9x128xf32, #tpu.memory_space<vmem>>, vector<1x1x128xf32>
    %68 = vector.shape_cast %67 : vector<1x1x128xf32> to vector<128xf32>
    %69 = vector.shape_cast %68 : vector<128xf32> to vector<1x128xf32>
    %70 = vector.broadcast %69 : vector<1x128xf32> to vector<16x128xf32>
    %71 = arith.mulf %66, %70 : vector<16x128xf32>
    %72 = arith.addf %65, %71 : vector<16x128xf32>
    %c9_47 = arith.constant 9 : index
    %c128_48 = arith.constant 128 : index
    %73 = vector.load %arg10[%c9_47, %c128_48] : memref<32x384xf32, #tpu.memory_space<vmem>>, vector<16x128xf32>
    %c0_49 = arith.constant 0 : index
    %c7_50 = arith.constant 7 : index
    %c0_51 = arith.constant 0 : index
    %74 = vector.load %arg7[%c0_49, %c7_50, %c0_51] : memref<5x9x128xf32, #tpu.memory_space<vmem>>, vector<1x1x128xf32>
    %75 = vector.shape_cast %74 : vector<1x1x128xf32> to vector<128xf32>
    %76 = vector.shape_cast %75 : vector<128xf32> to vector<1x128xf32>
    %77 = vector.broadcast %76 : vector<1x128xf32> to vector<16x128xf32>
    %78 = arith.mulf %73, %77 : vector<16x128xf32>
    %79 = arith.addf %72, %78 : vector<16x128xf32>
    %c9_52 = arith.constant 9 : index
    %c136_53 = arith.constant 136 : index
    %80 = vector.load %arg10[%c9_52, %c136_53] : memref<32x384xf32, #tpu.memory_space<vmem>>, vector<16x128xf32>
    %c0_54 = arith.constant 0 : index
    %c8_55 = arith.constant 8 : index
    %c0_56 = arith.constant 0 : index
    %81 = vector.load %arg7[%c0_54, %c8_55, %c0_56] : memref<5x9x128xf32, #tpu.memory_space<vmem>>, vector<1x1x128xf32>
    %82 = vector.shape_cast %81 : vector<1x1x128xf32> to vector<128xf32>
    %83 = vector.shape_cast %82 : vector<128xf32> to vector<1x128xf32>
    %84 = vector.broadcast %83 : vector<1x128xf32> to vector<16x128xf32>
    %85 = arith.mulf %80, %84 : vector<16x128xf32>
    %86 = arith.addf %79, %85 : vector<16x128xf32>
    %c0_57 = arith.constant 0 : index
    %c0_58 = arith.constant 0 : index
    %c0_59 = arith.constant 0 : index
    %87 = vector.load %arg6[%c0_57, %c0_58, %c0_59] : memref<5x128x128xf32, #tpu.memory_space<vmem>>, vector<1x128x128xf32>
    %88 = vector.shape_cast %87 : vector<1x128x128xf32> to vector<128x128xf32>
    %cst_60 = arith.constant dense<0.000000e+00> : vector<16x128xf32>
    %89 = tpu.matmul %86, %88, %cst_60 {dimension_numbers = #tpu.dot_dimension_numbers<[1], [0], [0], [1], [0, 0, 1, 1], [], []>} : vector<16x128xf32>, vector<128x128xf32>, vector<16x128xf32> -> vector<16x128xf32>
    %c2_61 = arith.constant 2 : index
    %c0_62 = arith.constant 0 : index
    %c0_63 = arith.constant 0 : index
    %90 = vector.load %arg5[%c2_61, %c0_62, %c0_63] : memref<7x1x128xf32, #tpu.memory_space<vmem>>, vector<1x1x128xf32>
    %91 = vector.shape_cast %90 : vector<1x1x128xf32> to vector<1x128xf32>
    %92 = vector.broadcast %91 : vector<1x128xf32> to vector<16x128xf32>
    %93 = arith.addf %89, %92 : vector<16x128xf32>
    %cst_64 = arith.constant 0.000000e+00 : f32
    %94 = vector.broadcast %cst_64 : f32 to vector<16x128xf32>
    %95 = arith.maximumf %93, %94 : vector<16x128xf32>
    %c8_65 = arith.constant 8 : index
    %c128_66 = arith.constant 128 : index
    %96 = vector.load %arg10[%c8_65, %c128_66] : memref<32x384xf32, #tpu.memory_space<vmem>>, vector<16x128xf32>
    tpu.vector_store %arg10[%c8_65, %c128_66], %95 {strides = array<i32>} : memref<32x384xf32, #tpu.memory_space<vmem>>, vector<16x128xf32>,
    %c8_67 = arith.constant 8 : index
    %c128_68 = arith.constant 128 : index
    %97 = vector.load %arg10[%c8_67, %c128_68] : memref<32x384xf32, #tpu.memory_space<vmem>>, vector<16x128xf32>
    %c1_69 = arith.constant 1 : index
    %c4_70 = arith.constant 4 : index
    %c0_71 = arith.constant 0 : index
    %98 = vector.load %arg7[%c1_69, %c4_70, %c0_71] : memref<5x9x128xf32, #tpu.memory_space<vmem>>, vector<1x1x128xf32>
    %99 = vector.shape_cast %98 : vector<1x1x128xf32> to vector<128xf32>
    %100 = vector.shape_cast %99 : vector<128xf32> to vector<1x128xf32>
    %101 = vector.broadcast %100 : vector<1x128xf32> to vector<16x128xf32>
    %102 = arith.mulf %97, %101 : vector<16x128xf32>
    %c7_72 = arith.constant 7 : index
    %c120_73 = arith.constant 120 : index
    %103 = vector.load %arg10[%c7_72, %c120_73] : memref<32x384xf32, #tpu.memory_space<vmem>>, vector<16x128xf32>
    %c1_74 = arith.constant 1 : index
    %c0_75 = arith.constant 0 : index
    %c0_76 = arith.constant 0 : index
    %104 = vector.load %arg7[%c1_74, %c0_75, %c0_76] : memref<5x9x128xf32, #tpu.memory_space<vmem>>, vector<1x1x128xf32>
    %105 = vector.shape_cast %104 : vector<1x1x128xf32> to vector<128xf32>
    %106 = vector.shape_cast %105 : vector<128xf32> to vector<1x128xf32>
    %107 = vector.broadcast %106 : vector<1x128xf32> to vector<16x128xf32>
    %108 = arith.mulf %103, %107 : vector<16x128xf32>
    %109 = arith.addf %102, %108 : vector<16x128xf32>
    %c7_77 = arith.constant 7 : index
    %c128_78 = arith.constant 128 : index
    %110 = vector.load %arg10[%c7_77, %c128_78] : memref<32x384xf32, #tpu.memory_space<vmem>>, vector<16x128xf32>
    %c1_79 = arith.constant 1 : index
    %c1_80 = arith.constant 1 : index
    %c0_81 = arith.constant 0 : index
    %111 = vector.load %arg7[%c1_79, %c1_80, %c0_81] : memref<5x9x128xf32, #tpu.memory_space<vmem>>, vector<1x1x128xf32>
    %112 = vector.shape_cast %111 : vector<1x1x128xf32> to vector<128xf32>
    %113 = vector.shape_cast %112 : vector<128xf32> to vector<1x128xf32>
    %114 = vector.broadcast %113 : vector<1x128xf32> to vector<16x128xf32>
    %115 = arith.mulf %110, %114 : vector<16x128xf32>
    %116 = arith.addf %109, %115 : vector<16x128xf32>
    %c7_82 = arith.constant 7 : index
    %c136_83 = arith.constant 136 : index
    %117 = vector.load %arg10[%c7_82, %c136_83] : memref<32x384xf32, #tpu.memory_space<vmem>>, vector<16x128xf32>
    %c1_84 = arith.constant 1 : index
    %c2_85 = arith.constant 2 : index
    %c0_86 = arith.constant 0 : index
    %118 = vector.load %arg7[%c1_84, %c2_85, %c0_86] : memref<5x9x128xf32, #tpu.memory_space<vmem>>, vector<1x1x128xf32>
    %119 = vector.shape_cast %118 : vector<1x1x128xf32> to vector<128xf32>
    %120 = vector.shape_cast %119 : vector<128xf32> to vector<1x128xf32>
    %121 = vector.broadcast %120 : vector<1x128xf32> to vector<16x128xf32>
    %122 = arith.mulf %117, %121 : vector<16x128xf32>
    %123 = arith.addf %116, %122 : vector<16x128xf32>
    %c8_87 = arith.constant 8 : index
    %c120_88 = arith.constant 120 : index
    %124 = vector.load %arg10[%c8_87, %c120_88] : memref<32x384xf32, #tpu.memory_space<vmem>>, vector<16x128xf32>
    %c1_89 = arith.constant 1 : index
    %c3_90 = arith.constant 3 : index
    %c0_91 = arith.constant 0 : index
    %125 = vector.load %arg7[%c1_89, %c3_90, %c0_91] : memref<5x9x128xf32, #tpu.memory_space<vmem>>, vector<1x1x128xf32>
    %126 = vector.shape_cast %125 : vector<1x1x128xf32> to vector<128xf32>
    %127 = vector.shape_cast %126 : vector<128xf32> to vector<1x128xf32>
    %128 = vector.broadcast %127 : vector<1x128xf32> to vector<16x128xf32>
    %129 = arith.mulf %124, %128 : vector<16x128xf32>
    %130 = arith.addf %123, %129 : vector<16x128xf32>
    %c8_92 = arith.constant 8 : index
    %c136_93 = arith.constant 136 : index
    %131 = vector.load %arg10[%c8_92, %c136_93] : memref<32x384xf32, #tpu.memory_space<vmem>>, vector<16x128xf32>
    %c1_94 = arith.constant 1 : index
    %c5_95 = arith.constant 5 : index
    %c0_96 = arith.constant 0 : index
    %132 = vector.load %arg7[%c1_94, %c5_95, %c0_96] : memref<5x9x128xf32, #tpu.memory_space<vmem>>, vector<1x1x128xf32>
    %133 = vector.shape_cast %132 : vector<1x1x128xf32> to vector<128xf32>
    %134 = vector.shape_cast %133 : vector<128xf32> to vector<1x128xf32>
    %135 = vector.broadcast %134 : vector<1x128xf32> to vector<16x128xf32>
    %136 = arith.mulf %131, %135 : vector<16x128xf32>
    %137 = arith.addf %130, %136 : vector<16x128xf32>
    %c9_97 = arith.constant 9 : index
    %c120_98 = arith.constant 120 : index
    %138 = vector.load %arg10[%c9_97, %c120_98] : memref<32x384xf32, #tpu.memory_space<vmem>>, vector<16x128xf32>
    %c1_99 = arith.constant 1 : index
    %c6_100 = arith.constant 6 : index
    %c0_101 = arith.constant 0 : index
    %139 = vector.load %arg7[%c1_99, %c6_100, %c0_101] : memref<5x9x128xf32, #tpu.memory_space<vmem>>, vector<1x1x128xf32>
    %140 = vector.shape_cast %139 : vector<1x1x128xf32> to vector<128xf32>
    %141 = vector.shape_cast %140 : vector<128xf32> to vector<1x128xf32>
    %142 = vector.broadcast %141 : vector<1x128xf32> to vector<16x128xf32>
    %143 = arith.mulf %138, %142 : vector<16x128xf32>
    %144 = arith.addf %137, %143 : vector<16x128xf32>
    %c9_102 = arith.constant 9 : index
    %c128_103 = arith.constant 128 : index
    %145 = vector.load %arg10[%c9_102, %c128_103] : memref<32x384xf32, #tpu.memory_space<vmem>>, vector<16x128xf32>
    %c1_104 = arith.constant 1 : index
    %c7_105 = arith.constant 7 : index
    %c0_106 = arith.constant 0 : index
    %146 = vector.load %arg7[%c1_104, %c7_105, %c0_106] : memref<5x9x128xf32, #tpu.memory_space<vmem>>, vector<1x1x128xf32>
    %147 = vector.shape_cast %146 : vector<1x1x128xf32> to vector<128xf32>
    %148 = vector.shape_cast %147 : vector<128xf32> to vector<1x128xf32>
    %149 = vector.broadcast %148 : vector<1x128xf32> to vector<16x128xf32>
    %150 = arith.mulf %145, %149 : vector<16x128xf32>
    %151 = arith.addf %144, %150 : vector<16x128xf32>
    %c9_107 = arith.constant 9 : index
    %c136_108 = arith.constant 136 : index
    %152 = vector.load %arg10[%c9_107, %c136_108] : memref<32x384xf32, #tpu.memory_space<vmem>>, vector<16x128xf32>
    %c1_109 = arith.constant 1 : index
    %c8_110 = arith.constant 8 : index
    %c0_111 = arith.constant 0 : index
    %153 = vector.load %arg7[%c1_109, %c8_110, %c0_111] : memref<5x9x128xf32, #tpu.memory_space<vmem>>, vector<1x1x128xf32>
    %154 = vector.shape_cast %153 : vector<1x1x128xf32> to vector<128xf32>
    %155 = vector.shape_cast %154 : vector<128xf32> to vector<1x128xf32>
    %156 = vector.broadcast %155 : vector<1x128xf32> to vector<16x128xf32>
    %157 = arith.mulf %152, %156 : vector<16x128xf32>
    %158 = arith.addf %151, %157 : vector<16x128xf32>
    %c1_112 = arith.constant 1 : index
    %c0_113 = arith.constant 0 : index
    %c0_114 = arith.constant 0 : index
    %159 = vector.load %arg6[%c1_112, %c0_113, %c0_114] : memref<5x128x128xf32, #tpu.memory_space<vmem>>, vector<1x128x128xf32>
    %160 = vector.shape_cast %159 : vector<1x128x128xf32> to vector<128x128xf32>
    %cst_115 = arith.constant dense<0.000000e+00> : vector<16x128xf32>
    %161 = tpu.matmul %158, %160, %cst_115 {dimension_numbers = #tpu.dot_dimension_numbers<[1], [0], [0], [1], [0, 0, 1, 1], [], []>} : vector<16x128xf32>, vector<128x128xf32>, vector<16x128xf32> -> vector<16x128xf32>
    %c3_116 = arith.constant 3 : index
    %c0_117 = arith.constant 0 : index
    %c0_118 = arith.constant 0 : index
    %162 = vector.load %arg5[%c3_116, %c0_117, %c0_118] : memref<7x1x128xf32, #tpu.memory_space<vmem>>, vector<1x1x128xf32>
    %163 = vector.shape_cast %162 : vector<1x1x128xf32> to vector<1x128xf32>
    %164 = vector.broadcast %163 : vector<1x128xf32> to vector<16x128xf32>
    %165 = arith.addf %161, %164 : vector<16x128xf32>
    %166 = arith.addf %165, %19 : vector<16x128xf32>
    %cst_119 = arith.constant 0.000000e+00 : f32
    %167 = vector.broadcast %cst_119 : f32 to vector<16x128xf32>
    %168 = arith.maximumf %166, %167 : vector<16x128xf32>
    %c8_120 = arith.constant 8 : index
    %c128_121 = arith.constant 128 : index
    %169 = vector.load %arg10[%c8_120, %c128_121] : memref<32x384xf32, #tpu.memory_space<vmem>>, vector<16x128xf32>
    tpu.vector_store %arg10[%c8_120, %c128_121], %168 {strides = array<i32>} : memref<32x384xf32, #tpu.memory_space<vmem>>, vector<16x128xf32>,
    %c8_122 = arith.constant 8 : index
    %c128_123 = arith.constant 128 : index
    %170 = vector.load %arg10[%c8_122, %c128_123] : memref<32x384xf32, #tpu.memory_space<vmem>>, vector<16x128xf32>
    %c2_124 = arith.constant 2 : index
    %c4_125 = arith.constant 4 : index
    %c0_126 = arith.constant 0 : index
    %171 = vector.load %arg7[%c2_124, %c4_125, %c0_126] : memref<5x9x128xf32, #tpu.memory_space<vmem>>, vector<1x1x128xf32>
    %172 = vector.shape_cast %171 : vector<1x1x128xf32> to vector<128xf32>
    %173 = vector.shape_cast %172 : vector<128xf32> to vector<1x128xf32>
    %174 = vector.broadcast %173 : vector<1x128xf32> to vector<16x128xf32>
    %175 = arith.mulf %170, %174 : vector<16x128xf32>
    %c6_127 = arith.constant 6 : index
    %c112 = arith.constant 112 : index
    %176 = vector.load %arg10[%c6_127, %c112] : memref<32x384xf32, #tpu.memory_space<vmem>>, vector<16x128xf32>
    %c2_128 = arith.constant 2 : index
    %c0_129 = arith.constant 0 : index
    %c0_130 = arith.constant 0 : index
    %177 = vector.load %arg7[%c2_128, %c0_129, %c0_130] : memref<5x9x128xf32, #tpu.memory_space<vmem>>, vector<1x1x128xf32>
    %178 = vector.shape_cast %177 : vector<1x1x128xf32> to vector<128xf32>
    %179 = vector.shape_cast %178 : vector<128xf32> to vector<1x128xf32>
    %180 = vector.broadcast %179 : vector<1x128xf32> to vector<16x128xf32>
    %181 = arith.mulf %176, %180 : vector<16x128xf32>
    %182 = arith.addf %175, %181 : vector<16x128xf32>
    %c6_131 = arith.constant 6 : index
    %c128_132 = arith.constant 128 : index
    %183 = vector.load %arg10[%c6_131, %c128_132] : memref<32x384xf32, #tpu.memory_space<vmem>>, vector<16x128xf32>
    %c2_133 = arith.constant 2 : index
    %c1_134 = arith.constant 1 : index
    %c0_135 = arith.constant 0 : index
    %184 = vector.load %arg7[%c2_133, %c1_134, %c0_135] : memref<5x9x128xf32, #tpu.memory_space<vmem>>, vector<1x1x128xf32>
    %185 = vector.shape_cast %184 : vector<1x1x128xf32> to vector<128xf32>
    %186 = vector.shape_cast %185 : vector<128xf32> to vector<1x128xf32>
    %187 = vector.broadcast %186 : vector<1x128xf32> to vector<16x128xf32>
    %188 = arith.mulf %183, %187 : vector<16x128xf32>
    %189 = arith.addf %182, %188 : vector<16x128xf32>
    %c6_136 = arith.constant 6 : index
    %c144 = arith.constant 144 : index
    %190 = vector.load %arg10[%c6_136, %c144] : memref<32x384xf32, #tpu.memory_space<vmem>>, vector<16x128xf32>
    %c2_137 = arith.constant 2 : index
    %c2_138 = arith.constant 2 : index
    %c0_139 = arith.constant 0 : index
    %191 = vector.load %arg7[%c2_137, %c2_138, %c0_139] : memref<5x9x128xf32, #tpu.memory_space<vmem>>, vector<1x1x128xf32>
    %192 = vector.shape_cast %191 : vector<1x1x128xf32> to vector<128xf32>
    %193 = vector.shape_cast %192 : vector<128xf32> to vector<1x128xf32>
    %194 = vector.broadcast %193 : vector<1x128xf32> to vector<16x128xf32>
    %195 = arith.mulf %190, %194 : vector<16x128xf32>
    %196 = arith.addf %189, %195 : vector<16x128xf32>
    %c8_140 = arith.constant 8 : index
    %c112_141 = arith.constant 112 : index
    %197 = vector.load %arg10[%c8_140, %c112_141] : memref<32x384xf32, #tpu.memory_space<vmem>>, vector<16x128xf32>
    %c2_142 = arith.constant 2 : index
    %c3_143 = arith.constant 3 : index
    %c0_144 = arith.constant 0 : index
    %198 = vector.load %arg7[%c2_142, %c3_143, %c0_144] : memref<5x9x128xf32, #tpu.memory_space<vmem>>, vector<1x1x128xf32>
    %199 = vector.shape_cast %198 : vector<1x1x128xf32> to vector<128xf32>
    %200 = vector.shape_cast %199 : vector<128xf32> to vector<1x128xf32>
    %201 = vector.broadcast %200 : vector<1x128xf32> to vector<16x128xf32>
    %202 = arith.mulf %197, %201 : vector<16x128xf32>
    %203 = arith.addf %196, %202 : vector<16x128xf32>
    %c8_145 = arith.constant 8 : index
    %c144_146 = arith.constant 144 : index
    %204 = vector.load %arg10[%c8_145, %c144_146] : memref<32x384xf32, #tpu.memory_space<vmem>>, vector<16x128xf32>
    %c2_147 = arith.constant 2 : index
    %c5_148 = arith.constant 5 : index
    %c0_149 = arith.constant 0 : index
    %205 = vector.load %arg7[%c2_147, %c5_148, %c0_149] : memref<5x9x128xf32, #tpu.memory_space<vmem>>, vector<1x1x128xf32>
    %206 = vector.shape_cast %205 : vector<1x1x128xf32> to vector<128xf32>
    %207 = vector.shape_cast %206 : vector<128xf32> to vector<1x128xf32>
    %208 = vector.broadcast %207 : vector<1x128xf32> to vector<16x128xf32>
    %209 = arith.mulf %204, %208 : vector<16x128xf32>
    %210 = arith.addf %203, %209 : vector<16x128xf32>
    %c10 = arith.constant 10 : index
    %c112_150 = arith.constant 112 : index
    %211 = vector.load %arg10[%c10, %c112_150] : memref<32x384xf32, #tpu.memory_space<vmem>>, vector<16x128xf32>
    %c2_151 = arith.constant 2 : index
    %c6_152 = arith.constant 6 : index
    %c0_153 = arith.constant 0 : index
    %212 = vector.load %arg7[%c2_151, %c6_152, %c0_153] : memref<5x9x128xf32, #tpu.memory_space<vmem>>, vector<1x1x128xf32>
    %213 = vector.shape_cast %212 : vector<1x1x128xf32> to vector<128xf32>
    %214 = vector.shape_cast %213 : vector<128xf32> to vector<1x128xf32>
    %215 = vector.broadcast %214 : vector<1x128xf32> to vector<16x128xf32>
    %216 = arith.mulf %211, %215 : vector<16x128xf32>
    %217 = arith.addf %210, %216 : vector<16x128xf32>
    %c10_154 = arith.constant 10 : index
    %c128_155 = arith.constant 128 : index
    %218 = vector.load %arg10[%c10_154, %c128_155] : memref<32x384xf32, #tpu.memory_space<vmem>>, vector<16x128xf32>
    %c2_156 = arith.constant 2 : index
    %c7_157 = arith.constant 7 : index
    %c0_158 = arith.constant 0 : index
    %219 = vector.load %arg7[%c2_156, %c7_157, %c0_158] : memref<5x9x128xf32, #tpu.memory_space<vmem>>, vector<1x1x128xf32>
    %220 = vector.shape_cast %219 : vector<1x1x128xf32> to vector<128xf32>
    %221 = vector.shape_cast %220 : vector<128xf32> to vector<1x128xf32>
    %222 = vector.broadcast %221 : vector<1x128xf32> to vector<16x128xf32>
    %223 = arith.mulf %218, %222 : vector<16x128xf32>
    %224 = arith.addf %217, %223 : vector<16x128xf32>
    %c10_159 = arith.constant 10 : index
    %c144_160 = arith.constant 144 : index
    %225 = vector.load %arg10[%c10_159, %c144_160] : memref<32x384xf32, #tpu.memory_space<vmem>>, vector<16x128xf32>
    %c2_161 = arith.constant 2 : index
    %c8_162 = arith.constant 8 : index
    %c0_163 = arith.constant 0 : index
    %226 = vector.load %arg7[%c2_161, %c8_162, %c0_163] : memref<5x9x128xf32, #tpu.memory_space<vmem>>, vector<1x1x128xf32>
    %227 = vector.shape_cast %226 : vector<1x1x128xf32> to vector<128xf32>
    %228 = vector.shape_cast %227 : vector<128xf32> to vector<1x128xf32>
    %229 = vector.broadcast %228 : vector<1x128xf32> to vector<16x128xf32>
    %230 = arith.mulf %225, %229 : vector<16x128xf32>
    %231 = arith.addf %224, %230 : vector<16x128xf32>
    %c2_164 = arith.constant 2 : index
    %c0_165 = arith.constant 0 : index
    %c0_166 = arith.constant 0 : index
    %232 = vector.load %arg6[%c2_164, %c0_165, %c0_166] : memref<5x128x128xf32, #tpu.memory_space<vmem>>, vector<1x128x128xf32>
    %233 = vector.shape_cast %232 : vector<1x128x128xf32> to vector<128x128xf32>
    %cst_167 = arith.constant dense<0.000000e+00> : vector<16x128xf32>
    %234 = tpu.matmul %231, %233, %cst_167 {dimension_numbers = #tpu.dot_dimension_numbers<[1], [0], [0], [1], [0, 0, 1, 1], [], []>} : vector<16x128xf32>, vector<128x128xf32>, vector<16x128xf32> -> vector<16x128xf32>
    %c4_168 = arith.constant 4 : index
    %c0_169 = arith.constant 0 : index
    %c0_170 = arith.constant 0 : index
    %235 = vector.load %arg5[%c4_168, %c0_169, %c0_170] : memref<7x1x128xf32, #tpu.memory_space<vmem>>, vector<1x1x128xf32>
    %236 = vector.shape_cast %235 : vector<1x1x128xf32> to vector<1x128xf32>
    %237 = vector.broadcast %236 : vector<1x128xf32> to vector<16x128xf32>
    %238 = arith.addf %234, %237 : vector<16x128xf32>
    %c8_171 = arith.constant 8 : index
    %c128_172 = arith.constant 128 : index
    %239 = vector.load %arg10[%c8_171, %c128_172] : memref<32x384xf32, #tpu.memory_space<vmem>>, vector<16x128xf32>
    tpu.vector_store %arg10[%c8_171, %c128_172], %9 {strides = array<i32>} : memref<32x384xf32, #tpu.memory_space<vmem>>, vector<16x128xf32>,
    %cst_173 = arith.constant 0.000000e+00 : f32
    %240 = vector.broadcast %cst_173 : f32 to vector<16x128xf32>
    %c7_174 = arith.constant 7 : index
    %c120_175 = arith.constant 120 : index
    %241 = vector.load %arg10[%c7_174, %c120_175] : memref<32x384xf32, #tpu.memory_space<vmem>>, vector<16x128xf32>
    %242 = arith.addf %240, %241 : vector<16x128xf32>
    %c7_176 = arith.constant 7 : index
    %c128_177 = arith.constant 128 : index
    %243 = vector.load %arg10[%c7_176, %c128_177] : memref<32x384xf32, #tpu.memory_space<vmem>>, vector<16x128xf32>
    %244 = arith.addf %242, %243 : vector<16x128xf32>
    %c7_178 = arith.constant 7 : index
    %c136_179 = arith.constant 136 : index
    %245 = vector.load %arg10[%c7_178, %c136_179] : memref<32x384xf32, #tpu.memory_space<vmem>>, vector<16x128xf32>
    %246 = arith.addf %244, %245 : vector<16x128xf32>
    %c8_180 = arith.constant 8 : index
    %c120_181 = arith.constant 120 : index
    %247 = vector.load %arg10[%c8_180, %c120_181] : memref<32x384xf32, #tpu.memory_space<vmem>>, vector<16x128xf32>
    %248 = arith.addf %246, %247 : vector<16x128xf32>
    %c8_182 = arith.constant 8 : index
    %c128_183 = arith.constant 128 : index
    %249 = vector.load %arg10[%c8_182, %c128_183] : memref<32x384xf32, #tpu.memory_space<vmem>>, vector<16x128xf32>
    %250 = arith.addf %248, %249 : vector<16x128xf32>
    %c8_184 = arith.constant 8 : index
    %c136_185 = arith.constant 136 : index
    %251 = vector.load %arg10[%c8_184, %c136_185] : memref<32x384xf32, #tpu.memory_space<vmem>>, vector<16x128xf32>
    %252 = arith.addf %250, %251 : vector<16x128xf32>
    %c9_186 = arith.constant 9 : index
    %c120_187 = arith.constant 120 : index
    %253 = vector.load %arg10[%c9_186, %c120_187] : memref<32x384xf32, #tpu.memory_space<vmem>>, vector<16x128xf32>
    %254 = arith.addf %252, %253 : vector<16x128xf32>
    %c9_188 = arith.constant 9 : index
    %c128_189 = arith.constant 128 : index
    %255 = vector.load %arg10[%c9_188, %c128_189] : memref<32x384xf32, #tpu.memory_space<vmem>>, vector<16x128xf32>
    %256 = arith.addf %254, %255 : vector<16x128xf32>
    %c9_190 = arith.constant 9 : index
    %c136_191 = arith.constant 136 : index
    %257 = vector.load %arg10[%c9_190, %c136_191] : memref<32x384xf32, #tpu.memory_space<vmem>>, vector<16x128xf32>
    %258 = arith.addf %256, %257 : vector<16x128xf32>
    %c0_192 = arith.constant 0 : index
    %c0_193 = arith.constant 0 : index
    %259 = vector.load %arg8[%c0_192, %c0_193] : memref<16x128xf32, #tpu.memory_space<vmem>>, vector<16x128xf32>
    %260 = arith.mulf %258, %259 : vector<16x128xf32>
    %261 = arith.addf %238, %260 : vector<16x128xf32>
    %cst_194 = arith.constant 0xFF800000 : f32
    %262 = vector.broadcast %cst_194 : f32 to vector<32x384xf32>
    %c0_195 = arith.constant 0 : index
    %c0_196 = arith.constant 0 : index
    %263 = vector.load %arg10[%c0_195, %c0_196] : memref<32x384xf32, #tpu.memory_space<vmem>>, vector<32x384xf32>
    tpu.vector_store %arg10[%c0_195, %c0_196], %262 {strides = array<i32>} : memref<32x384xf32, #tpu.memory_space<vmem>>, vector<32x384xf32>,
    %c8_197 = arith.constant 8 : index
    %c128_198 = arith.constant 128 : index
    %264 = vector.load %arg10[%c8_197, %c128_198] : memref<32x384xf32, #tpu.memory_space<vmem>>, vector<16x128xf32>
    tpu.vector_store %arg10[%c8_197, %c128_198], %19 {strides = array<i32>} : memref<32x384xf32, #tpu.memory_space<vmem>>, vector<16x128xf32>,
    %cst_199 = arith.constant 0xFF800000 : f32
    %265 = vector.broadcast %cst_199 : f32 to vector<16x128xf32>
    %c7_200 = arith.constant 7 : index
    %c120_201 = arith.constant 120 : index
    %266 = vector.load %arg10[%c7_200, %c120_201] : memref<32x384xf32, #tpu.memory_space<vmem>>, vector<16x128xf32>
    %267 = arith.maximumf %265, %266 : vector<16x128xf32>
    %c7_202 = arith.constant 7 : index
    %c128_203 = arith.constant 128 : index
    %268 = vector.load %arg10[%c7_202, %c128_203] : memref<32x384xf32, #tpu.memory_space<vmem>>, vector<16x128xf32>
    %269 = arith.maximumf %267, %268 : vector<16x128xf32>
    %c7_204 = arith.constant 7 : index
    %c136_205 = arith.constant 136 : index
    %270 = vector.load %arg10[%c7_204, %c136_205] : memref<32x384xf32, #tpu.memory_space<vmem>>, vector<16x128xf32>
    %271 = arith.maximumf %269, %270 : vector<16x128xf32>
    %c8_206 = arith.constant 8 : index
    %c120_207 = arith.constant 120 : index
    %272 = vector.load %arg10[%c8_206, %c120_207] : memref<32x384xf32, #tpu.memory_space<vmem>>, vector<16x128xf32>
    %273 = arith.maximumf %271, %272 : vector<16x128xf32>
    %c8_208 = arith.constant 8 : index
    %c128_209 = arith.constant 128 : index
    %274 = vector.load %arg10[%c8_208, %c128_209] : memref<32x384xf32, #tpu.memory_space<vmem>>, vector<16x128xf32>
    %275 = arith.maximumf %273, %274 : vector<16x128xf32>
    %c8_210 = arith.constant 8 : index
    %c136_211 = arith.constant 136 : index
    %276 = vector.load %arg10[%c8_210, %c136_211] : memref<32x384xf32, #tpu.memory_space<vmem>>, vector<16x128xf32>
    %277 = arith.maximumf %275, %276 : vector<16x128xf32>
    %c9_212 = arith.constant 9 : index
    %c120_213 = arith.constant 120 : index
    %278 = vector.load %arg10[%c9_212, %c120_213] : memref<32x384xf32, #tpu.memory_space<vmem>>, vector<16x128xf32>
    %279 = arith.maximumf %277, %278 : vector<16x128xf32>
    %c9_214 = arith.constant 9 : index
    %c128_215 = arith.constant 128 : index
    %280 = vector.load %arg10[%c9_214, %c128_215] : memref<32x384xf32, #tpu.memory_space<vmem>>, vector<16x128xf32>
    %281 = arith.maximumf %279, %280 : vector<16x128xf32>
    %c9_216 = arith.constant 9 : index
    %c136_217 = arith.constant 136 : index
    %282 = vector.load %arg10[%c9_216, %c136_217] : memref<32x384xf32, #tpu.memory_space<vmem>>, vector<16x128xf32>
    %283 = arith.maximumf %281, %282 : vector<16x128xf32>
    %284 = arith.addf %283, %166 : vector<16x128xf32>
    %cst_218 = arith.constant 0.000000e+00 : f32
    %285 = vector.broadcast %cst_218 : f32 to vector<16x128xf32>
    %286 = arith.maximumf %261, %285 : vector<16x128xf32>
    %cst_219 = arith.constant 0.000000e+00 : f32
    %287 = vector.broadcast %cst_219 : f32 to vector<32x384xf32>
    %c0_220 = arith.constant 0 : index
    %c0_221 = arith.constant 0 : index
    %288 = vector.load %arg10[%c0_220, %c0_221] : memref<32x384xf32, #tpu.memory_space<vmem>>, vector<32x384xf32>
    tpu.vector_store %arg10[%c0_220, %c0_221], %287 {strides = array<i32>} : memref<32x384xf32, #tpu.memory_space<vmem>>, vector<32x384xf32>,
    %c8_222 = arith.constant 8 : index
    %c128_223 = arith.constant 128 : index
    %289 = vector.load %arg10[%c8_222, %c128_223] : memref<32x384xf32, #tpu.memory_space<vmem>>, vector<16x128xf32>
    tpu.vector_store %arg10[%c8_222, %c128_223], %286 {strides = array<i32>} : memref<32x384xf32, #tpu.memory_space<vmem>>, vector<16x128xf32>,
    %c8_224 = arith.constant 8 : index
    %c128_225 = arith.constant 128 : index
    %290 = vector.load %arg10[%c8_224, %c128_225] : memref<32x384xf32, #tpu.memory_space<vmem>>, vector<16x128xf32>
    %c3_226 = arith.constant 3 : index
    %c4_227 = arith.constant 4 : index
    %c0_228 = arith.constant 0 : index
    %291 = vector.load %arg7[%c3_226, %c4_227, %c0_228] : memref<5x9x128xf32, #tpu.memory_space<vmem>>, vector<1x1x128xf32>
    %292 = vector.shape_cast %291 : vector<1x1x128xf32> to vector<128xf32>
    %293 = vector.shape_cast %292 : vector<128xf32> to vector<1x128xf32>
    %294 = vector.broadcast %293 : vector<1x128xf32> to vector<16x128xf32>
    %295 = arith.mulf %290, %294 : vector<16x128xf32>
    %c7_229 = arith.constant 7 : index
    %c120_230 = arith.constant 120 : index
    %296 = vector.load %arg10[%c7_229, %c120_230] : memref<32x384xf32, #tpu.memory_space<vmem>>, vector<16x128xf32>
    %c3_231 = arith.constant 3 : index
    %c0_232 = arith.constant 0 : index
    %c0_233 = arith.constant 0 : index
    %297 = vector.load %arg7[%c3_231, %c0_232, %c0_233] : memref<5x9x128xf32, #tpu.memory_space<vmem>>, vector<1x1x128xf32>
    %298 = vector.shape_cast %297 : vector<1x1x128xf32> to vector<128xf32>
    %299 = vector.shape_cast %298 : vector<128xf32> to vector<1x128xf32>
    %300 = vector.broadcast %299 : vector<1x128xf32> to vector<16x128xf32>
    %301 = arith.mulf %296, %300 : vector<16x128xf32>
    %302 = arith.addf %295, %301 : vector<16x128xf32>
    %c7_234 = arith.constant 7 : index
    %c128_235 = arith.constant 128 : index
    %303 = vector.load %arg10[%c7_234, %c128_235] : memref<32x384xf32, #tpu.memory_space<vmem>>, vector<16x128xf32>
    %c3_236 = arith.constant 3 : index
    %c1_237 = arith.constant 1 : index
    %c0_238 = arith.constant 0 : index
    %304 = vector.load %arg7[%c3_236, %c1_237, %c0_238] : memref<5x9x128xf32, #tpu.memory_space<vmem>>, vector<1x1x128xf32>
    %305 = vector.shape_cast %304 : vector<1x1x128xf32> to vector<128xf32>
    %306 = vector.shape_cast %305 : vector<128xf32> to vector<1x128xf32>
    %307 = vector.broadcast %306 : vector<1x128xf32> to vector<16x128xf32>
    %308 = arith.mulf %303, %307 : vector<16x128xf32>
    %309 = arith.addf %302, %308 : vector<16x128xf32>
    %c7_239 = arith.constant 7 : index
    %c136_240 = arith.constant 136 : index
    %310 = vector.load %arg10[%c7_239, %c136_240] : memref<32x384xf32, #tpu.memory_space<vmem>>, vector<16x128xf32>
    %c3_241 = arith.constant 3 : index
    %c2_242 = arith.constant 2 : index
    %c0_243 = arith.constant 0 : index
    %311 = vector.load %arg7[%c3_241, %c2_242, %c0_243] : memref<5x9x128xf32, #tpu.memory_space<vmem>>, vector<1x1x128xf32>
    %312 = vector.shape_cast %311 : vector<1x1x128xf32> to vector<128xf32>
    %313 = vector.shape_cast %312 : vector<128xf32> to vector<1x128xf32>
    %314 = vector.broadcast %313 : vector<1x128xf32> to vector<16x128xf32>
    %315 = arith.mulf %310, %314 : vector<16x128xf32>
    %316 = arith.addf %309, %315 : vector<16x128xf32>
    %c8_244 = arith.constant 8 : index
    %c120_245 = arith.constant 120 : index
    %317 = vector.load %arg10[%c8_244, %c120_245] : memref<32x384xf32, #tpu.memory_space<vmem>>, vector<16x128xf32>
    %c3_246 = arith.constant 3 : index
    %c3_247 = arith.constant 3 : index
    %c0_248 = arith.constant 0 : index
    %318 = vector.load %arg7[%c3_246, %c3_247, %c0_248] : memref<5x9x128xf32, #tpu.memory_space<vmem>>, vector<1x1x128xf32>
    %319 = vector.shape_cast %318 : vector<1x1x128xf32> to vector<128xf32>
    %320 = vector.shape_cast %319 : vector<128xf32> to vector<1x128xf32>
    %321 = vector.broadcast %320 : vector<1x128xf32> to vector<16x128xf32>
    %322 = arith.mulf %317, %321 : vector<16x128xf32>
    %323 = arith.addf %316, %322 : vector<16x128xf32>
    %c8_249 = arith.constant 8 : index
    %c136_250 = arith.constant 136 : index
    %324 = vector.load %arg10[%c8_249, %c136_250] : memref<32x384xf32, #tpu.memory_space<vmem>>, vector<16x128xf32>
    %c3_251 = arith.constant 3 : index
    %c5_252 = arith.constant 5 : index
    %c0_253 = arith.constant 0 : index
    %325 = vector.load %arg7[%c3_251, %c5_252, %c0_253] : memref<5x9x128xf32, #tpu.memory_space<vmem>>, vector<1x1x128xf32>
    %326 = vector.shape_cast %325 : vector<1x1x128xf32> to vector<128xf32>
    %327 = vector.shape_cast %326 : vector<128xf32> to vector<1x128xf32>
    %328 = vector.broadcast %327 : vector<1x128xf32> to vector<16x128xf32>
    %329 = arith.mulf %324, %328 : vector<16x128xf32>
    %330 = arith.addf %323, %329 : vector<16x128xf32>
    %c9_254 = arith.constant 9 : index
    %c120_255 = arith.constant 120 : index
    %331 = vector.load %arg10[%c9_254, %c120_255] : memref<32x384xf32, #tpu.memory_space<vmem>>, vector<16x128xf32>
    %c3_256 = arith.constant 3 : index
    %c6_257 = arith.constant 6 : index
    %c0_258 = arith.constant 0 : index
    %332 = vector.load %arg7[%c3_256, %c6_257, %c0_258] : memref<5x9x128xf32, #tpu.memory_space<vmem>>, vector<1x1x128xf32>
    %333 = vector.shape_cast %332 : vector<1x1x128xf32> to vector<128xf32>
    %334 = vector.shape_cast %333 : vector<128xf32> to vector<1x128xf32>
    %335 = vector.broadcast %334 : vector<1x128xf32> to vector<16x128xf32>
    %336 = arith.mulf %331, %335 : vector<16x128xf32>
    %337 = arith.addf %330, %336 : vector<16x128xf32>
    %c9_259 = arith.constant 9 : index
    %c128_260 = arith.constant 128 : index
    %338 = vector.load %arg10[%c9_259, %c128_260] : memref<32x384xf32, #tpu.memory_space<vmem>>, vector<16x128xf32>
    %c3_261 = arith.constant 3 : index
    %c7_262 = arith.constant 7 : index
    %c0_263 = arith.constant 0 : index
    %339 = vector.load %arg7[%c3_261, %c7_262, %c0_263] : memref<5x9x128xf32, #tpu.memory_space<vmem>>, vector<1x1x128xf32>
    %340 = vector.shape_cast %339 : vector<1x1x128xf32> to vector<128xf32>
    %341 = vector.shape_cast %340 : vector<128xf32> to vector<1x128xf32>
    %342 = vector.broadcast %341 : vector<1x128xf32> to vector<16x128xf32>
    %343 = arith.mulf %338, %342 : vector<16x128xf32>
    %344 = arith.addf %337, %343 : vector<16x128xf32>
    %c9_264 = arith.constant 9 : index
    %c136_265 = arith.constant 136 : index
    %345 = vector.load %arg10[%c9_264, %c136_265] : memref<32x384xf32, #tpu.memory_space<vmem>>, vector<16x128xf32>
    %c3_266 = arith.constant 3 : index
    %c8_267 = arith.constant 8 : index
    %c0_268 = arith.constant 0 : index
    %346 = vector.load %arg7[%c3_266, %c8_267, %c0_268] : memref<5x9x128xf32, #tpu.memory_space<vmem>>, vector<1x1x128xf32>
    %347 = vector.shape_cast %346 : vector<1x1x128xf32> to vector<128xf32>
    %348 = vector.shape_cast %347 : vector<128xf32> to vector<1x128xf32>
    %349 = vector.broadcast %348 : vector<1x128xf32> to vector<16x128xf32>
    %350 = arith.mulf %345, %349 : vector<16x128xf32>
    %351 = arith.addf %344, %350 : vector<16x128xf32>
    %c3_269 = arith.constant 3 : index
    %c0_270 = arith.constant 0 : index
    %c0_271 = arith.constant 0 : index
    %352 = vector.load %arg6[%c3_269, %c0_270, %c0_271] : memref<5x128x128xf32, #tpu.memory_space<vmem>>, vector<1x128x128xf32>
    %353 = vector.shape_cast %352 : vector<1x128x128xf32> to vector<128x128xf32>
    %cst_272 = arith.constant dense<0.000000e+00> : vector<16x128xf32>
    %354 = tpu.matmul %351, %353, %cst_272 {dimension_numbers = #tpu.dot_dimension_numbers<[1], [0], [0], [1], [0, 0, 1, 1], [], []>} : vector<16x128xf32>, vector<128x128xf32>, vector<16x128xf32> -> vector<16x128xf32>
    %c5_273 = arith.constant 5 : index
    %c0_274 = arith.constant 0 : index
    %c0_275 = arith.constant 0 : index
    %355 = vector.load %arg5[%c5_273, %c0_274, %c0_275] : memref<7x1x128xf32, #tpu.memory_space<vmem>>, vector<1x1x128xf32>
    %356 = vector.shape_cast %355 : vector<1x1x128xf32> to vector<1x128xf32>
    %357 = vector.broadcast %356 : vector<1x128xf32> to vector<16x128xf32>
    %358 = arith.addf %354, %357 : vector<16x128xf32>
    %cst_276 = arith.constant 0.000000e+00 : f32
    %359 = vector.broadcast %cst_276 : f32 to vector<16x128xf32>
    %360 = arith.maximumf %358, %359 : vector<16x128xf32>
    %c8_277 = arith.constant 8 : index
    %c128_278 = arith.constant 128 : index
    %361 = vector.load %arg10[%c8_277, %c128_278] : memref<32x384xf32, #tpu.memory_space<vmem>>, vector<16x128xf32>
    tpu.vector_store %arg10[%c8_277, %c128_278], %360 {strides = array<i32>} : memref<32x384xf32, #tpu.memory_space<vmem>>, vector<16x128xf32>,
    %c8_279 = arith.constant 8 : index
    %c128_280 = arith.constant 128 : index
    %362 = vector.load %arg10[%c8_279, %c128_280] : memref<32x384xf32, #tpu.memory_space<vmem>>, vector<16x128xf32>
    %c4_281 = arith.constant 4 : index
    %c4_282 = arith.constant 4 : index
    %c0_283 = arith.constant 0 : index
    %363 = vector.load %arg7[%c4_281, %c4_282, %c0_283] : memref<5x9x128xf32, #tpu.memory_space<vmem>>, vector<1x1x128xf32>
    %364 = vector.shape_cast %363 : vector<1x1x128xf32> to vector<128xf32>
    %365 = vector.shape_cast %364 : vector<128xf32> to vector<1x128xf32>
    %366 = vector.broadcast %365 : vector<1x128xf32> to vector<16x128xf32>
    %367 = arith.mulf %362, %366 : vector<16x128xf32>
    %c7_284 = arith.constant 7 : index
    %c120_285 = arith.constant 120 : index
    %368 = vector.load %arg10[%c7_284, %c120_285] : memref<32x384xf32, #tpu.memory_space<vmem>>, vector<16x128xf32>
    %c4_286 = arith.constant 4 : index
    %c0_287 = arith.constant 0 : index
    %c0_288 = arith.constant 0 : index
    %369 = vector.load %arg7[%c4_286, %c0_287, %c0_288] : memref<5x9x128xf32, #tpu.memory_space<vmem>>, vector<1x1x128xf32>
    %370 = vector.shape_cast %369 : vector<1x1x128xf32> to vector<128xf32>
    %371 = vector.shape_cast %370 : vector<128xf32> to vector<1x128xf32>
    %372 = vector.broadcast %371 : vector<1x128xf32> to vector<16x128xf32>
    %373 = arith.mulf %368, %372 : vector<16x128xf32>
    %374 = arith.addf %367, %373 : vector<16x128xf32>
    %c7_289 = arith.constant 7 : index
    %c128_290 = arith.constant 128 : index
    %375 = vector.load %arg10[%c7_289, %c128_290] : memref<32x384xf32, #tpu.memory_space<vmem>>, vector<16x128xf32>
    %c4_291 = arith.constant 4 : index
    %c1_292 = arith.constant 1 : index
    %c0_293 = arith.constant 0 : index
    %376 = vector.load %arg7[%c4_291, %c1_292, %c0_293] : memref<5x9x128xf32, #tpu.memory_space<vmem>>, vector<1x1x128xf32>
    %377 = vector.shape_cast %376 : vector<1x1x128xf32> to vector<128xf32>
    %378 = vector.shape_cast %377 : vector<128xf32> to vector<1x128xf32>
    %379 = vector.broadcast %378 : vector<1x128xf32> to vector<16x128xf32>
    %380 = arith.mulf %375, %379 : vector<16x128xf32>
    %381 = arith.addf %374, %380 : vector<16x128xf32>
    %c7_294 = arith.constant 7 : index
    %c136_295 = arith.constant 136 : index
    %382 = vector.load %arg10[%c7_294, %c136_295] : memref<32x384xf32, #tpu.memory_space<vmem>>, vector<16x128xf32>
    %c4_296 = arith.constant 4 : index
    %c2_297 = arith.constant 2 : index
    %c0_298 = arith.constant 0 : index
    %383 = vector.load %arg7[%c4_296, %c2_297, %c0_298] : memref<5x9x128xf32, #tpu.memory_space<vmem>>, vector<1x1x128xf32>
    %384 = vector.shape_cast %383 : vector<1x1x128xf32> to vector<128xf32>
    %385 = vector.shape_cast %384 : vector<128xf32> to vector<1x128xf32>
    %386 = vector.broadcast %385 : vector<1x128xf32> to vector<16x128xf32>
    %387 = arith.mulf %382, %386 : vector<16x128xf32>
    %388 = arith.addf %381, %387 : vector<16x128xf32>
    %c8_299 = arith.constant 8 : index
    %c120_300 = arith.constant 120 : index
    %389 = vector.load %arg10[%c8_299, %c120_300] : memref<32x384xf32, #tpu.memory_space<vmem>>, vector<16x128xf32>
    %c4_301 = arith.constant 4 : index
    %c3_302 = arith.constant 3 : index
    %c0_303 = arith.constant 0 : index
    %390 = vector.load %arg7[%c4_301, %c3_302, %c0_303] : memref<5x9x128xf32, #tpu.memory_space<vmem>>, vector<1x1x128xf32>
    %391 = vector.shape_cast %390 : vector<1x1x128xf32> to vector<128xf32>
    %392 = vector.shape_cast %391 : vector<128xf32> to vector<1x128xf32>
    %393 = vector.broadcast %392 : vector<1x128xf32> to vector<16x128xf32>
    %394 = arith.mulf %389, %393 : vector<16x128xf32>
    %395 = arith.addf %388, %394 : vector<16x128xf32>
    %c8_304 = arith.constant 8 : index
    %c136_305 = arith.constant 136 : index
    %396 = vector.load %arg10[%c8_304, %c136_305] : memref<32x384xf32, #tpu.memory_space<vmem>>, vector<16x128xf32>
    %c4_306 = arith.constant 4 : index
    %c5_307 = arith.constant 5 : index
    %c0_308 = arith.constant 0 : index
    %397 = vector.load %arg7[%c4_306, %c5_307, %c0_308] : memref<5x9x128xf32, #tpu.memory_space<vmem>>, vector<1x1x128xf32>
    %398 = vector.shape_cast %397 : vector<1x1x128xf32> to vector<128xf32>
    %399 = vector.shape_cast %398 : vector<128xf32> to vector<1x128xf32>
    %400 = vector.broadcast %399 : vector<1x128xf32> to vector<16x128xf32>
    %401 = arith.mulf %396, %400 : vector<16x128xf32>
    %402 = arith.addf %395, %401 : vector<16x128xf32>
    %c9_309 = arith.constant 9 : index
    %c120_310 = arith.constant 120 : index
    %403 = vector.load %arg10[%c9_309, %c120_310] : memref<32x384xf32, #tpu.memory_space<vmem>>, vector<16x128xf32>
    %c4_311 = arith.constant 4 : index
    %c6_312 = arith.constant 6 : index
    %c0_313 = arith.constant 0 : index
    %404 = vector.load %arg7[%c4_311, %c6_312, %c0_313] : memref<5x9x128xf32, #tpu.memory_space<vmem>>, vector<1x1x128xf32>
    %405 = vector.shape_cast %404 : vector<1x1x128xf32> to vector<128xf32>
    %406 = vector.shape_cast %405 : vector<128xf32> to vector<1x128xf32>
    %407 = vector.broadcast %406 : vector<1x128xf32> to vector<16x128xf32>
    %408 = arith.mulf %403, %407 : vector<16x128xf32>
    %409 = arith.addf %402, %408 : vector<16x128xf32>
    %c9_314 = arith.constant 9 : index
    %c128_315 = arith.constant 128 : index
    %410 = vector.load %arg10[%c9_314, %c128_315] : memref<32x384xf32, #tpu.memory_space<vmem>>, vector<16x128xf32>
    %c4_316 = arith.constant 4 : index
    %c7_317 = arith.constant 7 : index
    %c0_318 = arith.constant 0 : index
    %411 = vector.load %arg7[%c4_316, %c7_317, %c0_318] : memref<5x9x128xf32, #tpu.memory_space<vmem>>, vector<1x1x128xf32>
    %412 = vector.shape_cast %411 : vector<1x1x128xf32> to vector<128xf32>
    %413 = vector.shape_cast %412 : vector<128xf32> to vector<1x128xf32>
    %414 = vector.broadcast %413 : vector<1x128xf32> to vector<16x128xf32>
    %415 = arith.mulf %410, %414 : vector<16x128xf32>
    %416 = arith.addf %409, %415 : vector<16x128xf32>
    %c9_319 = arith.constant 9 : index
    %c136_320 = arith.constant 136 : index
    %417 = vector.load %arg10[%c9_319, %c136_320] : memref<32x384xf32, #tpu.memory_space<vmem>>, vector<16x128xf32>
    %c4_321 = arith.constant 4 : index
    %c8_322 = arith.constant 8 : index
    %c0_323 = arith.constant 0 : index
    %418 = vector.load %arg7[%c4_321, %c8_322, %c0_323] : memref<5x9x128xf32, #tpu.memory_space<vmem>>, vector<1x1x128xf32>
    %419 = vector.shape_cast %418 : vector<1x1x128xf32> to vector<128xf32>
    %420 = vector.shape_cast %419 : vector<128xf32> to vector<1x128xf32>
    %421 = vector.broadcast %420 : vector<1x128xf32> to vector<16x128xf32>
    %422 = arith.mulf %417, %421 : vector<16x128xf32>
    %423 = arith.addf %416, %422 : vector<16x128xf32>
    %c4_324 = arith.constant 4 : index
    %c0_325 = arith.constant 0 : index
    %c0_326 = arith.constant 0 : index
    %424 = vector.load %arg6[%c4_324, %c0_325, %c0_326] : memref<5x128x128xf32, #tpu.memory_space<vmem>>, vector<1x128x128xf32>
    %425 = vector.shape_cast %424 : vector<1x128x128xf32> to vector<128x128xf32>
    %cst_327 = arith.constant dense<0.000000e+00> : vector<16x128xf32>
    %426 = tpu.matmul %423, %425, %cst_327 {dimension_numbers = #tpu.dot_dimension_numbers<[1], [0], [0], [1], [0, 0, 1, 1], [], []>} : vector<16x128xf32>, vector<128x128xf32>, vector<16x128xf32> -> vector<16x128xf32>
    %c6_328 = arith.constant 6 : index
    %c0_329 = arith.constant 0 : index
    %c0_330 = arith.constant 0 : index
    %427 = vector.load %arg5[%c6_328, %c0_329, %c0_330] : memref<7x1x128xf32, #tpu.memory_space<vmem>>, vector<1x1x128xf32>
    %428 = vector.shape_cast %427 : vector<1x1x128xf32> to vector<1x128xf32>
    %429 = vector.broadcast %428 : vector<1x128xf32> to vector<16x128xf32>
    %430 = arith.addf %426, %429 : vector<16x128xf32>
    %431 = arith.addf %430, %9 : vector<16x128xf32>
    %c0_331 = arith.constant 0 : index
    %c0_332 = arith.constant 0 : index
    %c0_333 = arith.constant 0 : index
    %c0_334 = arith.constant 0 : index
    %432 = vector.load %arg9[%c0_331, %c0_332, %c0_333, %c0_334] : memref<1x4x16x128xf32, #tpu.memory_space<vmem>>, vector<1x1x16x128xf32>
    %433 = vector.shape_cast %432 : vector<1x1x16x128xf32> to vector<16x128xf32>
    %434 = vector.shape_cast %166 : vector<16x128xf32> to vector<1x1x16x128xf32>
    tpu.vector_store %arg9[%c0_331, %c0_332, %c0_333, %c0_334], %434 {strides = array<i32>} : memref<1x4x16x128xf32, #tpu.memory_space<vmem>>, vector<1x1x16x128xf32>,
    %c0_335 = arith.constant 0 : index
    %c1_336 = arith.constant 1 : index
    %c0_337 = arith.constant 0 : index
    %c0_338 = arith.constant 0 : index
    %435 = vector.load %arg9[%c0_335, %c1_336, %c0_337, %c0_338] : memref<1x4x16x128xf32, #tpu.memory_space<vmem>>, vector<1x1x16x128xf32>
    %436 = vector.shape_cast %435 : vector<1x1x16x128xf32> to vector<16x128xf32>
    %437 = vector.shape_cast %261 : vector<16x128xf32> to vector<1x1x16x128xf32>
    tpu.vector_store %arg9[%c0_335, %c1_336, %c0_337, %c0_338], %437 {strides = array<i32>} : memref<1x4x16x128xf32, #tpu.memory_space<vmem>>, vector<1x1x16x128xf32>,
    %c0_339 = arith.constant 0 : index
    %c2_340 = arith.constant 2 : index
    %c0_341 = arith.constant 0 : index
    %c0_342 = arith.constant 0 : index
    %438 = vector.load %arg9[%c0_339, %c2_340, %c0_341, %c0_342] : memref<1x4x16x128xf32, #tpu.memory_space<vmem>>, vector<1x1x16x128xf32>
    %439 = vector.shape_cast %438 : vector<1x1x16x128xf32> to vector<16x128xf32>
    %440 = vector.shape_cast %284 : vector<16x128xf32> to vector<1x1x16x128xf32>
    tpu.vector_store %arg9[%c0_339, %c2_340, %c0_341, %c0_342], %440 {strides = array<i32>} : memref<1x4x16x128xf32, #tpu.memory_space<vmem>>, vector<1x1x16x128xf32>,
    %c0_343 = arith.constant 0 : index
    %c3_344 = arith.constant 3 : index
    %c0_345 = arith.constant 0 : index
    %c0_346 = arith.constant 0 : index
    %441 = vector.load %arg9[%c0_343, %c3_344, %c0_345, %c0_346] : memref<1x4x16x128xf32, #tpu.memory_space<vmem>>, vector<1x1x16x128xf32>
    %442 = vector.shape_cast %441 : vector<1x1x16x128xf32> to vector<16x128xf32>
    %443 = vector.shape_cast %431 : vector<16x128xf32> to vector<1x1x16x128xf32>
    tpu.vector_store %arg9[%c0_343, %c3_344, %c0_345, %c0_346], %443 {strides = array<i32>} : memref<1x4x16x128xf32, #tpu.memory_space<vmem>>, vector<1x1x16x128xf32>,
    return
  }
  func.func @transform_0(%arg0: i32) -> (i32, i32, i32) {
    %c0_i32 = arith.constant 0 : i32
    %c0_i32_0 = arith.constant 0 : i32
    %c0_i32_1 = arith.constant 0 : i32
    return %arg0, %c0_i32, %c0_i32_0 : i32, i32, i32
  }
  func.func @transform_1(%arg0: i32) -> (i32, i32, i32) {
    %c0_i32 = arith.constant 0 : i32
    %c0_i32_0 = arith.constant 0 : i32
    %c0_i32_1 = arith.constant 0 : i32
    return %arg0, %c0_i32, %c0_i32_0 : i32, i32, i32
  }
  func.func @transform_2(%arg0: i32) -> (i32, i32) {
    %c0_i32 = arith.constant 0 : i32
    %c0_i32_0 = arith.constant 0 : i32
    %c0_i32_1 = arith.constant 0 : i32
    return %c0_i32, %c0_i32_0 : i32, i32
  }
  func.func @transform_3(%arg0: i32) -> (i32, i32) {
    %c0_i32 = arith.constant 0 : i32
    %c0_i32_0 = arith.constant 0 : i32
    %c0_i32_1 = arith.constant 0 : i32
    return %c0_i32, %c0_i32_0 : i32, i32
  }
  func.func @transform_4(%arg0: i32) -> (i32, i32, i32) {
    %c0_i32 = arith.constant 0 : i32
    %c0_i32_0 = arith.constant 0 : i32
    %c0_i32_1 = arith.constant 0 : i32
    %c0_i32_2 = arith.constant 0 : i32
    return %c0_i32, %c0_i32_0, %c0_i32_1 : i32, i32, i32
  }
  func.func @transform_5(%arg0: i32) -> (i32, i32, i32) {
    %c0_i32 = arith.constant 0 : i32
    %c0_i32_0 = arith.constant 0 : i32
    %c0_i32_1 = arith.constant 0 : i32
    %c0_i32_2 = arith.constant 0 : i32
    return %c0_i32, %c0_i32_0, %c0_i32_1 : i32, i32, i32
  }
  func.func @transform_6(%arg0: i32) -> (i32, i32, i32) {
    %c0_i32 = arith.constant 0 : i32
    %c0_i32_0 = arith.constant 0 : i32
    %c0_i32_1 = arith.constant 0 : i32
    %c0_i32_2 = arith.constant 0 : i32
    return %c0_i32, %c0_i32_0, %c0_i32_1 : i32, i32, i32
  }
  func.func @transform_7(%arg0: i32) -> (i32, i32) {
    %c0_i32 = arith.constant 0 : i32
    %c0_i32_0 = arith.constant 0 : i32
    %c0_i32_1 = arith.constant 0 : i32
    return %c0_i32, %c0_i32_0 : i32, i32
  }
  func.func @transform_8(%arg0: i32) -> (i32, i32, i32, i32) {
    %c0_i32 = arith.constant 0 : i32
    %c0_i32_0 = arith.constant 0 : i32
    %c0_i32_1 = arith.constant 0 : i32
    %c0_i32_2 = arith.constant 0 : i32
    return %arg0, %c0_i32, %c0_i32_0, %c0_i32_1 : i32, i32, i32, i32
  }
}

</mosaic_0001>

<llo_original>
// kernel: cell_forward.1
$region0: #{cell_forward.1}
  #allocation0 [shape = 'u32[]', space=smem, size = 0x4, offset = 0x4, fixed_abs, tag = 'smem constant byte address 0x4 - core index']
  #allocation1 [shape = 'u32[144,128]{1,0:T(1,128)}', space=vmem, size = 0x12000, scoped, tag = 'internal scratch']
  #allocation2 [shape = 'f32[32,384]{1,0:T(8,128)}', space=vmem, size = 0xc000, scoped, tag = 'scratch operand']
  %s0 = inlined_call_operand.vmem [shape: f32[2,16,128], index: 0, kind: input, shape index: {}]
  %s1 = inlined_call_operand.vmem [shape: f32[2,16,128], index: 1, kind: input, shape index: {}]
  %s2 = inlined_call_operand.vmem [shape: f32[128,128], index: 2, kind: input, shape index: {}]
  %s3 = inlined_call_operand.vmem [shape: f32[128,128], index: 3, kind: input, shape index: {}]
  %s4 = inlined_call_operand.vmem [shape: f32[7,1,128], index: 4, kind: input, shape index: {}]
  %s5 = inlined_call_operand.vmem [shape: f32[5,128,128], index: 5, kind: input, shape index: {}]
  %s6 = inlined_call_operand.vmem [shape: f32[5,9,128], index: 6, kind: input, shape index: {}]
  %s7 = inlined_call_operand.vmem [shape: f32[16,128], index: 7, kind: input, shape index: {}]
  %s8 = inlined_call_operand.vmem [shape: f32[2,4,16,128], index: 8, kind: output, shape index: {}]
  %s9 = sld [smem:[#allocation0]]
  $region65: #{cell_forward.1} parent=0
    _
  %s11 = ssub.s32 1, %s9
  %s12 = scalar_select 0, %s11, %s9
  loop: start=0, step=1, limit=4
  $region2: #{cell_forward.1} parent=0 // loop_pre_header
    _
  $region3: #{cell_forward.1} parent=0 // loop_header
    %s14 = sphi 0, %s18
    %p15 = scmp.ge.s32.totalorder %s14, 4
    %s24 = sphi 0, %s26
    %s27 = sphi 0, %s24
    %s28 = sphi 0, %s27
    %s44 = sphi 0, %s28
    %s50 = sphi 0, %s52
    %s53 = sphi 0, %s50
    %s54 = sphi 0, %s53
    %s70 = sphi 0, %s54
    %s74 = sphi 0, %s74
    %s76 = sphi 0, %s74
    %s77 = sphi 0, %s76
    %s91 = sphi 0, %s77
    %s95 = sphi 0, %s95
    %s97 = sphi 0, %s95
    %s98 = sphi 0, %s97
    %s112 = sphi 0, %s98
    %s116 = sphi 0, %s116
    %s118 = sphi 0, %s116
    %s119 = sphi 0, %s118
    %s133 = sphi 0, %s119
    %s137 = sphi 0, %s137
    %s139 = sphi 0, %s137
    %s140 = sphi 0, %s139
    %s154 = sphi 0, %s140
    %s158 = sphi 0, %s158
    %s160 = sphi 0, %s158
    %s161 = sphi 0, %s160
    %s175 = sphi 0, %s161
    %s179 = sphi 0, %s179
    %s181 = sphi 0, %s179
    %s182 = sphi 0, %s181
    %s196 = sphi 0, %s182
    %s202 = sphi 0, %s204
    %s205 = sphi 0, %s202
    %s206 = sphi 0, %s205
    %s222 = sphi 0, %s206
  $region4: #{cell_forward.1} parent=0 // loop_header_branch
    %17 = sbr.rel (%p15) target = $region8
  $region5: #{cell_forward.1} parent=0 // loop_body
    %s19 = ssub.s32 %s14, 1
    %s20 = ssub.s32 %s14, 2
    %s21 = sadd.s32 %s14, 1
    %s22 = ssub.s32 %s14, %s21
    %p23 = scmp.eq.s32.totalorder %s22, 0
    %s25 = sadd.s32 %s24, 1
    %s26 = scalar_select %p23, %s24, %s25
    %p29 = pneg %p23
    %p30 = scmp.eq.s32.totalorder %s14, 1
    %p31 = por %p29, %p30
    %p32 = scmp.ne.s32.totalorder %s24, %s27
    %p33 = scmp.eq.s32.totalorder %s14, 0
    %p34 = por %p32, %p33
    %p35 = scmp.ne.s32.totalorder %s24, %s27
    %p36 = scmp.eq.s32.totalorder %s19, 1
    %p37 = por %p35, %p36
    %p38 = scmp.ne.s32.totalorder %s27, %s28
    %p39 = scmp.eq.s32.totalorder %s19, 0
    %p40 = por %p38, %p39
    %p41 = scmp.ne.s32.totalorder %s27, %s28
    %p42 = scmp.eq.s32.totalorder %s20, 1
    %p43 = por %p41, %p42
    %p45 = scmp.ne.s32.totalorder %s28, %s44
    %p46 = scmp.eq.s32.totalorder %s20, 0
    %p47 = por %p45, %p46
    %s48 = ssub.s32 %s14, %s21
    %p49 = scmp.eq.s32.totalorder %s48, 0
    %s51 = sadd.s32 %s50, 1
    %s52 = scalar_select %p49, %s50, %s51
    %p55 = pneg %p49
    %p56 = scmp.eq.s32.totalorder %s14, 1
    %p57 = por %p55, %p56
    %p58 = scmp.ne.s32.totalorder %s50, %s53
    %p59 = scmp.eq.s32.totalorder %s14, 0
    %p60 = por %p58, %p59
    %p61 = scmp.ne.s32.totalorder %s50, %s53
    %p62 = scmp.eq.s32.totalorder %s19, 1
    %p63 = por %p61, %p62
    %p64 = scmp.ne.s32.totalorder %s53, %s54
    %p65 = scmp.eq.s32.totalorder %s19, 0
    %p66 = por %p64, %p65
    %p67 = scmp.ne.s32.totalorder %s53, %s54
    %p68 = scmp.eq.s32.totalorder %s20, 1
    %p69 = por %p67, %p68
    %p71 = scmp.ne.s32.totalorder %s54, %s70
    %p72 = scmp.eq.s32.totalorder %s20, 0
    %p73 = por %p71, %p72
    %s75 = sadd.s32 %s74, 1
    %p78 = scmp.eq.s32.totalorder %s14, 1
    %p79 = scmp.ne.s32.totalorder %s74, %s76
    %p80 = scmp.eq.s32.totalorder %s14, 0
    %p81 = por %p79, %p80
    %p82 = scmp.ne.s32.totalorder %s74, %s76
    %p83 = scmp.eq.s32.totalorder %s19, 1
    %p84 = por %p82, %p83
    %p85 = scmp.ne.s32.totalorder %s76, %s77
    %p86 = scmp.eq.s32.totalorder %s19, 0
    %p87 = por %p85, %p86
    %p88 = scmp.ne.s32.totalorder %s76, %s77
    %p89 = scmp.eq.s32.totalorder %s20, 1
    %p90 = por %p88, %p89
    %p92 = scmp.ne.s32.totalorder %s77, %s91
    %p93 = scmp.eq.s32.totalorder %s20, 0
    %p94 = por %p92, %p93
    %s96 = sadd.s32 %s95, 1
    %p99 = scmp.eq.s32.totalorder %s14, 1
    %p100 = scmp.ne.s32.totalorder %s95, %s97
    %p101 = scmp.eq.s32.totalorder %s14, 0
    %p102 = por %p100, %p101
    %p103 = scmp.ne.s32.totalorder %s95, %s97
    %p104 = scmp.eq.s32.totalorder %s19, 1
    %p105 = por %p103, %p104
    %p106 = scmp.ne.s32.totalorder %s97, %s98
    %p107 = scmp.eq.s32.totalorder %s19, 0
    %p108 = por %p106, %p107
    %p109 = scmp.ne.s32.totalorder %s97, %s98
    %p110 = scmp.eq.s32.totalorder %s20, 1
    %p111 = por %p109, %p110
    %p113 = scmp.ne.s32.totalorder %s98, %s112
    %p114 = scmp.eq.s32.totalorder %s20, 0
    %p115 = por %p113, %p114
    %s117 = sadd.s32 %s116, 1
    %p120 = scmp.eq.s32.totalorder %s14, 1
    %p121 = scmp.ne.s32.totalorder %s116, %s118
    %p122 = scmp.eq.s32.totalorder %s14, 0
    %p123 = por %p121, %p122
    %p124 = scmp.ne.s32.totalorder %s116, %s118
    %p125 = scmp.eq.s32.totalorder %s19, 1
    %p126 = por %p124, %p125
    %p127 = scmp.ne.s32.totalorder %s118, %s119
    %p128 = scmp.eq.s32.totalorder %s19, 0
    %p129 = por %p127, %p128
    %p130 = scmp.ne.s32.totalorder %s118, %s119
    %p131 = scmp.eq.s32.totalorder %s20, 1
    %p132 = por %p130, %p131
    %p134 = scmp.ne.s32.totalorder %s119, %s133
    %p135 = scmp.eq.s32.totalorder %s20, 0
    %p136 = por %p134, %p135
    %s138 = sadd.s32 %s137, 1
    %p141 = scmp.eq.s32.totalorder %s14, 1
    %p142 = scmp.ne.s32.totalorder %s137, %s139
    %p143 = scmp.eq.s32.totalorder %s14, 0
    %p144 = por %p142, %p143
    %p145 = scmp.ne.s32.totalorder %s137, %s139
    %p146 = scmp.eq.s32.totalorder %s19, 1
    %p147 = por %p145, %p146
    %p148 = scmp.ne.s32.totalorder %s139, %s140
    %p149 = scmp.eq.s32.totalorder %s19, 0
    %p150 = por %p148, %p149
    %p151 = scmp.ne.s32.totalorder %s139, %s140
    %p152 = scmp.eq.s32.totalorder %s20, 1
    %p153 = por %p151, %p152
    %p155 = scmp.ne.s32.totalorder %s140, %s154
    %p156 = scmp.eq.s32.totalorder %s20, 0
    %p157 = por %p155, %p156
    %s159 = sadd.s32 %s158, 1
    %p162 = scmp.eq.s32.totalorder %s14, 1
    %p163 = scmp.ne.s32.totalorder %s158, %s160
    %p164 = scmp.eq.s32.totalorder %s14, 0
    %p165 = por %p163, %p164
    %p166 = scmp.ne.s32.totalorder %s158, %s160
    %p167 = scmp.eq.s32.totalorder %s19, 1
    %p168 = por %p166, %p167
    %p169 = scmp.ne.s32.totalorder %s160, %s161
    %p170 = scmp.eq.s32.totalorder %s19, 0
    %p171 = por %p169, %p170
    %p172 = scmp.ne.s32.totalorder %s160, %s161
    %p173 = scmp.eq.s32.totalorder %s20, 1
    %p174 = por %p172, %p173
    %p176 = scmp.ne.s32.totalorder %s161, %s175
    %p177 = scmp.eq.s32.totalorder %s20, 0
    %p178 = por %p176, %p177
    %s180 = sadd.s32 %s179, 1
    %p183 = scmp.eq.s32.totalorder %s14, 1
    %p184 = scmp.ne.s32.totalorder %s179, %s181
    %p185 = scmp.eq.s32.totalorder %s14, 0
    %p186 = por %p184, %p185
    %p187 = scmp.ne.s32.totalorder %s179, %s181
    %p188 = scmp.eq.s32.totalorder %s19, 1
    %p189 = por %p187, %p188
    %p190 = scmp.ne.s32.totalorder %s181, %s182
    %p191 = scmp.eq.s32.totalorder %s19, 0
    %p192 = por %p190, %p191
    %p193 = scmp.ne.s32.totalorder %s181, %s182
    %p194 = scmp.eq.s32.totalorder %s20, 1
    %p195 = por %p193, %p194
    %p197 = scmp.ne.s32.totalorder %s182, %s196
    %p198 = scmp.eq.s32.totalorder %s20, 0
    %p199 = por %p197, %p198
    %s200 = ssub.s32 %s14, %s21
    %p201 = scmp.eq.s32.totalorder %s200, 0
    %s203 = sadd.s32 %s202, 1
    %s204 = scalar_select %p201, %s202, %s203
    %p207 = pneg %p201
    %p208 = scmp.eq.s32.totalorder %s14, 1
    %p209 = por %p207, %p208
    %p210 = scmp.ne.s32.totalorder %s202, %s205
    %p211 = scmp.eq.s32.totalorder %s14, 0
    %p212 = por %p210, %p211
    %p213 = scmp.ne.s32.totalorder %s202, %s205
    %p214 = scmp.eq.s32.totalorder %s19, 1
    %p215 = por %p213, %p214
    %p216 = scmp.ne.s32.totalorder %s205, %s206
    %p217 = scmp.eq.s32.totalorder %s19, 0
    %p218 = por %p216, %p217
    %p219 = scmp.ne.s32.totalorder %s205, %s206
    %p220 = scmp.eq.s32.totalorder %s20, 1
    %p221 = por %p219, %p220
    %p223 = scmp.ne.s32.totalorder %s206, %s222
    %p224 = scmp.eq.s32.totalorder %s20, 0
    %p225 = por %p223, %p224
    %p226 = scmp.le.s32.totalorder 1, %s14
    %p227 = scmp.lt.s32.totalorder %s14, 3
    %p228 = pnand %p226, %p227
    %p229 = pneg %p228
    // Predicated region
    $region9: #{cell_forward.1} parent=5 // pred_check
      _
    $region10: #{cell_forward.1} parent=5 // pred_check_branch
      %231 = sbr.rel (%p228) target = $region12
    $region11: #{cell_forward.1} parent=5 // pred_region
      %s232 = ssub.s32 %s14, 1
      // Predicated region
      $region13: #{cell_forward.1} parent=11 // pred_check
        %p233 = pneg %p87
      $region14: #{cell_forward.1} parent=11 // pred_check_branch
        %235 = sbr.rel (%p233) target = $region16
      $region15: #{cell_forward.1} parent=11 // pred_region
        _
      $region16: #{cell_forward.1} parent=11 // pred_fallthru
        _
      // Predicated region
      $region17: #{cell_forward.1} parent=11 // pred_check
        %p236 = pneg %p108
      $region18: #{cell_forward.1} parent=11 // pred_check_branch
        %238 = sbr.rel (%p236) target = $region20
      $region19: #{cell_forward.1} parent=11 // pred_region
        _
      $region20: #{cell_forward.1} parent=11 // pred_fallthru
        _
      // Predicated region
      $region21: #{cell_forward.1} parent=11 // pred_check
        %p239 = pneg %p129
      $region22: #{cell_forward.1} parent=11 // pred_check_branch
        %241 = sbr.rel (%p239) target = $region24
      $region23: #{cell_forward.1} parent=11 // pred_region
        _
      $region24: #{cell_forward.1} parent=11 // pred_fallthru
        _
      // Predicated region
      $region25: #{cell_forward.1} parent=11 // pred_check
        %p242 = pneg %p150
      $region26: #{cell_forward.1} parent=11 // pred_check_branch
        %244 = sbr.rel (%p242) target = $region28
      $region27: #{cell_forward.1} parent=11 // pred_region
        _
      $region28: #{cell_forward.1} parent=11 // pred_fallthru
        _
      // Predicated region
      $region29: #{cell_forward.1} parent=11 // pred_check
        %p245 = pneg %p171
      $region30: #{cell_forward.1} parent=11 // pred_check_branch
        %247 = sbr.rel (%p245) target = $region32
      $region31: #{cell_forward.1} parent=11 // pred_region
        _
      $region32: #{cell_forward.1} parent=11 // pred_fallthru
        _
      // Predicated region
      $region33: #{cell_forward.1} parent=11 // pred_check
        %p248 = pneg %p192
      $region34: #{cell_forward.1} parent=11 // pred_check_branch
        %250 = sbr.rel (%p248) target = $region36
      $region35: #{cell_forward.1} parent=11 // pred_region
        _
      $region36: #{cell_forward.1} parent=11 // pred_fallthru
        _
    $region12: #{cell_forward.1} parent=5 // pred_fallthru
      _
    %p251 = scmp.lt.s32.totalorder %s14, 2
    // Predicated region
    $region37: #{cell_forward.1} parent=5 // pred_check
      %p252 = pneg %p251
    $region38: #{cell_forward.1} parent=5 // pred_check_branch
      %254 = sbr.rel (%p252) target = $region40
    $region39: #{cell_forward.1} parent=5 // pred_region
      // Predicated region
      $region41: #{cell_forward.1} parent=39 // pred_check
        %p255 = pneg %p34
      $region42: #{cell_forward.1} parent=39 // pred_check_branch
        %257 = sbr.rel (%p255) target = $region44
      $region43: #{cell_forward.1} parent=39 // pred_region
        %p258 = scmp.lt.s32.totalorder %s14, 1
        %s259 = scalar_select %p258, %s14, 1
        %s260 = smul.addr %s259, 2
        %s261 = smul.addr %s260, 8
        %s262 = scalar_lea.vmem %s0, %s261
      $region44: #{cell_forward.1} parent=39 // pred_fallthru
        _
      // Predicated region
      $region45: #{cell_forward.1} parent=39 // pred_check
        %p263 = pneg %p60
      $region46: #{cell_forward.1} parent=39 // pred_check_branch
        %265 = sbr.rel (%p263) target = $region48
      $region47: #{cell_forward.1} parent=39 // pred_region
        %p266 = scmp.lt.s32.totalorder %s14, 1
        %s267 = scalar_select %p266, %s14, 1
        %s268 = smul.addr %s267, 2
        %s269 = smul.addr %s268, 8
        %s270 = scalar_lea.vmem %s1, %s269
      $region48: #{cell_forward.1} parent=39 // pred_fallthru
        _
    $region40: #{cell_forward.1} parent=5 // pred_fallthru
      _
    %p271 = scmp.le.s32.totalorder 1, %s14
    %p272 = scmp.lt.s32.totalorder %s14, 3
    %p273 = pnand %p271, %p272
    %p274 = pneg %p273
    // Predicated region
    $region49: #{cell_forward.1} parent=5 // pred_check
      _
    $region50: #{cell_forward.1} parent=5 // pred_check_branch
      %276 = sbr.rel (%p273) target = $region52
    $region51: #{cell_forward.1} parent=5 // pred_region
      %s277 = ssub.s32 %s14, 1
      %p278 = scmp.lt.s32.totalorder %s19, 1
      %s279 = scalar_select %p278, %s19, 1
      %s280 = smul.addr %s279, 2
      %s281 = smul.addr %s280, 8
      %s282 = scalar_lea.vmem %s0, %s281
      %p283 = pneg %p40
      %p284 = pneg %p37
      %p285 = scmp.lt.s32.totalorder %s19, 1
      %s286 = scalar_select %p285, %s19, 1
      %s287 = smul.addr %s286, 2
      %s288 = smul.addr %s287, 8
      %s289 = scalar_lea.vmem %s1, %s288
      %p290 = pneg %p66
      %p291 = pneg %p63
      %p292 = pneg %p87
      %p293 = pneg %p84
      %p294 = pneg %p108
      %p295 = pneg %p105
      %p296 = pneg %p129
      %p297 = pneg %p126
      %p298 = pneg %p150
      %p299 = pneg %p147
      %p300 = pneg %p171
      %p301 = pneg %p168
      %p302 = pneg %p192
      %p303 = pneg %p189
      %p304 = pneg %p218
      %p305 = pneg %p215
      %p306 = scmp.lt.s32.totalorder %s19, 1
      %s307 = scalar_select %p306, %s19, 1
      %s308 = smul.addr %s307, 8
      %s309 = smul.addr %s308, 8
      %s310 = scalar_lea.vmem %s8, %s309
      %p311 = scmp.lt.s32.totalorder %s19, 1
      %s312 = scalar_select %p311, %s19, 1
      %s313 = smul.addr %s312, 2
      %s314 = smul.addr %s313, 8
      %s315 = scalar_lea.vmem %s0, %s314
      %p316 = scmp.lt.s32.totalorder %s19, 1
      %s317 = scalar_select %p316, %s19, 1
      %s318 = smul.addr %s317, 2
      %s319 = smul.addr %s318, 8
      %s320 = scalar_lea.vmem %s1, %s319
      %p321 = scmp.lt.s32.totalorder %s19, 1
      %s322 = scalar_select %p321, %s19, 1
      %s323 = smul.addr %s322, 8
      %s324 = smul.addr %s323, 8
      %s325 = scalar_lea.vmem %s8, %s324
      %v326 = vld [vmem:[%s315] sm:$0xff]
      %v327 = vld [vmem:[%s315 + $0x8] sm:$0xff]
      %v328 = vmax.f32 %v326, 0.0
      %v329 = vmax.f32 %v327, 0.0
      %v330 = vld [vmem:[%s2] sm:$0xff]
      %v331 = vld [vmem:[%s2 + $0x8] sm:$0xff]
      %v332 = vld [vmem:[%s2 + $0x10] sm:$0xff]
      %v333 = vld [vmem:[%s2 + $0x18] sm:$0xff]
      %v334 = vld [vmem:[%s2 + $0x20] sm:$0xff]
      %v335 = vld [vmem:[%s2 + $0x28] sm:$0xff]
      %v336 = vld [vmem:[%s2 + $0x30] sm:$0xff]
      %v337 = vld [vmem:[%s2 + $0x38] sm:$0xff]
      %v338 = vld [vmem:[%s2 + $0x40] sm:$0xff]
      %v339 = vld [vmem:[%s2 + $0x48] sm:$0xff]
      %v340 = vld [vmem:[%s2 + $0x50] sm:$0xff]
      %v341 = vld [vmem:[%s2 + $0x58] sm:$0xff]
      %v342 = vld [vmem:[%s2 + $0x60] sm:$0xff]
      %v343 = vld [vmem:[%s2 + $0x68] sm:$0xff]
      %v344 = vld [vmem:[%s2 + $0x70] sm:$0xff]
      %v345 = vld [vmem:[%s2 + $0x78] sm:$0xff]
      %v346 = vld [vmem:[%s4] sm:$0x1]
      %v348 = vlaneseq
      %v349 = vshrl.u32 %v348, 7
      %v350 = vsub.s32 0, %v349
      %v351 = vrot.slane %v346, %v350
      %353 = vmatprep.subr.mxu0 0.0
      %354 = vmatpush1.msra.mxu0 %v330
      %355 = vmatprep.subr.mxu0 0.0
      %356 = vmatpush1.msra.mxu0 %v331
      %357 = vmatprep.subr.mxu0 0.0
      %358 = vmatpush1.msra.mxu0 %v332
      %359 = vmatprep.subr.mxu0 0.0
      %360 = vmatpush1.msra.mxu0 %v333
      %361 = vmatprep.subr.mxu0 0.0
      %362 = vmatpush1.msra.mxu0 %v334
      %363 = vmatprep.subr.mxu0 0.0
      %364 = vmatpush1.msra.mxu0 %v335
      %365 = vmatprep.subr.mxu0 0.0
      %366 = vmatpush1.msra.mxu0 %v336
      %367 = vmatprep.subr.mxu0 0.0
      %368 = vmatpush1.msra.mxu0 %v337
      %369 = vmatprep.subr.mxu0 0.0
      %370 = vmatpush1.msra.mxu0 %v338
      %371 = vmatprep.subr.mxu0 0.0
      %372 = vmatpush1.msra.mxu0 %v339
      %373 = vmatprep.subr.mxu0 0.0
      %374 = vmatpush1.msra.mxu0 %v340
      %375 = vmatprep.subr.mxu0 0.0
      %376 = vmatpush1.msra.mxu0 %v341
      %377 = vmatprep.subr.mxu0 0.0
      %378 = vmatpush1.msra.mxu0 %v342
      %379 = vmatprep.subr.mxu0 0.0
      %380 = vmatpush1.msra.mxu0 %v343
      %381 = vmatprep.subr.mxu0 0.0
      %382 = vmatpush1.msra.mxu0 %v344
      %383 = vmatprep.subr.mxu0 0.0
      %384 = vmatpush1.msra.mxu0 %v345
      %385 = vmatprep.subr.mxu0 0.0
      %386 = vmatpush1.msra.mxu0 0.0
      %387 = vmatprep.subr.mxu0 0.0
      %388 = vmatpush1.msra.mxu0 0.0
      %389 = vmatprep.subr.mxu0 0.0
      %390 = vmatpush1.msra.mxu0 0.0
      %391 = vmatprep.subr.mxu0 0.0
      %392 = vmatpush1.msra.mxu0 0.0
      %393 = vmatprep.subr.mxu0 0.0
      %394 = vmatpush1.msra.mxu0 0.0
      %395 = vmatprep.subr.mxu0 0.0
      %396 = vmatpush1.msra.mxu0 0.0
      %397 = vmatprep.subr.mxu0 0.0
      %398 = vmatpush1.msra.mxu0 0.0
      %399 = vmatprep.subr.mxu0 0.0
      %400 = vmatpush1.msra.mxu0 0.0
      %401 = vmatprep.subr.mxu0 0.0
      %402 = vmatpush1.msra.mxu0 0.0
      %403 = vmatprep.subr.mxu0 0.0
      %404 = vmatpush1.msra.mxu0 0.0
      %405 = vmatprep.subr.mxu0 0.0
      %406 = vmatpush1.msra.mxu0 0.0
      %407 = vmatprep.subr.mxu0 0.0
      %408 = vmatpush1.msra.mxu0 0.0
      %409 = vmatprep.subr.mxu0 0.0
      %410 = vmatpush1.msra.mxu0 0.0
      %411 = vmatprep.subr.mxu0 0.0
      %412 = vmatpush1.msra.mxu0 0.0
      %413 = vmatprep.subr.mxu0 0.0
      %414 = vmatpush1.msra.mxu0 0.0
      %415 = vmatprep.subr.mxu0 0.0
      %416 = vmatpush1.msra.mxu0 0.0
      %417 = vmatprep.mubr.f32.mxu0 0.0
      %418 = vmatmul.mubr.f32.gmra.mrb[0].mxu0 %v328
      %v419 = vpop.f32.mrb[0].mxu0
      %v420 = vadd.f32 %v351, %v419
      %v421 = vpop.f32.mrb[0].mxu0
      %422 = vmatprep.mubr.f32.mxu0 0.0
      %423 = vmatmul.mubr.f32.gmra.mrb[0].mxu0 %v329
      %v424 = vpop.f32.mrb[0].mxu0
      %v425 = vadd.f32 %v351, %v424
      %v426 = vpop.f32.mrb[0].mxu0
      %427 = vdwg.mxu0
      %v428 = vld [vmem:[%s320] sm:$0xff]
      %v429 = vld [vmem:[%s320 + $0x8] sm:$0xff]
      %v430 = vmax.f32 %v428, 0.0
      %v431 = vmax.f32 %v429, 0.0
      %v432 = vld [vmem:[%s3] sm:$0xff]
      %v433 = vld [vmem:[%s3 + $0x8] sm:$0xff]
      %v434 = vld [vmem:[%s3 + $0x10] sm:$0xff]
      %v435 = vld [vmem:[%s3 + $0x18] sm:$0xff]
      %v436 = vld [vmem:[%s3 + $0x20] sm:$0xff]
      %v437 = vld [vmem:[%s3 + $0x28] sm:$0xff]
      %v438 = vld [vmem:[%s3 + $0x30] sm:$0xff]
      %v439 = vld [vmem:[%s3 + $0x38] sm:$0xff]
      %v440 = vld [vmem:[%s3 + $0x40] sm:$0xff]
      %v441 = vld [vmem:[%s3 + $0x48] sm:$0xff]
      %v442 = vld [vmem:[%s3 + $0x50] sm:$0xff]
      %v443 = vld [vmem:[%s3 + $0x58] sm:$0xff]
      %v444 = vld [vmem:[%s3 + $0x60] sm:$0xff]
      %v445 = vld [vmem:[%s3 + $0x68] sm:$0xff]
      %v446 = vld [vmem:[%s3 + $0x70] sm:$0xff]
      %v447 = vld [vmem:[%s3 + $0x78] sm:$0xff]
      %s448 = scalar_lea.vmem %s4, 1
      %v449 = vld [vmem:[%s448] sm:$0x1]
      %v451 = vlaneseq
      %v452 = vshrl.u32 %v451, 7
      %v453 = vsub.s32 0, %v452
      %v454 = vrot.slane %v449, %v453
      %456 = vmatprep.subr.mxu0 0.0
      %457 = vmatpush1.msra.mxu0 %v432
      %458 = vmatprep.subr.mxu0 0.0
      %459 = vmatpush1.msra.mxu0 %v433
      %460 = vmatprep.subr.mxu0 0.0
      %461 = vmatpush1.msra.mxu0 %v434
      %462 = vmatprep.subr.mxu0 0.0
      %463 = vmatpush1.msra.mxu0 %v435
      %464 = vmatprep.subr.mxu0 0.0
      %465 = vmatpush1.msra.mxu0 %v436
      %466 = vmatprep.subr.mxu0 0.0
      %467 = vmatpush1.msra.mxu0 %v437
      %468 = vmatprep.subr.mxu0 0.0
      %469 = vmatpush1.msra.mxu0 %v438
      %470 = vmatprep.subr.mxu0 0.0
      %471 = vmatpush1.msra.mxu0 %v439
      %472 = vmatprep.subr.mxu0 0.0
      %473 = vmatpush1.msra.mxu0 %v440
      %474 = vmatprep.subr.mxu0 0.0
      %475 = vmatpush1.msra.mxu0 %v441
      %476 = vmatprep.subr.mxu0 0.0
      %477 = vmatpush1.msra.mxu0 %v442
      %478 = vmatprep.subr.mxu0 0.0
      %479 = vmatpush1.msra.mxu0 %v443
      %480 = vmatprep.subr.mxu0 0.0
      %481 = vmatpush1.msra.mxu0 %v444
      %482 = vmatprep.subr.mxu0 0.0
      %483 = vmatpush1.msra.mxu0 %v445
      %484 = vmatprep.subr.mxu0 0.0
      %485 = vmatpush1.msra.mxu0 %v446
      %486 = vmatprep.subr.mxu0 0.0
      %487 = vmatpush1.msra.mxu0 %v447
      %488 = vmatprep.subr.mxu0 0.0
      %489 = vmatpush1.msra.mxu0 0.0
      %490 = vmatprep.subr.mxu0 0.0
      %491 = vmatpush1.msra.mxu0 0.0
      %492 = vmatprep.subr.mxu0 0.0
      %493 = vmatpush1.msra.mxu0 0.0
      %494 = vmatprep.subr.mxu0 0.0
      %495 = vmatpush1.msra.mxu0 0.0
      %496 = vmatprep.subr.mxu0 0.0
      %497 = vmatpush1.msra.mxu0 0.0
      %498 = vmatprep.subr.mxu0 0.0
      %499 = vmatpush1.msra.mxu0 0.0
      %500 = vmatprep.subr.mxu0 0.0
      %501 = vmatpush1.msra.mxu0 0.0
      %502 = vmatprep.subr.mxu0 0.0
      %503 = vmatpush1.msra.mxu0 0.0
      %504 = vmatprep.subr.mxu0 0.0
      %505 = vmatpush1.msra.mxu0 0.0
      %506 = vmatprep.subr.mxu0 0.0
      %507 = vmatpush1.msra.mxu0 0.0
      %508 = vmatprep.subr.mxu0 0.0
      %509 = vmatpush1.msra.mxu0 0.0
      %510 = vmatprep.subr.mxu0 0.0
      %511 = vmatpush1.msra.mxu0 0.0
      %512 = vmatprep.subr.mxu0 0.0
      %513 = vmatpush1.msra.mxu0 0.0
      %514 = vmatprep.subr.mxu0 0.0
      %515 = vmatpush1.msra.mxu0 0.0
      %516 = vmatprep.subr.mxu0 0.0
      %517 = vmatpush1.msra.mxu0 0.0
      %518 = vmatprep.subr.mxu0 0.0
      %519 = vmatpush1.msra.mxu0 0.0
      %520 = vmatprep.mubr.f32.mxu0 0.0
      %521 = vmatmul.mubr.f32.gmra.mrb[0].mxu0 %v430
      %v522 = vpop.f32.mrb[0].mxu0
      %v523 = vadd.f32 %v454, %v522
      %v524 = vpop.f32.mrb[0].mxu0
      %525 = vmatprep.mubr.f32.mxu0 0.0
      %526 = vmatmul.mubr.f32.gmra.mrb[0].mxu0 %v431
      %v527 = vpop.f32.mrb[0].mxu0
      %v528 = vadd.f32 %v454, %v527
      %v529 = vpop.f32.mrb[0].mxu0
      %530 = vdwg.mxu0
      %v531 = vmax.f32 %v420, 0.0
      %v532 = vmax.f32 %v425, 0.0
      %533 = vst [vmem:[#allocation2] sm:$0xff] 0.0
      %534 = vst [vmem:[#allocation2 + $0x8] sm:$0xff] 0.0
      %535 = vst [vmem:[#allocation2 + $0x10] sm:$0xff] 0.0
      %536 = vst [vmem:[#allocation2 + $0x18] sm:$0xff] 0.0
      %537 = vst [vmem:[#allocation2 + $0x20] sm:$0xff] 0.0
      %538 = vst [vmem:[#allocation2 + $0x28] sm:$0xff] 0.0
      %539 = vst [vmem:[#allocation2 + $0x30] sm:$0xff] 0.0
      %540 = vst [vmem:[#allocation2 + $0x38] sm:$0xff] 0.0
      %541 = vst [vmem:[#allocation2 + $0x40] sm:$0xff] 0.0
      %542 = vst [vmem:[#allocation2 + $0x48] sm:$0xff] 0.0
      %543 = vst [vmem:[#allocation2 + $0x50] sm:$0xff] 0.0
      %544 = vst [vmem:[#allocation2 + $0x58] sm:$0xff] 0.0
      %545 = vst [vmem:[#allocation2 + $0x20] sm:$0xff] %v531
      %546 = vst [vmem:[#allocation2 + $0x38] sm:$0xff] %v532
      %v547 = vld [vmem:[#allocation2 + $0x20] sm:$0xff]
      %v548 = vld [vmem:[#allocation2 + $0x38] sm:$0xff]
      %v549 = vld [vmem:[%s6 + $0x4] sm:$0x1]
      %v550 = vlaneseq
      %v551 = vshrl.u32 %v550, 7
      %v552 = vsub.s32 0, %v551
      %v553 = vrot.slane %v549, %v552
      %v554 = vmul.f32 %v547, %v553
      %v555 = vmul.f32 %v548, %v553
      %v556 = vld [vmem:[#allocation2] sm:$0x80]
      %v557 = vld [vmem:[#allocation2 + $0x8] sm:$0x80]
      %v558 = vld [vmem:[#allocation2 + $0x18] sm:$0xff]
      %v559 = vld [vmem:[#allocation2 + $0x30] sm:$0x7f]
      %v560 = vld [vmem:[#allocation2 + $0x38] sm:$0x7f]
      %v561 = vld [vmem:[%s6] sm:$0x1]
      %v562 = vlaneseq
      %v563 = vshrl.u32 %v562, 7
      %v564 = vsub.s32 0, %v563
      %v565 = vrot.slane %v561, %v564
      %567 = vrot.lane.b32.xlu0 %v565, 120
      %v568 = vpop.permute.xlu0 %567
      %v570 = vmul.f32 %v556, %v568
      %v571 = vmul.f32 %v557, %v568
      %v572 = vmul.f32 %v558, %v568
      %v573 = vmul.f32 %v547, %v568
      %v574 = vmul.f32 %v559, %v568
      %v575 = vmul.f32 %v560, %v568
      %vm582 = vcmask 1040384
      %v583 = vrot.slane %v570, 7
      %v584 = vrot.slane %v572, 7
      %v585 = vsel %vm582, %v583, %v584
      %v586 = vrot.slane %v571, 7
      %v587 = vrot.slane %v573, 7
      %v588 = vsel %vm582, %v586, %v587
      %v589 = vrot.slane %v574, 7
      %v590 = vsel %vm582, %v584, %v589
      %v591 = vrot.slane %v575, 7
      %v592 = vsel %vm582, %v587, %v591
      %593 = vrot.lane.b32.xlu0 %v585, 8
      %v594 = vpop.permute.xlu0 %593
      %595 = vrot.lane.b32.xlu0 %v588, 8
      %v596 = vpop.permute.xlu0 %595
      %597 = vrot.lane.b32.xlu0 %v590, 8
      %v598 = vpop.permute.xlu0 %597
      %599 = vrot.lane.b32.xlu0 %v592, 8
      %v600 = vpop.permute.xlu0 %599
      %vm601 = vcmask 64512
      %v602 = vsel %vm601, %v594, %v596
      %v603 = vsel %vm601, %v598, %v600
      %v606 = vadd.f32 %v554, %v602
      %v607 = vadd.f32 %v555, %v603
      %v608 = vld [vmem:[%s6 + $0x1] sm:$0x1]
      %v609 = vlaneseq
      %v610 = vshrl.u32 %v609, 7
      %v611 = vsub.s32 0, %v610
      %v612 = vrot.slane %v608, %v611
      %v613 = vmul.f32 %v557, %v612
      %v614 = vmul.f32 %v547, %v612
      %v615 = vmul.f32 %v560, %v612
      %v619 = vrot.slane %v613, 7
      %v620 = vrot.slane %v614, 7
      %v621 = vsel %vm582, %v619, %v620
      %v622 = vrot.slane %v615, 7
      %v623 = vsel %vm582, %v620, %v622
      %v626 = vadd.f32 %v606, %v621
      %v627 = vadd.f32 %v607, %v623
      %v628 = vld [vmem:[#allocation2 + $0x10] sm:$0x80]
      %v629 = vld [vmem:[#allocation2 + $0x28] sm:$0xff]
      %v630 = vld [vmem:[#allocation2 + $0x40] sm:$0x7f]
      %v631 = vld [vmem:[%s6 + $0x2] sm:$0x1]
      %v632 = vlaneseq
      %v633 = vshrl.u32 %v632, 7
      %v634 = vsub.s32 0, %v633
      %v635 = vrot.slane %v631, %v634
      %637 = vrot.lane.b32.xlu0 %v635, 8
      %v638 = vpop.permute.xlu0 %637
      %v640 = vmul.f32 %v557, %v638
      %v641 = vmul.f32 %v628, %v638
      %v642 = vmul.f32 %v547, %v638
      %v643 = vmul.f32 %v629, %v638
      %v644 = vmul.f32 %v560, %v638
      %v645 = vmul.f32 %v630, %v638
      %v652 = vrot.slane %v640, 7
      %v653 = vrot.slane %v642, 7
      %v654 = vsel %vm582, %v652, %v653
      %v655 = vrot.slane %v641, 7
      %v656 = vrot.slane %v643, 7
      %v657 = vsel %vm582, %v655, %v656
      %v658 = vrot.slane %v644, 7
      %v659 = vsel %vm582, %v653, %v658
      %v660 = vrot.slane %v645, 7
      %v661 = vsel %vm582, %v656, %v660
      %662 = vrot.lane.b32.xlu0 %v654, 120
      %v663 = vpop.permute.xlu0 %662
      %664 = vrot.lane.b32.xlu0 %v657, 120
      %v665 = vpop.permute.xlu0 %664
      %666 = vrot.lane.b32.xlu0 %v659, 120
      %v667 = vpop.permute.xlu0 %666
      %668 = vrot.lane.b32.xlu0 %v661, 120
      %v669 = vpop.permute.xlu0 %668
      %vm670 = vcmask 982016
      %v671 = vsel %vm670, %v663, %v665
      %v672 = vsel %vm670, %v667, %v669
      %v675 = vadd.f32 %v626, %v671
      %v676 = vadd.f32 %v627, %v672
      %v677 = vld [vmem:[#allocation2 + $0x30] sm:$0xff]
      %v678 = vld [vmem:[%s6 + $0x3] sm:$0x1]
      %v679 = vlaneseq
      %v680 = vshrl.u32 %v679, 7
      %v681 = vsub.s32 0, %v680
      %v682 = vrot.slane %v678, %v681
      %684 = vrot.lane.b32.xlu0 %v682, 120
      %v685 = vpop.permute.xlu0 %684
      %v687 = vmul.f32 %v558, %v685
      %v688 = vmul.f32 %v547, %v685
      %v689 = vmul.f32 %v677, %v685
      %v690 = vmul.f32 %v548, %v685
      %695 = vrot.lane.b32.xlu0 %v687, 8
      %v696 = vpop.permute.xlu0 %695
      %697 = vrot.lane.b32.xlu0 %v688, 8
      %v698 = vpop.permute.xlu0 %697
      %699 = vrot.lane.b32.xlu0 %v689, 8
      %v700 = vpop.permute.xlu0 %699
      %701 = vrot.lane.b32.xlu0 %v690, 8
      %v702 = vpop.permute.xlu0 %701
      %v703 = vsel %vm601, %v696, %v698
      %v704 = vsel %vm601, %v700, %v702
      %v707 = vadd.f32 %v675, %v703
      %v708 = vadd.f32 %v676, %v704
      %v709 = vld [vmem:[#allocation2 + $0x40] sm:$0xff]
      %v710 = vld [vmem:[%s6 + $0x5] sm:$0x1]
      %v711 = vlaneseq
      %v712 = vshrl.u32 %v711, 7
      %v713 = vsub.s32 0, %v712
      %v714 = vrot.slane %v710, %v713
      %716 = vrot.lane.b32.xlu0 %v714, 8
      %v717 = vpop.permute.xlu0 %716
      %v719 = vmul.f32 %v547, %v717
      %v720 = vmul.f32 %v629, %v717
      %v721 = vmul.f32 %v548, %v717
      %v722 = vmul.f32 %v709, %v717
      %727 = vrot.lane.b32.xlu0 %v719, 120
      %v728 = vpop.permute.xlu0 %727
      %729 = vrot.lane.b32.xlu0 %v720, 120
      %v730 = vpop.permute.xlu0 %729
      %731 = vrot.lane.b32.xlu0 %v721, 120
      %v732 = vpop.permute.xlu0 %731
      %733 = vrot.lane.b32.xlu0 %v722, 120
      %v734 = vpop.permute.xlu0 %733
      %v735 = vsel %vm670, %v728, %v730
      %v736 = vsel %vm670, %v732, %v734
      %v739 = vadd.f32 %v707, %v735
      %v740 = vadd.f32 %v708, %v736
      %v741 = vld [vmem:[#allocation2 + $0x18] sm:$0xfe]
      %v742 = vld [vmem:[#allocation2 + $0x20] sm:$0xfe]
      %v743 = vld [vmem:[#allocation2 + $0x48] sm:$0x1]
      %v744 = vld [vmem:[#allocation2 + $0x50] sm:$0x1]
      %v745 = vld [vmem:[%s6 + $0x6] sm:$0x1]
      %v746 = vlaneseq
      %v747 = vshrl.u32 %v746, 7
      %v748 = vsub.s32 0, %v747
      %v749 = vrot.slane %v745, %v748
      %751 = vrot.lane.b32.xlu0 %v749, 120
      %v752 = vpop.permute.xlu0 %751
      %v754 = vmul.f32 %v741, %v752
      %v755 = vmul.f32 %v742, %v752
      %v756 = vmul.f32 %v677, %v752
      %v757 = vmul.f32 %v548, %v752
      %v758 = vmul.f32 %v743, %v752
      %v759 = vmul.f32 %v744, %v752
      %vm766 = vcmask 1046528
      %v767 = vrot.slane %v754, 1
      %v768 = vrot.slane %v756, 1
      %v769 = vsel %vm766, %v767, %v768
      %v770 = vrot.slane %v755, 1
      %v771 = vrot.slane %v757, 1
      %v772 = vsel %vm766, %v770, %v771
      %v773 = vrot.slane %v758, 1
      %v774 = vsel %vm766, %v768, %v773
      %v775 = vrot.slane %v759, 1
      %v776 = vsel %vm766, %v771, %v775
      %777 = vrot.lane.b32.xlu0 %v769, 8
      %v778 = vpop.permute.xlu0 %777
      %779 = vrot.lane.b32.xlu0 %v772, 8
      %v780 = vpop.permute.xlu0 %779
      %781 = vrot.lane.b32.xlu0 %v774, 8
      %v782 = vpop.permute.xlu0 %781
      %783 = vrot.lane.b32.xlu0 %v776, 8
      %v784 = vpop.permute.xlu0 %783
      %v785 = vsel %vm601, %v778, %v780
      %v786 = vsel %vm601, %v782, %v784
      %v789 = vadd.f32 %v739, %v785
      %v790 = vadd.f32 %v740, %v786
      %v791 = vld [vmem:[%s6 + $0x7] sm:$0x1]
      %v792 = vlaneseq
      %v793 = vshrl.u32 %v792, 7
      %v794 = vsub.s32 0, %v793
      %v795 = vrot.slane %v791, %v794
      %v796 = vmul.f32 %v742, %v795
      %v797 = vmul.f32 %v548, %v795
      %v798 = vmul.f32 %v744, %v795
      %v802 = vrot.slane %v796, 1
      %v803 = vrot.slane %v797, 1
      %v804 = vsel %vm766, %v802, %v803
      %v805 = vrot.slane %v798, 1
      %v806 = vsel %vm766, %v803, %v805
      %v809 = vadd.f32 %v789, %v804
      %v810 = vadd.f32 %v790, %v806
      %v811 = vld [vmem:[#allocation2 + $0x20] sm:$0xfe]
      %v812 = vld [vmem:[#allocation2 + $0x28] sm:$0xfe]
      %v813 = vld [vmem:[#allocation2 + $0x38] sm:$0xff]
      %v814 = vld [vmem:[#allocation2 + $0x40] sm:$0xff]
      %v815 = vld [vmem:[#allocation2 + $0x50] sm:$0x1]
      %v816 = vld [vmem:[#allocation2 + $0x58] sm:$0x1]
      %v817 = vld [vmem:[%s6 + $0x8] sm:$0x1]
      %v818 = vlaneseq
      %v819 = vshrl.u32 %v818, 7
      %v820 = vsub.s32 0, %v819
      %v821 = vrot.slane %v817, %v820
      %823 = vrot.lane.b32.xlu0 %v821, 8
      %v824 = vpop.permute.xlu0 %823
      %v826 = vmul.f32 %v811, %v824
      %v827 = vmul.f32 %v812, %v824
      %v828 = vmul.f32 %v813, %v824
      %v829 = vmul.f32 %v814, %v824
      %v830 = vmul.f32 %v815, %v824
      %v831 = vmul.f32 %v816, %v824
      %v838 = vrot.slane %v826, 1
      %v839 = vrot.slane %v828, 1
      %v840 = vsel %vm766, %v838, %v839
      %v841 = vrot.slane %v827, 1
      %v842 = vrot.slane %v829, 1
      %v843 = vsel %vm766, %v841, %v842
      %v844 = vrot.slane %v830, 1
      %v845 = vsel %vm766, %v839, %v844
      %v846 = vrot.slane %v831, 1
      %v847 = vsel %vm766, %v842, %v846
      %848 = vrot.lane.b32.xlu0 %v840, 120
      %v849 = vpop.permute.xlu0 %848
      %850 = vrot.lane.b32.xlu0 %v843, 120
      %v851 = vpop.permute.xlu0 %850
      %852 = vrot.lane.b32.xlu0 %v845, 120
      %v853 = vpop.permute.xlu0 %852
      %854 = vrot.lane.b32.xlu0 %v847, 120
      %v855 = vpop.permute.xlu0 %854
      %v856 = vsel %vm670, %v849, %v851
      %v857 = vsel %vm670, %v853, %v855
      %v860 = vadd.f32 %v809, %v856
      %v861 = vadd.f32 %v810, %v857
      %v862 = vld [vmem:[%s5] sm:$0xff]
      %v863 = vld [vmem:[%s5 + $0x8] sm:$0xff]
      %v864 = vld [vmem:[%s5 + $0x10] sm:$0xff]
      %v865 = vld [vmem:[%s5 + $0x18] sm:$0xff]
      %v866 = vld [vmem:[%s5 + $0x20] sm:$0xff]
      %v867 = vld [vmem:[%s5 + $0x28] sm:$0xff]
      %v868 = vld [vmem:[%s5 + $0x30] sm:$0xff]
      %v869 = vld [vmem:[%s5 + $0x38] sm:$0xff]
      %v870 = vld [vmem:[%s5 + $0x40] sm:$0xff]
      %v871 = vld [vmem:[%s5 + $0x48] sm:$0xff]
      %v872 = vld [vmem:[%s5 + $0x50] sm:$0xff]
      %v873 = vld [vmem:[%s5 + $0x58] sm:$0xff]
      %v874 = vld [vmem:[%s5 + $0x60] sm:$0xff]
      %v875 = vld [vmem:[%s5 + $0x68] sm:$0xff]
      %v876 = vld [vmem:[%s5 + $0x70] sm:$0xff]
      %v877 = vld [vmem:[%s5 + $0x78] sm:$0xff]
      %s878 = scalar_lea.vmem %s4, 2
      %v879 = vld [vmem:[%s878] sm:$0x1]
      %v881 = vlaneseq
      %v882 = vshrl.u32 %v881, 7
      %v883 = vsub.s32 0, %v882
      %v884 = vrot.slane %v879, %v883
      %886 = vmatprep.subr.mxu0 0.0
      %887 = vmatpush1.msra.mxu0 %v862
      %888 = vmatprep.subr.mxu0 0.0
      %889 = vmatpush1.msra.mxu0 %v863
      %890 = vmatprep.subr.mxu0 0.0
      %891 = vmatpush1.msra.mxu0 %v864
      %892 = vmatprep.subr.mxu0 0.0
      %893 = vmatpush1.msra.mxu0 %v865
      %894 = vmatprep.subr.mxu0 0.0
      %895 = vmatpush1.msra.mxu0 %v866
      %896 = vmatprep.subr.mxu0 0.0
      %897 = vmatpush1.msra.mxu0 %v867
      %898 = vmatprep.subr.mxu0 0.0
      %899 = vmatpush1.msra.mxu0 %v868
      %900 = vmatprep.subr.mxu0 0.0
      %901 = vmatpush1.msra.mxu0 %v869
      %902 = vmatprep.subr.mxu0 0.0
      %903 = vmatpush1.msra.mxu0 %v870
      %904 = vmatprep.subr.mxu0 0.0
      %905 = vmatpush1.msra.mxu0 %v871
      %906 = vmatprep.subr.mxu0 0.0
      %907 = vmatpush1.msra.mxu0 %v872
      %908 = vmatprep.subr.mxu0 0.0
      %909 = vmatpush1.msra.mxu0 %v873
      %910 = vmatprep.subr.mxu0 0.0
      %911 = vmatpush1.msra.mxu0 %v874
      %912 = vmatprep.subr.mxu0 0.0
      %913 = vmatpush1.msra.mxu0 %v875
      %914 = vmatprep.subr.mxu0 0.0
      %915 = vmatpush1.msra.mxu0 %v876
      %916 = vmatprep.subr.mxu0 0.0
      %917 = vmatpush1.msra.mxu0 %v877
      %918 = vmatprep.subr.mxu0 0.0
      %919 = vmatpush1.msra.mxu0 0.0
      %920 = vmatprep.subr.mxu0 0.0
      %921 = vmatpush1.msra.mxu0 0.0
      %922 = vmatprep.subr.mxu0 0.0
      %923 = vmatpush1.msra.mxu0 0.0
      %924 = vmatprep.subr.mxu0 0.0
      %925 = vmatpush1.msra.mxu0 0.0
      %926 = vmatprep.subr.mxu0 0.0
      %927 = vmatpush1.msra.mxu0 0.0
      %928 = vmatprep.subr.mxu0 0.0
      %929 = vmatpush1.msra.mxu0 0.0
      %930 = vmatprep.subr.mxu0 0.0
      %931 = vmatpush1.msra.mxu0 0.0
      %932 = vmatprep.subr.mxu0 0.0
      %933 = vmatpush1.msra.mxu0 0.0
      %934 = vmatprep.subr.mxu0 0.0
      %935 = vmatpush1.msra.mxu0 0.0
      %936 = vmatprep.subr.mxu0 0.0
      %937 = vmatpush1.msra.mxu0 0.0
      %938 = vmatprep.subr.mxu0 0.0
      %939 = vmatpush1.msra.mxu0 0.0
      %940 = vmatprep.subr.mxu0 0.0
      %941 = vmatpush1.msra.mxu0 0.0
      %942 = vmatprep.subr.mxu0 0.0
      %943 = vmatpush1.msra.mxu0 0.0
      %944 = vmatprep.subr.mxu0 0.0
      %945 = vmatpush1.msra.mxu0 0.0
      %946 = vmatprep.subr.mxu0 0.0
      %947 = vmatpush1.msra.mxu0 0.0
      %948 = vmatprep.subr.mxu0 0.0
      %949 = vmatpush1.msra.mxu0 0.0
      %950 = vmatprep.mubr.f32.mxu0 0.0
      %951 = vmatmul.mubr.f32.gmra.mrb[0].mxu0 %v860
      %v952 = vpop.f32.mrb[0].mxu0
      %v953 = vadd.f32 %v884, %v952
      %v954 = vpop.f32.mrb[0].mxu0
      %955 = vmatprep.mubr.f32.mxu0 0.0
      %956 = vmatmul.mubr.f32.gmra.mrb[0].mxu0 %v861
      %v957 = vpop.f32.mrb[0].mxu0
      %v958 = vadd.f32 %v884, %v957
      %v959 = vpop.f32.mrb[0].mxu0
      %960 = vdwg.mxu0
      %v961 = vmax.f32 %v953, 0.0
      %v962 = vmax.f32 %v958, 0.0
      %963 = vst [vmem:[#allocation2 + $0x20] sm:$0xff] %v961
      %964 = vst [vmem:[#allocation2 + $0x38] sm:$0xff] %v962
      %v965 = vld [vmem:[#allocation2 + $0x20] sm:$0xff]
      %v966 = vld [vmem:[#allocation2 + $0x38] sm:$0xff]
      %s967 = scalar_lea.vmem %s6, 16
      %v968 = vld [vmem:[%s967 + $0x4] sm:$0x1]
      %v969 = vlaneseq
      %v970 = vshrl.u32 %v969, 7
      %v971 = vsub.s32 0, %v970
      %v972 = vrot.slane %v968, %v971
      %v973 = vmul.f32 %v965, %v972
      %v974 = vmul.f32 %v966, %v972
      %v975 = vld [vmem:[#allocation2] sm:$0x80]
      %v976 = vld [vmem:[#allocation2 + $0x8] sm:$0x80]
      %v977 = vld [vmem:[#allocation2 + $0x18] sm:$0xff]
      %v978 = vld [vmem:[#allocation2 + $0x30] sm:$0x7f]
      %v979 = vld [vmem:[#allocation2 + $0x38] sm:$0x7f]
      %v980 = vld [vmem:[%s967] sm:$0x1]
      %v981 = vlaneseq
      %v982 = vshrl.u32 %v981, 7
      %v983 = vsub.s32 0, %v982
      %v984 = vrot.slane %v980, %v983
      %986 = vrot.lane.b32.xlu0 %v984, 120
      %v987 = vpop.permute.xlu0 %986
      %v989 = vmul.f32 %v975, %v987
      %v990 = vmul.f32 %v976, %v987
      %v991 = vmul.f32 %v977, %v987
      %v992 = vmul.f32 %v965, %v987
      %v993 = vmul.f32 %v978, %v987
      %v994 = vmul.f32 %v979, %v987
      %v1001 = vrot.slane %v989, 7
      %v1002 = vrot.slane %v991, 7
      %v1003 = vsel %vm582, %v1001, %v1002
      %v1004 = vrot.slane %v990, 7
      %v1005 = vrot.slane %v992, 7
      %v1006 = vsel %vm582, %v1004, %v1005
      %v1007 = vrot.slane %v993, 7
      %v1008 = vsel %vm582, %v1002, %v1007
      %v1009 = vrot.slane %v994, 7
      %v1010 = vsel %vm582, %v1005, %v1009
      %1011 = vrot.lane.b32.xlu0 %v1003, 8
      %v1012 = vpop.permute.xlu0 %1011
      %1013 = vrot.lane.b32.xlu0 %v1006, 8
      %v1014 = vpop.permute.xlu0 %1013
      %1015 = vrot.lane.b32.xlu0 %v1008, 8
      %v1016 = vpop.permute.xlu0 %1015
      %1017 = vrot.lane.b32.xlu0 %v1010, 8
      %v1018 = vpop.permute.xlu0 %1017
      %v1019 = vsel %vm601, %v1012, %v1014
      %v1020 = vsel %vm601, %v1016, %v1018
      %v1023 = vadd.f32 %v973, %v1019
      %v1024 = vadd.f32 %v974, %v1020
      %v1025 = vld [vmem:[%s967 + $0x1] sm:$0x1]
      %v1026 = vlaneseq
      %v1027 = vshrl.u32 %v1026, 7
      %v1028 = vsub.s32 0, %v1027
      %v1029 = vrot.slane %v1025, %v1028
      %v1030 = vmul.f32 %v976, %v1029
      %v1031 = vmul.f32 %v965, %v1029
      %v1032 = vmul.f32 %v979, %v1029
      %v1036 = vrot.slane %v1030, 7
      %v1037 = vrot.slane %v1031, 7
      %v1038 = vsel %vm582, %v1036, %v1037
      %v1039 = vrot.slane %v1032, 7
      %v1040 = vsel %vm582, %v1037, %v1039
      %v1043 = vadd.f32 %v1023, %v1038
      %v1044 = vadd.f32 %v1024, %v1040
      %v1045 = vld [vmem:[#allocation2 + $0x10] sm:$0x80]
      %v1046 = vld [vmem:[#allocation2 + $0x28] sm:$0xff]
      %v1047 = vld [vmem:[#allocation2 + $0x40] sm:$0x7f]
      %v1048 = vld [vmem:[%s967 + $0x2] sm:$0x1]
      %v1049 = vlaneseq
      %v1050 = vshrl.u32 %v1049, 7
      %v1051 = vsub.s32 0, %v1050
      %v1052 = vrot.slane %v1048, %v1051
      %1054 = vrot.lane.b32.xlu0 %v1052, 8
      %v1055 = vpop.permute.xlu0 %1054
      %v1057 = vmul.f32 %v976, %v1055
      %v1058 = vmul.f32 %v1045, %v1055
      %v1059 = vmul.f32 %v965, %v1055
      %v1060 = vmul.f32 %v1046, %v1055
      %v1061 = vmul.f32 %v979, %v1055
      %v1062 = vmul.f32 %v1047, %v1055
      %v1069 = vrot.slane %v1057, 7
      %v1070 = vrot.slane %v1059, 7
      %v1071 = vsel %vm582, %v1069, %v1070
      %v1072 = vrot.slane %v1058, 7
      %v1073 = vrot.slane %v1060, 7
      %v1074 = vsel %vm582, %v1072, %v1073
      %v1075 = vrot.slane %v1061, 7
      %v1076 = vsel %vm582, %v1070, %v1075
      %v1077 = vrot.slane %v1062, 7
      %v1078 = vsel %vm582, %v1073, %v1077
      %1079 = vrot.lane.b32.xlu0 %v1071, 120
      %v1080 = vpop.permute.xlu0 %1079
      %1081 = vrot.lane.b32.xlu0 %v1074, 120
      %v1082 = vpop.permute.xlu0 %1081
      %1083 = vrot.lane.b32.xlu0 %v1076, 120
      %v1084 = vpop.permute.xlu0 %1083
      %1085 = vrot.lane.b32.xlu0 %v1078, 120
      %v1086 = vpop.permute.xlu0 %1085
      %v1087 = vsel %vm670, %v1080, %v1082
      %v1088 = vsel %vm670, %v1084, %v1086
      %v1091 = vadd.f32 %v1043, %v1087
      %v1092 = vadd.f32 %v1044, %v1088
      %v1093 = vld [vmem:[#allocation2 + $0x30] sm:$0xff]
      %v1094 = vld [vmem:[%s967 + $0x3] sm:$0x1]
      %v1095 = vlaneseq
      %v1096 = vshrl.u32 %v1095, 7
      %v1097 = vsub.s32 0, %v1096
      %v1098 = vrot.slane %v1094, %v1097
      %1100 = vrot.lane.b32.xlu0 %v1098, 120
      %v1101 = vpop.permute.xlu0 %1100
      %v1103 = vmul.f32 %v977, %v1101
      %v1104 = vmul.f32 %v965, %v1101
      %v1105 = vmul.f32 %v1093, %v1101
      %v1106 = vmul.f32 %v966, %v1101
      %1111 = vrot.lane.b32.xlu0 %v1103, 8
      %v1112 = vpop.permute.xlu0 %1111
      %1113 = vrot.lane.b32.xlu0 %v1104, 8
      %v1114 = vpop.permute.xlu0 %1113
      %1115 = vrot.lane.b32.xlu0 %v1105, 8
      %v1116 = vpop.permute.xlu0 %1115
      %1117 = vrot.lane.b32.xlu0 %v1106, 8
      %v1118 = vpop.permute.xlu0 %1117
      %v1119 = vsel %vm601, %v1112, %v1114
      %v1120 = vsel %vm601, %v1116, %v1118
      %v1123 = vadd.f32 %v1091, %v1119
      %v1124 = vadd.f32 %v1092, %v1120
      %v1125 = vld [vmem:[#allocation2 + $0x40] sm:$0xff]
      %v1126 = vld [vmem:[%s967 + $0x5] sm:$0x1]
      %v1127 = vlaneseq
      %v1128 = vshrl.u32 %v1127, 7
      %v1129 = vsub.s32 0, %v1128
      %v1130 = vrot.slane %v1126, %v1129
      %1132 = vrot.lane.b32.xlu0 %v1130, 8
      %v1133 = vpop.permute.xlu0 %1132
      %v1135 = vmul.f32 %v965, %v1133
      %v1136 = vmul.f32 %v1046, %v1133
      %v1137 = vmul.f32 %v966, %v1133
      %v1138 = vmul.f32 %v1125, %v1133
      %1143 = vrot.lane.b32.xlu0 %v1135, 120
      %v1144 = vpop.permute.xlu0 %1143
      %1145 = vrot.lane.b32.xlu0 %v1136, 120
      %v1146 = vpop.permute.xlu0 %1145
      %1147 = vrot.lane.b32.xlu0 %v1137, 120
      %v1148 = vpop.permute.xlu0 %1147
      %1149 = vrot.lane.b32.xlu0 %v1138, 120
      %v1150 = vpop.permute.xlu0 %1149
      %v1151 = vsel %vm670, %v1144, %v1146
      %v1152 = vsel %vm670, %v1148, %v1150
      %v1155 = vadd.f32 %v1123, %v1151
      %v1156 = vadd.f32 %v1124, %v1152
      %v1157 = vld [vmem:[#allocation2 + $0x18] sm:$0xfe]
      %v1158 = vld [vmem:[#allocation2 + $0x20] sm:$0xfe]
      %v1159 = vld [vmem:[#allocation2 + $0x48] sm:$0x1]
      %v1160 = vld [vmem:[#allocation2 + $0x50] sm:$0x1]
      %v1161 = vld [vmem:[%s967 + $0x6] sm:$0x1]
      %v1162 = vlaneseq
      %v1163 = vshrl.u32 %v1162, 7
      %v1164 = vsub.s32 0, %v1163
      %v1165 = vrot.slane %v1161, %v1164
      %1167 = vrot.lane.b32.xlu0 %v1165, 120
      %v1168 = vpop.permute.xlu0 %1167
      %v1170 = vmul.f32 %v1157, %v1168
      %v1171 = vmul.f32 %v1158, %v1168
      %v1172 = vmul.f32 %v1093, %v1168
      %v1173 = vmul.f32 %v966, %v1168
      %v1174 = vmul.f32 %v1159, %v1168
      %v1175 = vmul.f32 %v1160, %v1168
      %v1182 = vrot.slane %v1170, 1
      %v1183 = vrot.slane %v1172, 1
      %v1184 = vsel %vm766, %v1182, %v1183
      %v1185 = vrot.slane %v1171, 1
      %v1186 = vrot.slane %v1173, 1
      %v1187 = vsel %vm766, %v1185, %v1186
      %v1188 = vrot.slane %v1174, 1
      %v1189 = vsel %vm766, %v1183, %v1188
      %v1190 = vrot.slane %v1175, 1
      %v1191 = vsel %vm766, %v1186, %v1190
      %1192 = vrot.lane.b32.xlu0 %v1184, 8
      %v1193 = vpop.permute.xlu0 %1192
      %1194 = vrot.lane.b32.xlu0 %v1187, 8
      %v1195 = vpop.permute.xlu0 %1194
      %1196 = vrot.lane.b32.xlu0 %v1189, 8
      %v1197 = vpop.permute.xlu0 %1196
      %1198 = vrot.lane.b32.xlu0 %v1191, 8
      %v1199 = vpop.permute.xlu0 %1198
      %v1200 = vsel %vm601, %v1193, %v1195
      %v1201 = vsel %vm601, %v1197, %v1199
      %v1204 = vadd.f32 %v1155, %v1200
      %v1205 = vadd.f32 %v1156, %v1201
      %v1206 = vld [vmem:[%s967 + $0x7] sm:$0x1]
      %v1207 = vlaneseq
      %v1208 = vshrl.u32 %v1207, 7
      %v1209 = vsub.s32 0, %v1208
      %v1210 = vrot.slane %v1206, %v1209
      %v1211 = vmul.f32 %v1158, %v1210
      %v1212 = vmul.f32 %v966, %v1210
      %v1213 = vmul.f32 %v1160, %v1210
      %v1217 = vrot.slane %v1211, 1
      %v1218 = vrot.slane %v1212, 1
      %v1219 = vsel %vm766, %v1217, %v1218
      %v1220 = vrot.slane %v1213, 1
      %v1221 = vsel %vm766, %v1218, %v1220
      %v1224 = vadd.f32 %v1204, %v1219
      %v1225 = vadd.f32 %v1205, %v1221
      %v1226 = vld [vmem:[#allocation2 + $0x20] sm:$0xfe]
      %v1227 = vld [vmem:[#allocation2 + $0x28] sm:$0xfe]
      %v1228 = vld [vmem:[#allocation2 + $0x38] sm:$0xff]
      %v1229 = vld [vmem:[#allocation2 + $0x40] sm:$0xff]
      %v1230 = vld [vmem:[#allocation2 + $0x50] sm:$0x1]
      %v1231 = vld [vmem:[#allocation2 + $0x58] sm:$0x1]
      %v1232 = vld [vmem:[%s967 + $0x8] sm:$0x1]
      %v1233 = vlaneseq
      %v1234 = vshrl.u32 %v1233, 7
      %v1235 = vsub.s32 0, %v1234
      %v1236 = vrot.slane %v1232, %v1235
      %1238 = vrot.lane.b32.xlu0 %v1236, 8
      %v1239 = vpop.permute.xlu0 %1238
      %v1241 = vmul.f32 %v1226, %v1239
      %v1242 = vmul.f32 %v1227, %v1239
      %v1243 = vmul.f32 %v1228, %v1239
      %v1244 = vmul.f32 %v1229, %v1239
      %v1245 = vmul.f32 %v1230, %v1239
      %v1246 = vmul.f32 %v1231, %v1239
      %v1253 = vrot.slane %v1241, 1
      %v1254 = vrot.slane %v1243, 1
      %v1255 = vsel %vm766, %v1253, %v1254
      %v1256 = vrot.slane %v1242, 1
      %v1257 = vrot.slane %v1244, 1
      %v1258 = vsel %vm766, %v1256, %v1257
      %v1259 = vrot.slane %v1245, 1
      %v1260 = vsel %vm766, %v1254, %v1259
      %v1261 = vrot.slane %v1246, 1
      %v1262 = vsel %vm766, %v1257, %v1261
      %1263 = vrot.lane.b32.xlu0 %v1255, 120
      %v1264 = vpop.permute.xlu0 %1263
      %1265 = vrot.lane.b32.xlu0 %v1258, 120
      %v1266 = vpop.permute.xlu0 %1265
      %1267 = vrot.lane.b32.xlu0 %v1260, 120
      %v1268 = vpop.permute.xlu0 %1267
      %1269 = vrot.lane.b32.xlu0 %v1262, 120
      %v1270 = vpop.permute.xlu0 %1269
      %v1271 = vsel %vm670, %v1264, %v1266
      %v1272 = vsel %vm670, %v1268, %v1270
      %v1275 = vadd.f32 %v1224, %v1271
      %v1276 = vadd.f32 %v1225, %v1272
      %s1277 = scalar_lea.vmem %s5, 128
      %v1278 = vld [vmem:[%s1277] sm:$0xff]
      %v1279 = vld [vmem:[%s1277 + $0x8] sm:$0xff]
      %v1280 = vld [vmem:[%s1277 + $0x10] sm:$0xff]
      %v1281 = vld [vmem:[%s1277 + $0x18] sm:$0xff]
      %v1282 = vld [vmem:[%s1277 + $0x20] sm:$0xff]
      %v1283 = vld [vmem:[%s1277 + $0x28] sm:$0xff]
      %v1284 = vld [vmem:[%s1277 + $0x30] sm:$0xff]
      %v1285 = vld [vmem:[%s1277 + $0x38] sm:$0xff]
      %v1286 = vld [vmem:[%s1277 + $0x40] sm:$0xff]
      %v1287 = vld [vmem:[%s1277 + $0x48] sm:$0xff]
      %v1288 = vld [vmem:[%s1277 + $0x50] sm:$0xff]
      %v1289 = vld [vmem:[%s1277 + $0x58] sm:$0xff]
      %v1290 = vld [vmem:[%s1277 + $0x60] sm:$0xff]
      %v1291 = vld [vmem:[%s1277 + $0x68] sm:$0xff]
      %v1292 = vld [vmem:[%s1277 + $0x70] sm:$0xff]
      %v1293 = vld [vmem:[%s1277 + $0x78] sm:$0xff]
      %s1294 = scalar_lea.vmem %s4, 3
      %v1295 = vld [vmem:[%s1294] sm:$0x1]
      %v1297 = vlaneseq
      %v1298 = vshrl.u32 %v1297, 7
      %v1299 = vsub.s32 0, %v1298
      %v1300 = vrot.slane %v1295, %v1299
      %1302 = vmatprep.subr.mxu0 0.0
      %1303 = vmatpush1.msra.mxu0 %v1278
      %1304 = vmatprep.subr.mxu0 0.0
      %1305 = vmatpush1.msra.mxu0 %v1279
      %1306 = vmatprep.subr.mxu0 0.0
      %1307 = vmatpush1.msra.mxu0 %v1280
      %1308 = vmatprep.subr.mxu0 0.0
      %1309 = vmatpush1.msra.mxu0 %v1281
      %1310 = vmatprep.subr.mxu0 0.0
      %1311 = vmatpush1.msra.mxu0 %v1282
      %1312 = vmatprep.subr.mxu0 0.0
      %1313 = vmatpush1.msra.mxu0 %v1283
      %1314 = vmatprep.subr.mxu0 0.0
      %1315 = vmatpush1.msra.mxu0 %v1284
      %1316 = vmatprep.subr.mxu0 0.0
      %1317 = vmatpush1.msra.mxu0 %v1285
      %1318 = vmatprep.subr.mxu0 0.0
      %1319 = vmatpush1.msra.mxu0 %v1286
      %1320 = vmatprep.subr.mxu0 0.0
      %1321 = vmatpush1.msra.mxu0 %v1287
      %1322 = vmatprep.subr.mxu0 0.0
      %1323 = vmatpush1.msra.mxu0 %v1288
      %1324 = vmatprep.subr.mxu0 0.0
      %1325 = vmatpush1.msra.mxu0 %v1289
      %1326 = vmatprep.subr.mxu0 0.0
      %1327 = vmatpush1.msra.mxu0 %v1290
      %1328 = vmatprep.subr.mxu0 0.0
      %1329 = vmatpush1.msra.mxu0 %v1291
      %1330 = vmatprep.subr.mxu0 0.0
      %1331 = vmatpush1.msra.mxu0 %v1292
      %1332 = vmatprep.subr.mxu0 0.0
      %1333 = vmatpush1.msra.mxu0 %v1293
      %1334 = vmatprep.subr.mxu0 0.0
      %1335 = vmatpush1.msra.mxu0 0.0
      %1336 = vmatprep.subr.mxu0 0.0
      %1337 = vmatpush1.msra.mxu0 0.0
      %1338 = vmatprep.subr.mxu0 0.0
      %1339 = vmatpush1.msra.mxu0 0.0
      %1340 = vmatprep.subr.mxu0 0.0
      %1341 = vmatpush1.msra.mxu0 0.0
      %1342 = vmatprep.subr.mxu0 0.0
      %1343 = vmatpush1.msra.mxu0 0.0
      %1344 = vmatprep.subr.mxu0 0.0
      %1345 = vmatpush1.msra.mxu0 0.0
      %1346 = vmatprep.subr.mxu0 0.0
      %1347 = vmatpush1.msra.mxu0 0.0
      %1348 = vmatprep.subr.mxu0 0.0
      %1349 = vmatpush1.msra.mxu0 0.0
      %1350 = vmatprep.subr.mxu0 0.0
      %1351 = vmatpush1.msra.mxu0 0.0
      %1352 = vmatprep.subr.mxu0 0.0
      %1353 = vmatpush1.msra.mxu0 0.0
      %1354 = vmatprep.subr.mxu0 0.0
      %1355 = vmatpush1.msra.mxu0 0.0
      %1356 = vmatprep.subr.mxu0 0.0
      %1357 = vmatpush1.msra.mxu0 0.0
      %1358 = vmatprep.subr.mxu0 0.0
      %1359 = vmatpush1.msra.mxu0 0.0
      %1360 = vmatprep.subr.mxu0 0.0
      %1361 = vmatpush1.msra.mxu0 0.0
      %1362 = vmatprep.subr.mxu0 0.0
      %1363 = vmatpush1.msra.mxu0 0.0
      %1364 = vmatprep.subr.mxu0 0.0
      %1365 = vmatpush1.msra.mxu0 0.0
      %1366 = vmatprep.mubr.f32.mxu0 0.0
      %1367 = vmatmul.mubr.f32.gmra.mrb[0].mxu0 %v1275
      %v1368 = vpop.f32.mrb[0].mxu0
      %v1369 = vadd.f32 %v1300, %v1368
      %v1370 = vpop.f32.mrb[0].mxu0
      %1371 = vmatprep.mubr.f32.mxu0 0.0
      %1372 = vmatmul.mubr.f32.gmra.mrb[0].mxu0 %v1276
      %v1373 = vpop.f32.mrb[0].mxu0
      %v1374 = vadd.f32 %v1300, %v1373
      %v1375 = vpop.f32.mrb[0].mxu0
      %1376 = vdwg.mxu0
      %v1377 = vadd.f32 %v1369, %v523
      %v1378 = vadd.f32 %v1374, %v528
      %v1379 = vmax.f32 %v1377, 0.0
      %v1380 = vmax.f32 %v1378, 0.0
      %1381 = vst [vmem:[#allocation2 + $0x20] sm:$0xff] %v1379
      %1382 = vst [vmem:[#allocation2 + $0x38] sm:$0xff] %v1380
      %v1383 = vld [vmem:[#allocation2 + $0x20] sm:$0xff]
      %v1384 = vld [vmem:[#allocation2 + $0x38] sm:$0xff]
      %s1385 = scalar_lea.vmem %s6, 32
      %v1386 = vld [vmem:[%s1385 + $0x4] sm:$0x1]
      %v1387 = vlaneseq
      %v1388 = vshrl.u32 %v1387, 7
      %v1389 = vsub.s32 0, %v1388
      %v1390 = vrot.slane %v1386, %v1389
      %v1391 = vmul.f32 %v1383, %v1390
      %v1392 = vmul.f32 %v1384, %v1390
      %v1393 = vld [vmem:[#allocation2] sm:$0xc0]
      %v1394 = vld [vmem:[#allocation2 + $0x8] sm:$0xc0]
      %v1395 = vld [vmem:[#allocation2 + $0x18] sm:$0xff]
      %v1396 = vld [vmem:[#allocation2 + $0x30] sm:$0x3f]
      %v1397 = vld [vmem:[#allocation2 + $0x38] sm:$0x3f]
      %v1398 = vld [vmem:[%s1385] sm:$0x1]
      %v1399 = vlaneseq
      %v1400 = vshrl.u32 %v1399, 7
      %v1401 = vsub.s32 0, %v1400
      %v1402 = vrot.slane %v1398, %v1401
      %1404 = vrot.lane.b32.xlu0 %v1402, 112
      %v1405 = vpop.permute.xlu0 %1404
      %v1407 = vmul.f32 %v1393, %v1405
      %v1408 = vmul.f32 %v1394, %v1405
      %v1409 = vmul.f32 %v1395, %v1405
      %v1410 = vmul.f32 %v1383, %v1405
      %v1411 = vmul.f32 %v1396, %v1405
      %v1412 = vmul.f32 %v1397, %v1405
      %vm1419 = vcmask 1041408
      %v1420 = vrot.slane %v1407, 6
      %v1421 = vrot.slane %v1409, 6
      %v1422 = vsel %vm1419, %v1420, %v1421
      %v1423 = vrot.slane %v1408, 6
      %v1424 = vrot.slane %v1410, 6
      %v1425 = vsel %vm1419, %v1423, %v1424
      %v1426 = vrot.slane %v1411, 6
      %v1427 = vsel %vm1419, %v1421, %v1426
      %v1428 = vrot.slane %v1412, 6
      %v1429 = vsel %vm1419, %v1424, %v1428
      %1430 = vrot.lane.b32.xlu0 %v1422, 16
      %v1431 = vpop.permute.xlu0 %1430
      %1432 = vrot.lane.b32.xlu0 %v1425, 16
      %v1433 = vpop.permute.xlu0 %1432
      %1434 = vrot.lane.b32.xlu0 %v1427, 16
      %v1435 = vpop.permute.xlu0 %1434
      %1436 = vrot.lane.b32.xlu0 %v1429, 16
      %v1437 = vpop.permute.xlu0 %1436
      %vm1438 = vcmask 130048
      %v1439 = vsel %vm1438, %v1431, %v1433
      %v1440 = vsel %vm1438, %v1435, %v1437
      %v1443 = vadd.f32 %v1391, %v1439
      %v1444 = vadd.f32 %v1392, %v1440
      %v1445 = vld [vmem:[%s1385 + $0x1] sm:$0x1]
      %v1446 = vlaneseq
      %v1447 = vshrl.u32 %v1446, 7
      %v1448 = vsub.s32 0, %v1447
      %v1449 = vrot.slane %v1445, %v1448
      %v1450 = vmul.f32 %v1394, %v1449
      %v1451 = vmul.f32 %v1383, %v1449
      %v1452 = vmul.f32 %v1397, %v1449
      %v1456 = vrot.slane %v1450, 6
      %v1457 = vrot.slane %v1451, 6
      %v1458 = vsel %vm1419, %v1456, %v1457
      %v1459 = vrot.slane %v1452, 6
      %v1460 = vsel %vm1419, %v1457, %v1459
      %v1463 = vadd.f32 %v1443, %v1458
      %v1464 = vadd.f32 %v1444, %v1460
      %v1465 = vld [vmem:[#allocation2 + $0x10] sm:$0xc0]
      %v1466 = vld [vmem:[#allocation2 + $0x28] sm:$0xff]
      %v1467 = vld [vmem:[#allocation2 + $0x40] sm:$0x3f]
      %v1468 = vld [vmem:[%s1385 + $0x2] sm:$0x1]
      %v1469 = vlaneseq
      %v1470 = vshrl.u32 %v1469, 7
      %v1471 = vsub.s32 0, %v1470
      %v1472 = vrot.slane %v1468, %v1471
      %1474 = vrot.lane.b32.xlu0 %v1472, 16
      %v1475 = vpop.permute.xlu0 %1474
      %v1477 = vmul.f32 %v1394, %v1475
      %v1478 = vmul.f32 %v1465, %v1475
      %v1479 = vmul.f32 %v1383, %v1475
      %v1480 = vmul.f32 %v1466, %v1475
      %v1481 = vmul.f32 %v1397, %v1475
      %v1482 = vmul.f32 %v1467, %v1475
      %v1489 = vrot.slane %v1477, 6
      %v1490 = vrot.slane %v1479, 6
      %v1491 = vsel %vm1419, %v1489, %v1490
      %v1492 = vrot.slane %v1478, 6
      %v1493 = vrot.slane %v1480, 6
      %v1494 = vsel %vm1419, %v1492, %v1493
      %v1495 = vrot.slane %v1481, 6
      %v1496 = vsel %vm1419, %v1490, %v1495
      %v1497 = vrot.slane %v1482, 6
      %v1498 = vsel %vm1419, %v1493, %v1497
      %1499 = vrot.lane.b32.xlu0 %v1491, 112
      %v1500 = vpop.permute.xlu0 %1499
      %1501 = vrot.lane.b32.xlu0 %v1494, 112
      %v1502 = vpop.permute.xlu0 %1501
      %1503 = vrot.lane.b32.xlu0 %v1496, 112
      %v1504 = vpop.permute.xlu0 %1503
      %1505 = vrot.lane.b32.xlu0 %v1498, 112
      %v1506 = vpop.permute.xlu0 %1505
      %vm1507 = vcmask 916480
      %v1508 = vsel %vm1507, %v1500, %v1502
      %v1509 = vsel %vm1507, %v1504, %v1506
      %v1512 = vadd.f32 %v1463, %v1508
      %v1513 = vadd.f32 %v1464, %v1509
      %v1514 = vld [vmem:[#allocation2 + $0x30] sm:$0xff]
      %v1515 = vld [vmem:[%s1385 + $0x3] sm:$0x1]
      %v1516 = vlaneseq
      %v1517 = vshrl.u32 %v1516, 7
      %v1518 = vsub.s32 0, %v1517
      %v1519 = vrot.slane %v1515, %v1518
      %1521 = vrot.lane.b32.xlu0 %v1519, 112
      %v1522 = vpop.permute.xlu0 %1521
      %v1524 = vmul.f32 %v1395, %v1522
      %v1525 = vmul.f32 %v1383, %v1522
      %v1526 = vmul.f32 %v1514, %v1522
      %v1527 = vmul.f32 %v1384, %v1522
      %1532 = vrot.lane.b32.xlu0 %v1524, 16
      %v1533 = vpop.permute.xlu0 %1532
      %1534 = vrot.lane.b32.xlu0 %v1525, 16
      %v1535 = vpop.permute.xlu0 %1534
      %1536 = vrot.lane.b32.xlu0 %v1526, 16
      %v1537 = vpop.permute.xlu0 %1536
      %1538 = vrot.lane.b32.xlu0 %v1527, 16
      %v1539 = vpop.permute.xlu0 %1538
      %v1540 = vsel %vm1438, %v1533, %v1535
      %v1541 = vsel %vm1438, %v1537, %v1539
      %v1544 = vadd.f32 %v1512, %v1540
      %v1545 = vadd.f32 %v1513, %v1541
      %v1546 = vld [vmem:[#allocation2 + $0x40] sm:$0xff]
      %v1547 = vld [vmem:[%s1385 + $0x5] sm:$0x1]
      %v1548 = vlaneseq
      %v1549 = vshrl.u32 %v1548, 7
      %v1550 = vsub.s32 0, %v1549
      %v1551 = vrot.slane %v1547, %v1550
      %1553 = vrot.lane.b32.xlu0 %v1551, 16
      %v1554 = vpop.permute.xlu0 %1553
      %v1556 = vmul.f32 %v1383, %v1554
      %v1557 = vmul.f32 %v1466, %v1554
      %v1558 = vmul.f32 %v1384, %v1554
      %v1559 = vmul.f32 %v1546, %v1554
      %1564 = vrot.lane.b32.xlu0 %v1556, 112
      %v1565 = vpop.permute.xlu0 %1564
      %1566 = vrot.lane.b32.xlu0 %v1557, 112
      %v1567 = vpop.permute.xlu0 %1566
      %1568 = vrot.lane.b32.xlu0 %v1558, 112
      %v1569 = vpop.permute.xlu0 %1568
      %1570 = vrot.lane.b32.xlu0 %v1559, 112
      %v1571 = vpop.permute.xlu0 %1570
      %v1572 = vsel %vm1507, %v1565, %v1567
      %v1573 = vsel %vm1507, %v1569, %v1571
      %v1576 = vadd.f32 %v1544, %v1572
      %v1577 = vadd.f32 %v1545, %v1573
      %v1578 = vld [vmem:[#allocation2 + $0x18] sm:$0xfc]
      %v1579 = vld [vmem:[#allocation2 + $0x20] sm:$0xfc]
      %v1580 = vld [vmem:[#allocation2 + $0x48] sm:$0x3]
      %v1581 = vld [vmem:[#allocation2 + $0x50] sm:$0x3]
      %v1582 = vld [vmem:[%s1385 + $0x6] sm:$0x1]
      %v1583 = vlaneseq
      %v1584 = vshrl.u32 %v1583, 7
      %v1585 = vsub.s32 0, %v1584
      %v1586 = vrot.slane %v1582, %v1585
      %1588 = vrot.lane.b32.xlu0 %v1586, 112
      %v1589 = vpop.permute.xlu0 %1588
      %v1591 = vmul.f32 %v1578, %v1589
      %v1592 = vmul.f32 %v1579, %v1589
      %v1593 = vmul.f32 %v1514, %v1589
      %v1594 = vmul.f32 %v1384, %v1589
      %v1595 = vmul.f32 %v1580, %v1589
      %v1596 = vmul.f32 %v1581, %v1589
      %vm1603 = vcmask 1045504
      %v1604 = vrot.slane %v1591, 2
      %v1605 = vrot.slane %v1593, 2
      %v1606 = vsel %vm1603, %v1604, %v1605
      %v1607 = vrot.slane %v1592, 2
      %v1608 = vrot.slane %v1594, 2
      %v1609 = vsel %vm1603, %v1607, %v1608
      %v1610 = vrot.slane %v1595, 2
      %v1611 = vsel %vm1603, %v1605, %v1610
      %v1612 = vrot.slane %v1596, 2
      %v1613 = vsel %vm1603, %v1608, %v1612
      %1614 = vrot.lane.b32.xlu0 %v1606, 16
      %v1615 = vpop.permute.xlu0 %1614
      %1616 = vrot.lane.b32.xlu0 %v1609, 16
      %v1617 = vpop.permute.xlu0 %1616
      %1618 = vrot.lane.b32.xlu0 %v1611, 16
      %v1619 = vpop.permute.xlu0 %1618
      %1620 = vrot.lane.b32.xlu0 %v1613, 16
      %v1621 = vpop.permute.xlu0 %1620
      %v1622 = vsel %vm1438, %v1615, %v1617
      %v1623 = vsel %vm1438, %v1619, %v1621
      %v1626 = vadd.f32 %v1576, %v1622
      %v1627 = vadd.f32 %v1577, %v1623
      %v1628 = vld [vmem:[%s1385 + $0x7] sm:$0x1]
      %v1629 = vlaneseq
      %v1630 = vshrl.u32 %v1629, 7
      %v1631 = vsub.s32 0, %v1630
      %v1632 = vrot.slane %v1628, %v1631
      %v1633 = vmul.f32 %v1579, %v1632
      %v1634 = vmul.f32 %v1384, %v1632
      %v1635 = vmul.f32 %v1581, %v1632
      %v1639 = vrot.slane %v1633, 2
      %v1640 = vrot.slane %v1634, 2
      %v1641 = vsel %vm1603, %v1639, %v1640
      %v1642 = vrot.slane %v1635, 2
      %v1643 = vsel %vm1603, %v1640, %v1642
      %v1646 = vadd.f32 %v1626, %v1641
      %v1647 = vadd.f32 %v1627, %v1643
      %v1648 = vld [vmem:[#allocation2 + $0x20] sm:$0xfc]
      %v1649 = vld [vmem:[#allocation2 + $0x28] sm:$0xfc]
      %v1650 = vld [vmem:[#allocation2 + $0x38] sm:$0xff]
      %v1651 = vld [vmem:[#allocation2 + $0x40] sm:$0xff]
      %v1652 = vld [vmem:[#allocation2 + $0x50] sm:$0x3]
      %v1653 = vld [vmem:[#allocation2 + $0x58] sm:$0x3]
      %v1654 = vld [vmem:[%s1385 + $0x8] sm:$0x1]
      %v1655 = vlaneseq
      %v1656 = vshrl.u32 %v1655, 7
      %v1657 = vsub.s32 0, %v1656
      %v1658 = vrot.slane %v1654, %v1657
      %1660 = vrot.lane.b32.xlu0 %v1658, 16
      %v1661 = vpop.permute.xlu0 %1660
      %v1663 = vmul.f32 %v1648, %v1661
      %v1664 = vmul.f32 %v1649, %v1661
      %v1665 = vmul.f32 %v1650, %v1661
      %v1666 = vmul.f32 %v1651, %v1661
      %v1667 = vmul.f32 %v1652, %v1661
      %v1668 = vmul.f32 %v1653, %v1661
      %v1675 = vrot.slane %v1663, 2
      %v1676 = vrot.slane %v1665, 2
      %v1677 = vsel %vm1603, %v1675, %v1676
      %v1678 = vrot.slane %v1664, 2
      %v1679 = vrot.slane %v1666, 2
      %v1680 = vsel %vm1603, %v1678, %v1679
      %v1681 = vrot.slane %v1667, 2
      %v1682 = vsel %vm1603, %v1676, %v1681
      %v1683 = vrot.slane %v1668, 2
      %v1684 = vsel %vm1603, %v1679, %v1683
      %1685 = vrot.lane.b32.xlu0 %v1677, 112
      %v1686 = vpop.permute.xlu0 %1685
      %1687 = vrot.lane.b32.xlu0 %v1680, 112
      %v1688 = vpop.permute.xlu0 %1687
      %1689 = vrot.lane.b32.xlu0 %v1682, 112
      %v1690 = vpop.permute.xlu0 %1689
      %1691 = vrot.lane.b32.xlu0 %v1684, 112
      %v1692 = vpop.permute.xlu0 %1691
      %v1693 = vsel %vm1507, %v1686, %v1688
      %v1694 = vsel %vm1507, %v1690, %v1692
      %v1697 = vadd.f32 %v1646, %v1693
      %v1698 = vadd.f32 %v1647, %v1694
      %s1699 = scalar_lea.vmem %s5, 256
      %v1700 = vld [vmem:[%s1699] sm:$0xff]
      %v1701 = vld [vmem:[%s1699 + $0x8] sm:$0xff]
      %v1702 = vld [vmem:[%s1699 + $0x10] sm:$0xff]
      %v1703 = vld [vmem:[%s1699 + $0x18] sm:$0xff]
      %v1704 = vld [vmem:[%s1699 + $0x20] sm:$0xff]
      %v1705 = vld [vmem:[%s1699 + $0x28] sm:$0xff]
      %v1706 = vld [vmem:[%s1699 + $0x30] sm:$0xff]
      %v1707 = vld [vmem:[%s1699 + $0x38] sm:$0xff]
      %v1708 = vld [vmem:[%s1699 + $0x40] sm:$0xff]
      %v1709 = vld [vmem:[%s1699 + $0x48] sm:$0xff]
      %v1710 = vld [vmem:[%s1699 + $0x50] sm:$0xff]
      %v1711 = vld [vmem:[%s1699 + $0x58] sm:$0xff]
      %v1712 = vld [vmem:[%s1699 + $0x60] sm:$0xff]
      %v1713 = vld [vmem:[%s1699 + $0x68] sm:$0xff]
      %v1714 = vld [vmem:[%s1699 + $0x70] sm:$0xff]
      %v1715 = vld [vmem:[%s1699 + $0x78] sm:$0xff]
      %s1716 = scalar_lea.vmem %s4, 4
      %v1717 = vld [vmem:[%s1716] sm:$0x1]
      %v1719 = vlaneseq
      %v1720 = vshrl.u32 %v1719, 7
      %v1721 = vsub.s32 0, %v1720
      %v1722 = vrot.slane %v1717, %v1721
      %1724 = vmatprep.subr.mxu0 0.0
      %1725 = vmatpush1.msra.mxu0 %v1700
      %1726 = vmatprep.subr.mxu0 0.0
      %1727 = vmatpush1.msra.mxu0 %v1701
      %1728 = vmatprep.subr.mxu0 0.0
      %1729 = vmatpush1.msra.mxu0 %v1702
      %1730 = vmatprep.subr.mxu0 0.0
      %1731 = vmatpush1.msra.mxu0 %v1703
      %1732 = vmatprep.subr.mxu0 0.0
      %1733 = vmatpush1.msra.mxu0 %v1704
      %1734 = vmatprep.subr.mxu0 0.0
      %1735 = vmatpush1.msra.mxu0 %v1705
      %1736 = vmatprep.subr.mxu0 0.0
      %1737 = vmatpush1.msra.mxu0 %v1706
      %1738 = vmatprep.subr.mxu0 0.0
      %1739 = vmatpush1.msra.mxu0 %v1707
      %1740 = vmatprep.subr.mxu0 0.0
      %1741 = vmatpush1.msra.mxu0 %v1708
      %1742 = vmatprep.subr.mxu0 0.0
      %1743 = vmatpush1.msra.mxu0 %v1709
      %1744 = vmatprep.subr.mxu0 0.0
      %1745 = vmatpush1.msra.mxu0 %v1710
      %1746 = vmatprep.subr.mxu0 0.0
      %1747 = vmatpush1.msra.mxu0 %v1711
      %1748 = vmatprep.subr.mxu0 0.0
      %1749 = vmatpush1.msra.mxu0 %v1712
      %1750 = vmatprep.subr.mxu0 0.0
      %1751 = vmatpush1.msra.mxu0 %v1713
      %1752 = vmatprep.subr.mxu0 0.0
      %1753 = vmatpush1.msra.mxu0 %v1714
      %1754 = vmatprep.subr.mxu0 0.0
      %1755 = vmatpush1.msra.mxu0 %v1715
      %1756 = vmatprep.subr.mxu0 0.0
      %1757 = vmatpush1.msra.mxu0 0.0
      %1758 = vmatprep.subr.mxu0 0.0
      %1759 = vmatpush1.msra.mxu0 0.0
      %1760 = vmatprep.subr.mxu0 0.0
      %1761 = vmatpush1.msra.mxu0 0.0
      %1762 = vmatprep.subr.mxu0 0.0
      %1763 = vmatpush1.msra.mxu0 0.0
      %1764 = vmatprep.subr.mxu0 0.0
      %1765 = vmatpush1.msra.mxu0 0.0
      %1766 = vmatprep.subr.mxu0 0.0
      %1767 = vmatpush1.msra.mxu0 0.0
      %1768 = vmatprep.subr.mxu0 0.0
      %1769 = vmatpush1.msra.mxu0 0.0
      %1770 = vmatprep.subr.mxu0 0.0
      %1771 = vmatpush1.msra.mxu0 0.0
      %1772 = vmatprep.subr.mxu0 0.0
      %1773 = vmatpush1.msra.mxu0 0.0
      %1774 = vmatprep.subr.mxu0 0.0
      %1775 = vmatpush1.msra.mxu0 0.0
      %1776 = vmatprep.subr.mxu0 0.0
      %1777 = vmatpush1.msra.mxu0 0.0
      %1778 = vmatprep.subr.mxu0 0.0
      %1779 = vmatpush1.msra.mxu0 0.0
      %1780 = vmatprep.subr.mxu0 0.0
      %1781 = vmatpush1.msra.mxu0 0.0
      %1782 = vmatprep.subr.mxu0 0.0
      %1783 = vmatpush1.msra.mxu0 0.0
      %1784 = vmatprep.subr.mxu0 0.0
      %1785 = vmatpush1.msra.mxu0 0.0
      %1786 = vmatprep.subr.mxu0 0.0
      %1787 = vmatpush1.msra.mxu0 0.0
      %1788 = vmatprep.mubr.f32.mxu0 0.0
      %1789 = vmatmul.mubr.f32.gmra.mrb[0].mxu0 %v1697
      %v1790 = vpop.f32.mrb[0].mxu0
      %v1791 = vadd.f32 %v1722, %v1790
      %v1792 = vpop.f32.mrb[0].mxu0
      %1793 = vmatprep.mubr.f32.mxu0 0.0
      %1794 = vmatmul.mubr.f32.gmra.mrb[0].mxu0 %v1698
      %v1795 = vpop.f32.mrb[0].mxu0
      %v1796 = vadd.f32 %v1722, %v1795
      %v1797 = vpop.f32.mrb[0].mxu0
      %1798 = vdwg.mxu0
      %1799 = vst [vmem:[#allocation2 + $0x20] sm:$0xff] %v420
      %1800 = vst [vmem:[#allocation2 + $0x38] sm:$0xff] %v425
      %v1801 = vld [vmem:[#allocation2] sm:$0x80]
      %v1802 = vld [vmem:[#allocation2 + $0x8] sm:$0x80]
      %v1803 = vld [vmem:[#allocation2 + $0x18] sm:$0xff]
      %v1804 = vld [vmem:[#allocation2 + $0x20] sm:$0xff]
      %v1805 = vld [vmem:[#allocation2 + $0x30] sm:$0x7f]
      %v1806 = vld [vmem:[#allocation2 + $0x38] sm:$0x7f]
      %v1807 = vadd.f32 %v1801, 0.0
      %v1808 = vadd.f32 %v1802, 0.0
      %v1809 = vadd.f32 %v1803, 0.0
      %v1810 = vadd.f32 %v1804, 0.0
      %v1811 = vadd.f32 %v1805, 0.0
      %v1812 = vadd.f32 %v1806, 0.0
      %1816 = vrot.lane.b32.xlu0 %v1802, 120
      %v1817 = vpop.permute.xlu0 %1816
      %1818 = vrot.lane.b32.xlu0 %v1804, 120
      %v1819 = vpop.permute.xlu0 %1818
      %1820 = vrot.lane.b32.xlu0 %v1806, 120
      %v1821 = vpop.permute.xlu0 %1820
      %v1825 = vadd.f32 %v1807, %v1817
      %v1826 = vadd.f32 %v1808, %v1817
      %v1827 = vadd.f32 %v1809, %v1819
      %v1828 = vadd.f32 %v1810, %v1819
      %v1829 = vadd.f32 %v1811, %v1821
      %v1830 = vadd.f32 %v1812, %v1821
      %v1831 = vld [vmem:[#allocation2 + $0x10] sm:$0x80]
      %v1832 = vld [vmem:[#allocation2 + $0x28] sm:$0xff]
      %v1833 = vld [vmem:[#allocation2 + $0x40] sm:$0x7f]
      %1837 = vrot.lane.b32.xlu0 %v1802, 112
      %v1838 = vpop.permute.xlu0 %1837
      %1839 = vrot.lane.b32.xlu0 %v1831, 112
      %v1840 = vpop.permute.xlu0 %1839
      %1841 = vrot.lane.b32.xlu0 %v1804, 112
      %v1842 = vpop.permute.xlu0 %1841
      %1843 = vrot.lane.b32.xlu0 %v1832, 112
      %v1844 = vpop.permute.xlu0 %1843
      %1845 = vrot.lane.b32.xlu0 %v1806, 112
      %v1846 = vpop.permute.xlu0 %1845
      %1847 = vrot.lane.b32.xlu0 %v1833, 112
      %v1848 = vpop.permute.xlu0 %1847
      %v1849 = vsel %vm1507, %v1838, %v1840
      %v1850 = vsel %vm1507, %v1842, %v1844
      %v1851 = vsel %vm1507, %v1846, %v1848
      %v1858 = vadd.f32 %v1825, %v1838
      %v1859 = vadd.f32 %v1826, %v1849
      %v1860 = vadd.f32 %v1827, %v1842
      %v1861 = vadd.f32 %v1828, %v1850
      %v1862 = vadd.f32 %v1829, %v1846
      %v1863 = vadd.f32 %v1830, %v1851
      %v1864 = vld [vmem:[#allocation2 + $0x30] sm:$0xff]
      %v1865 = vld [vmem:[#allocation2 + $0x38] sm:$0xff]
      %v1869 = vrot.slane %v1803, 1
      %v1870 = vrot.slane %v1804, 1
      %v1871 = vrot.slane %v1864, 1
      %v1872 = vsel %vm766, %v1869, %v1871
      %v1873 = vrot.slane %v1865, 1
      %v1874 = vsel %vm766, %v1870, %v1873
      %v1881 = vadd.f32 %v1858, %v1869
      %v1882 = vadd.f32 %v1859, %v1870
      %v1883 = vadd.f32 %v1860, %v1872
      %v1884 = vadd.f32 %v1861, %v1874
      %v1885 = vadd.f32 %v1862, %v1871
      %v1886 = vadd.f32 %v1863, %v1873
      %1887 = vrot.lane.b32.xlu0 %v1870, 120
      %v1888 = vpop.permute.xlu0 %1887
      %1889 = vrot.lane.b32.xlu0 %v1874, 120
      %v1890 = vpop.permute.xlu0 %1889
      %1891 = vrot.lane.b32.xlu0 %v1873, 120
      %v1892 = vpop.permute.xlu0 %1891
      %v1896 = vadd.f32 %v1881, %v1888
      %v1897 = vadd.f32 %v1882, %v1888
      %v1898 = vadd.f32 %v1883, %v1890
      %v1899 = vadd.f32 %v1884, %v1890
      %v1900 = vadd.f32 %v1885, %v1892
      %v1901 = vadd.f32 %v1886, %v1892
      %v1902 = vld [vmem:[#allocation2 + $0x40] sm:$0xff]
      %v1904 = vrot.slane %v1832, 1
      %v1905 = vrot.slane %v1902, 1
      %v1906 = vsel %vm766, %v1904, %v1905
      %1907 = vrot.lane.b32.xlu0 %v1870, 112
      %v1908 = vpop.permute.xlu0 %1907
      %1909 = vrot.lane.b32.xlu0 %v1904, 112
      %v1910 = vpop.permute.xlu0 %1909
      %1911 = vrot.lane.b32.xlu0 %v1874, 112
      %v1912 = vpop.permute.xlu0 %1911
      %1913 = vrot.lane.b32.xlu0 %v1906, 112
      %v1914 = vpop.permute.xlu0 %1913
      %1915 = vrot.lane.b32.xlu0 %v1873, 112
      %v1916 = vpop.permute.xlu0 %1915
      %1917 = vrot.lane.b32.xlu0 %v1905, 112
      %v1918 = vpop.permute.xlu0 %1917
      %v1919 = vsel %vm1507, %v1908, %v1910
      %v1920 = vsel %vm1507, %v1912, %v1914
      %v1921 = vsel %vm1507, %v1916, %v1918
      %v1928 = vadd.f32 %v1896, %v1908
      %v1929 = vadd.f32 %v1897, %v1919
      %v1930 = vadd.f32 %v1898, %v1912
      %v1931 = vadd.f32 %v1899, %v1920
      %v1932 = vadd.f32 %v1900, %v1916
      %v1933 = vadd.f32 %v1901, %v1921
      %v1934 = vld [vmem:[#allocation2 + $0x18] sm:$0xfe]
      %v1935 = vld [vmem:[#allocation2 + $0x20] sm:$0xfe]
      %v1936 = vld [vmem:[#allocation2 + $0x48] sm:$0x1]
      %v1937 = vld [vmem:[#allocation2 + $0x50] sm:$0x1]
      %v1942 = vrot.slane %v1934, 2
      %v1943 = vrot.slane %v1935, 2
      %v1944 = vrot.slane %v1864, 2
      %v1945 = vsel %vm1603, %v1942, %v1944
      %v1946 = vrot.slane %v1865, 2
      %v1947 = vsel %vm1603, %v1943, %v1946
      %v1948 = vrot.slane %v1936, 2
      %v1949 = vsel %vm1603, %v1944, %v1948
      %v1950 = vrot.slane %v1937, 2
      %v1951 = vsel %vm1603, %v1946, %v1950
      %v1958 = vadd.f32 %v1928, %v1942
      %v1959 = vadd.f32 %v1929, %v1943
      %v1960 = vadd.f32 %v1930, %v1945
      %v1961 = vadd.f32 %v1931, %v1947
      %v1962 = vadd.f32 %v1932, %v1949
      %v1963 = vadd.f32 %v1933, %v1951
      %1964 = vrot.lane.b32.xlu0 %v1943, 120
      %v1965 = vpop.permute.xlu0 %1964
      %1966 = vrot.lane.b32.xlu0 %v1947, 120
      %v1967 = vpop.permute.xlu0 %1966
      %1968 = vrot.lane.b32.xlu0 %v1951, 120
      %v1969 = vpop.permute.xlu0 %1968
      %v1973 = vadd.f32 %v1958, %v1965
      %v1974 = vadd.f32 %v1959, %v1965
      %v1975 = vadd.f32 %v1960, %v1967
      %v1976 = vadd.f32 %v1961, %v1967
      %v1977 = vadd.f32 %v1962, %v1969
      %v1978 = vadd.f32 %v1963, %v1969
      %v1979 = vld [vmem:[#allocation2 + $0x20] sm:$0xfe]
      %v1980 = vld [vmem:[#allocation2 + $0x28] sm:$0xfe]
      %v1981 = vld [vmem:[#allocation2 + $0x38] sm:$0xff]
      %v1982 = vld [vmem:[#allocation2 + $0x40] sm:$0xff]
      %v1983 = vld [vmem:[#allocation2 + $0x50] sm:$0x1]
      %v1984 = vld [vmem:[#allocation2 + $0x58] sm:$0x1]
      %v1991 = vrot.slane %v1979, 2
      %v1992 = vrot.slane %v1980, 2
      %v1993 = vrot.slane %v1981, 2
      %v1994 = vsel %vm1603, %v1991, %v1993
      %v1995 = vrot.slane %v1982, 2
      %v1996 = vsel %vm1603, %v1992, %v1995
      %v1997 = vrot.slane %v1983, 2
      %v1998 = vsel %vm1603, %v1993, %v1997
      %v1999 = vrot.slane %v1984, 2
      %v2000 = vsel %vm1603, %v1995, %v1999
      %2001 = vrot.lane.b32.xlu0 %v1991, 112
      %v2002 = vpop.permute.xlu0 %2001
      %2003 = vrot.lane.b32.xlu0 %v1992, 112
      %v2004 = vpop.permute.xlu0 %2003
      %2005 = vrot.lane.b32.xlu0 %v1994, 112
      %v2006 = vpop.permute.xlu0 %2005
      %2007 = vrot.lane.b32.xlu0 %v1996, 112
      %v2008 = vpop.permute.xlu0 %2007
      %2009 = vrot.lane.b32.xlu0 %v1998, 112
      %v2010 = vpop.permute.xlu0 %2009
      %2011 = vrot.lane.b32.xlu0 %v2000, 112
      %v2012 = vpop.permute.xlu0 %2011
      %v2013 = vsel %vm1507, %v2002, %v2004
      %v2014 = vsel %vm1507, %v2006, %v2008
      %v2015 = vsel %vm1507, %v2010, %v2012
      %v2022 = vadd.f32 %v1973, %v2002
      %v2023 = vadd.f32 %v1974, %v2013
      %v2024 = vadd.f32 %v1975, %v2006
      %v2025 = vadd.f32 %v1976, %v2014
      %v2026 = vadd.f32 %v1977, %v2010
      %v2027 = vadd.f32 %v1978, %v2015
      %v2028 = vld [vmem:[%s7] sm:$0xff]
      %v2029 = vld [vmem:[%s7 + $0x8] sm:$0xff]
      %v2032 = vrot.slane %v2028, 1
      %v2033 = vrot.slane %v2029, 1
      %v2034 = vsel %vm766, %v2032, %v2033
      %2035 = vrot.lane.b32.xlu0 %v2032, 120
      %v2036 = vpop.permute.xlu0 %2035
      %2037 = vrot.lane.b32.xlu0 %v2034, 120
      %v2038 = vpop.permute.xlu0 %2037
      %2039 = vrot.lane.b32.xlu0 %v2033, 120
      %v2040 = vpop.permute.xlu0 %2039
      %v2044 = vmul.f32 %v2022, %v2036
      %v2045 = vmul.f32 %v2023, %v2036
      %v2046 = vmul.f32 %v2024, %v2038
      %v2047 = vmul.f32 %v2025, %v2038
      %v2048 = vmul.f32 %v2026, %v2040
      %v2049 = vmul.f32 %v2027, %v2040
      %v2056 = vrot.slane %v2044, 7
      %v2057 = vrot.slane %v2046, 7
      %v2058 = vsel %vm582, %v2056, %v2057
      %v2059 = vrot.slane %v2045, 7
      %v2060 = vrot.slane %v2047, 7
      %v2061 = vsel %vm582, %v2059, %v2060
      %v2062 = vrot.slane %v2048, 7
      %v2063 = vsel %vm582, %v2057, %v2062
      %v2064 = vrot.slane %v2049, 7
      %v2065 = vsel %vm582, %v2060, %v2064
      %2066 = vrot.lane.b32.xlu0 %v2058, 8
      %v2067 = vpop.permute.xlu0 %2066
      %2068 = vrot.lane.b32.xlu0 %v2061, 8
      %v2069 = vpop.permute.xlu0 %2068
      %2070 = vrot.lane.b32.xlu0 %v2063, 8
      %v2071 = vpop.permute.xlu0 %2070
      %2072 = vrot.lane.b32.xlu0 %v2065, 8
      %v2073 = vpop.permute.xlu0 %2072
      %v2074 = vsel %vm601, %v2067, %v2069
      %v2075 = vsel %vm601, %v2071, %v2073
      %v2078 = vadd.f32 %v1791, %v2074
      %v2079 = vadd.f32 %v1796, %v2075
      %2080 = vst [vmem:[#allocation2] sm:$0xff] -inf
      %2081 = vst [vmem:[#allocation2 + $0x8] sm:$0xff] -inf
      %2082 = vst [vmem:[#allocation2 + $0x10] sm:$0xff] -inf
      %2083 = vst [vmem:[#allocation2 + $0x18] sm:$0xff] -inf
      %2084 = vst [vmem:[#allocation2 + $0x20] sm:$0xff] -inf
      %2085 = vst [vmem:[#allocation2 + $0x28] sm:$0xff] -inf
      %2086 = vst [vmem:[#allocation2 + $0x30] sm:$0xff] -inf
      %2087 = vst [vmem:[#allocation2 + $0x38] sm:$0xff] -inf
      %2088 = vst [vmem:[#allocation2 + $0x40] sm:$0xff] -inf
      %2089 = vst [vmem:[#allocation2 + $0x48] sm:$0xff] -inf
      %2090 = vst [vmem:[#allocation2 + $0x50] sm:$0xff] -inf
      %2091 = vst [vmem:[#allocation2 + $0x58] sm:$0xff] -inf
      %2092 = vst [vmem:[#allocation2 + $0x20] sm:$0xff] %v523
      %2093 = vst [vmem:[#allocation2 + $0x38] sm:$0xff] %v528
      %v2094 = vld [vmem:[#allocation2] sm:$0x80]
      %v2095 = vld [vmem:[#allocation2 + $0x8] sm:$0x80]
      %v2096 = vld [vmem:[#allocation2 + $0x18] sm:$0xff]
      %v2097 = vld [vmem:[#allocation2 + $0x20] sm:$0xff]
      %v2098 = vld [vmem:[#allocation2 + $0x30] sm:$0x7f]
      %v2099 = vld [vmem:[#allocation2 + $0x38] sm:$0x7f]
      %2103 = vrot.lane.b32.xlu0 %v2095, 120
      %v2104 = vpop.permute.xlu0 %2103
      %2105 = vrot.lane.b32.xlu0 %v2097, 120
      %v2106 = vpop.permute.xlu0 %2105
      %2107 = vrot.lane.b32.xlu0 %v2099, 120
      %v2108 = vpop.permute.xlu0 %2107
      %v2112 = vmax.f32 %v2094, %v2104
      %v2113 = vmax.f32 %v2095, %v2104
      %v2114 = vmax.f32 %v2096, %v2106
      %v2115 = vmax.f32 %v2097, %v2106
      %v2116 = vmax.f32 %v2098, %v2108
      %v2117 = vmax.f32 %v2099, %v2108
      %v2118 = vld [vmem:[#allocation2 + $0x10] sm:$0x80]
      %v2119 = vld [vmem:[#allocation2 + $0x28] sm:$0xff]
      %v2120 = vld [vmem:[#allocation2 + $0x40] sm:$0x7f]
      %2124 = vrot.lane.b32.xlu0 %v2095, 112
      %v2125 = vpop.permute.xlu0 %2124
      %2126 = vrot.lane.b32.xlu0 %v2118, 112
      %v2127 = vpop.permute.xlu0 %2126
      %2128 = vrot.lane.b32.xlu0 %v2097, 112
      %v2129 = vpop.permute.xlu0 %2128
      %2130 = vrot.lane.b32.xlu0 %v2119, 112
      %v2131 = vpop.permute.xlu0 %2130
      %2132 = vrot.lane.b32.xlu0 %v2099, 112
      %v2133 = vpop.permute.xlu0 %2132
      %2134 = vrot.lane.b32.xlu0 %v2120, 112
      %v2135 = vpop.permute.xlu0 %2134
      %v2136 = vsel %vm1507, %v2125, %v2127
      %v2137 = vsel %vm1507, %v2129, %v2131
      %v2138 = vsel %vm1507, %v2133, %v2135
      %v2145 = vmax.f32 %v2112, %v2125
      %v2146 = vmax.f32 %v2113, %v2136
      %v2147 = vmax.f32 %v2114, %v2129
      %v2148 = vmax.f32 %v2115, %v2137
      %v2149 = vmax.f32 %v2116, %v2133
      %v2150 = vmax.f32 %v2117, %v2138
      %v2151 = vld [vmem:[#allocation2 + $0x30] sm:$0xff]
      %v2152 = vld [vmem:[#allocation2 + $0x38] sm:$0xff]
      %v2156 = vrot.slane %v2096, 1
      %v2157 = vrot.slane %v2097, 1
      %v2158 = vrot.slane %v2151, 1
      %v2159 = vsel %vm766, %v2156, %v2158
      %v2160 = vrot.slane %v2152, 1
      %v2161 = vsel %vm766, %v2157, %v2160
      %v2168 = vmax.f32 %v2145, %v2156
      %v2169 = vmax.f32 %v2146, %v2157
      %v2170 = vmax.f32 %v2147, %v2159
      %v2171 = vmax.f32 %v2148, %v2161
      %v2172 = vmax.f32 %v2149, %v2158
      %v2173 = vmax.f32 %v2150, %v2160
      %2174 = vrot.lane.b32.xlu0 %v2157, 120
      %v2175 = vpop.permute.xlu0 %2174
      %2176 = vrot.lane.b32.xlu0 %v2161, 120
      %v2177 = vpop.permute.xlu0 %2176
      %2178 = vrot.lane.b32.xlu0 %v2160, 120
      %v2179 = vpop.permute.xlu0 %2178
      %v2183 = vmax.f32 %v2168, %v2175
      %v2184 = vmax.f32 %v2169, %v2175
      %v2185 = vmax.f32 %v2170, %v2177
      %v2186 = vmax.f32 %v2171, %v2177
      %v2187 = vmax.f32 %v2172, %v2179
      %v2188 = vmax.f32 %v2173, %v2179
      %v2189 = vld [vmem:[#allocation2 + $0x40] sm:$0xff]
      %v2191 = vrot.slane %v2119, 1
      %v2192 = vrot.slane %v2189, 1
      %v2193 = vsel %vm766, %v2191, %v2192
      %2194 = vrot.lane.b32.xlu0 %v2157, 112
      %v2195 = vpop.permute.xlu0 %2194
      %2196 = vrot.lane.b32.xlu0 %v2191, 112
      %v2197 = vpop.permute.xlu0 %2196
      %2198 = vrot.lane.b32.xlu0 %v2161, 112
      %v2199 = vpop.permute.xlu0 %2198
      %2200 = vrot.lane.b32.xlu0 %v2193, 112
      %v2201 = vpop.permute.xlu0 %2200
      %2202 = vrot.lane.b32.xlu0 %v2160, 112
      %v2203 = vpop.permute.xlu0 %2202
      %2204 = vrot.lane.b32.xlu0 %v2192, 112
      %v2205 = vpop.permute.xlu0 %2204
      %v2206 = vsel %vm1507, %v2195, %v2197
      %v2207 = vsel %vm1507, %v2199, %v2201
      %v2208 = vsel %vm1507, %v2203, %v2205
      %v2215 = vmax.f32 %v2183, %v2195
      %v2216 = vmax.f32 %v2184, %v2206
      %v2217 = vmax.f32 %v2185, %v2199
      %v2218 = vmax.f32 %v2186, %v2207
      %v2219 = vmax.f32 %v2187, %v2203
      %v2220 = vmax.f32 %v2188, %v2208
      %v2221 = vld [vmem:[#allocation2 + $0x18] sm:$0xfe]
      %v2222 = vld [vmem:[#allocation2 + $0x20] sm:$0xfe]
      %v2223 = vld [vmem:[#allocation2 + $0x48] sm:$0x1]
      %v2224 = vld [vmem:[#allocation2 + $0x50] sm:$0x1]
      %v2229 = vrot.slane %v2221, 2
      %v2230 = vrot.slane %v2222, 2
      %v2231 = vrot.slane %v2151, 2
      %v2232 = vsel %vm1603, %v2229, %v2231
      %v2233 = vrot.slane %v2152, 2
      %v2234 = vsel %vm1603, %v2230, %v2233
      %v2235 = vrot.slane %v2223, 2
      %v2236 = vsel %vm1603, %v2231, %v2235
      %v2237 = vrot.slane %v2224, 2
      %v2238 = vsel %vm1603, %v2233, %v2237
      %v2245 = vmax.f32 %v2215, %v2229
      %v2246 = vmax.f32 %v2216, %v2230
      %v2247 = vmax.f32 %v2217, %v2232
      %v2248 = vmax.f32 %v2218, %v2234
      %v2249 = vmax.f32 %v2219, %v2236
      %v2250 = vmax.f32 %v2220, %v2238
      %2251 = vrot.lane.b32.xlu0 %v2230, 120
      %v2252 = vpop.permute.xlu0 %2251
      %2253 = vrot.lane.b32.xlu0 %v2234, 120
      %v2254 = vpop.permute.xlu0 %2253
      %2255 = vrot.lane.b32.xlu0 %v2238, 120
      %v2256 = vpop.permute.xlu0 %2255
      %v2260 = vmax.f32 %v2245, %v2252
      %v2261 = vmax.f32 %v2246, %v2252
      %v2262 = vmax.f32 %v2247, %v2254
      %v2263 = vmax.f32 %v2248, %v2254
      %v2264 = vmax.f32 %v2249, %v2256
      %v2265 = vmax.f32 %v2250, %v2256
      %v2266 = vld [vmem:[#allocation2 + $0x20] sm:$0xfe]
      %v2267 = vld [vmem:[#allocation2 + $0x28] sm:$0xfe]
      %v2268 = vld [vmem:[#allocation2 + $0x38] sm:$0xff]
      %v2269 = vld [vmem:[#allocation2 + $0x40] sm:$0xff]
      %v2270 = vld [vmem:[#allocation2 + $0x50] sm:$0x1]
      %v2271 = vld [vmem:[#allocation2 + $0x58] sm:$0x1]
      %v2278 = vrot.slane %v2266, 2
      %v2279 = vrot.slane %v2267, 2
      %v2280 = vrot.slane %v2268, 2
      %v2281 = vsel %vm1603, %v2278, %v2280
      %v2282 = vrot.slane %v2269, 2
      %v2283 = vsel %vm1603, %v2279, %v2282
      %v2284 = vrot.slane %v2270, 2
      %v2285 = vsel %vm1603, %v2280, %v2284
      %v2286 = vrot.slane %v2271, 2
      %v2287 = vsel %vm1603, %v2282, %v2286
      %2288 = vrot.lane.b32.xlu0 %v2278, 112
      %v2289 = vpop.permute.xlu0 %2288
      %2290 = vrot.lane.b32.xlu0 %v2279, 112
      %v2291 = vpop.permute.xlu0 %2290
      %2292 = vrot.lane.b32.xlu0 %v2281, 112
      %v2293 = vpop.permute.xlu0 %2292
      %2294 = vrot.lane.b32.xlu0 %v2283, 112
      %v2295 = vpop.permute.xlu0 %2294
      %2296 = vrot.lane.b32.xlu0 %v2285, 112
      %v2297 = vpop.permute.xlu0 %2296
      %2298 = vrot.lane.b32.xlu0 %v2287, 112
      %v2299 = vpop.permute.xlu0 %2298
      %v2300 = vsel %vm1507, %v2289, %v2291
      %v2301 = vsel %vm1507, %v2293, %v2295
      %v2302 = vsel %vm1507, %v2297, %v2299
      %v2309 = vmax.f32 %v2260, %v2289
      %v2310 = vmax.f32 %v2261, %v2300
      %v2311 = vmax.f32 %v2262, %v2293
      %v2312 = vmax.f32 %v2263, %v2301
      %v2313 = vmax.f32 %v2264, %v2297
      %v2314 = vmax.f32 %v2265, %v2302
      %v2317 = vrot.slane %v1377, 1
      %v2318 = vrot.slane %v1378, 1
      %v2319 = vsel %vm766, %v2317, %v2318
      %2320 = vrot.lane.b32.xlu0 %v2317, 120
      %v2321 = vpop.permute.xlu0 %2320
      %2322 = vrot.lane.b32.xlu0 %v2319, 120
      %v2323 = vpop.permute.xlu0 %2322
      %2324 = vrot.lane.b32.xlu0 %v2318, 120
      %v2325 = vpop.permute.xlu0 %2324
      %v2329 = vadd.f32 %v2309, %v2321
      %v2330 = vadd.f32 %v2310, %v2321
      %v2331 = vadd.f32 %v2311, %v2323
      %v2332 = vadd.f32 %v2312, %v2323
      %v2333 = vadd.f32 %v2313, %v2325
      %v2334 = vadd.f32 %v2314, %v2325
      %v2335 = vmax.f32 %v2078, 0.0
      %v2336 = vmax.f32 %v2079, 0.0
      %2337 = vst [vmem:[#allocation2] sm:$0xff] 0.0
      %2338 = vst [vmem:[#allocation2 + $0x8] sm:$0xff] 0.0
      %2339 = vst [vmem:[#allocation2 + $0x10] sm:$0xff] 0.0
      %2340 = vst [vmem:[#allocation2 + $0x18] sm:$0xff] 0.0
      %2341 = vst [vmem:[#allocation2 + $0x20] sm:$0xff] 0.0
      %2342 = vst [vmem:[#allocation2 + $0x28] sm:$0xff] 0.0
      %2343 = vst [vmem:[#allocation2 + $0x30] sm:$0xff] 0.0
      %2344 = vst [vmem:[#allocation2 + $0x38] sm:$0xff] 0.0
      %2345 = vst [vmem:[#allocation2 + $0x40] sm:$0xff] 0.0
      %2346 = vst [vmem:[#allocation2 + $0x48] sm:$0xff] 0.0
      %2347 = vst [vmem:[#allocation2 + $0x50] sm:$0xff] 0.0
      %2348 = vst [vmem:[#allocation2 + $0x58] sm:$0xff] 0.0
      %2349 = vst [vmem:[#allocation2 + $0x20] sm:$0xff] %v2335
      %2350 = vst [vmem:[#allocation2 + $0x38] sm:$0xff] %v2336
      %v2351 = vld [vmem:[#allocation2 + $0x20] sm:$0xff]
      %v2352 = vld [vmem:[#allocation2 + $0x38] sm:$0xff]
      %s2353 = scalar_lea.vmem %s6, 48
      %v2354 = vld [vmem:[%s2353 + $0x4] sm:$0x1]
      %v2355 = vlaneseq
      %v2356 = vshrl.u32 %v2355, 7
      %v2357 = vsub.s32 0, %v2356
      %v2358 = vrot.slane %v2354, %v2357
      %v2359 = vmul.f32 %v2351, %v2358
      %v2360 = vmul.f32 %v2352, %v2358
      %v2361 = vld [vmem:[#allocation2] sm:$0x80]
      %v2362 = vld [vmem:[#allocation2 + $0x8] sm:$0x80]
      %v2363 = vld [vmem:[#allocation2 + $0x18] sm:$0xff]
      %v2364 = vld [vmem:[#allocation2 + $0x30] sm:$0x7f]
      %v2365 = vld [vmem:[#allocation2 + $0x38] sm:$0x7f]
      %v2366 = vld [vmem:[%s2353] sm:$0x1]
      %v2367 = vlaneseq
      %v2368 = vshrl.u32 %v2367, 7
      %v2369 = vsub.s32 0, %v2368
      %v2370 = vrot.slane %v2366, %v2369
      %2372 = vrot.lane.b32.xlu0 %v2370, 120
      %v2373 = vpop.permute.xlu0 %2372
      %v2375 = vmul.f32 %v2361, %v2373
      %v2376 = vmul.f32 %v2362, %v2373
      %v2377 = vmul.f32 %v2363, %v2373
      %v2378 = vmul.f32 %v2351, %v2373
      %v2379 = vmul.f32 %v2364, %v2373
      %v2380 = vmul.f32 %v2365, %v2373
      %v2387 = vrot.slane %v2375, 7
      %v2388 = vrot.slane %v2377, 7
      %v2389 = vsel %vm582, %v2387, %v2388
      %v2390 = vrot.slane %v2376, 7
      %v2391 = vrot.slane %v2378, 7
      %v2392 = vsel %vm582, %v2390, %v2391
      %v2393 = vrot.slane %v2379, 7
      %v2394 = vsel %vm582, %v2388, %v2393
      %v2395 = vrot.slane %v2380, 7
      %v2396 = vsel %vm582, %v2391, %v2395
      %2397 = vrot.lane.b32.xlu0 %v2389, 8
      %v2398 = vpop.permute.xlu0 %2397
      %2399 = vrot.lane.b32.xlu0 %v2392, 8
      %v2400 = vpop.permute.xlu0 %2399
      %2401 = vrot.lane.b32.xlu0 %v2394, 8
      %v2402 = vpop.permute.xlu0 %2401
      %2403 = vrot.lane.b32.xlu0 %v2396, 8
      %v2404 = vpop.permute.xlu0 %2403
      %v2405 = vsel %vm601, %v2398, %v2400
      %v2406 = vsel %vm601, %v2402, %v2404
      %v2409 = vadd.f32 %v2359, %v2405
      %v2410 = vadd.f32 %v2360, %v2406
      %v2411 = vld [vmem:[%s2353 + $0x1] sm:$0x1]
      %v2412 = vlaneseq
      %v2413 = vshrl.u32 %v2412, 7
      %v2414 = vsub.s32 0, %v2413
      %v2415 = vrot.slane %v2411, %v2414
      %v2416 = vmul.f32 %v2362, %v2415
      %v2417 = vmul.f32 %v2351, %v2415
      %v2418 = vmul.f32 %v2365, %v2415
      %v2422 = vrot.slane %v2416, 7
      %v2423 = vrot.slane %v2417, 7
      %v2424 = vsel %vm582, %v2422, %v2423
      %v2425 = vrot.slane %v2418, 7
      %v2426 = vsel %vm582, %v2423, %v2425
      %v2429 = vadd.f32 %v2409, %v2424
      %v2430 = vadd.f32 %v2410, %v2426
      %v2431 = vld [vmem:[#allocation2 + $0x10] sm:$0x80]
      %v2432 = vld [vmem:[#allocation2 + $0x28] sm:$0xff]
      %v2433 = vld [vmem:[#allocation2 + $0x40] sm:$0x7f]
      %v2434 = vld [vmem:[%s2353 + $0x2] sm:$0x1]
      %v2435 = vlaneseq
      %v2436 = vshrl.u32 %v2435, 7
      %v2437 = vsub.s32 0, %v2436
      %v2438 = vrot.slane %v2434, %v2437
      %2440 = vrot.lane.b32.xlu0 %v2438, 8
      %v2441 = vpop.permute.xlu0 %2440
      %v2443 = vmul.f32 %v2362, %v2441
      %v2444 = vmul.f32 %v2431, %v2441
      %v2445 = vmul.f32 %v2351, %v2441
      %v2446 = vmul.f32 %v2432, %v2441
      %v2447 = vmul.f32 %v2365, %v2441
      %v2448 = vmul.f32 %v2433, %v2441
      %v2455 = vrot.slane %v2443, 7
      %v2456 = vrot.slane %v2445, 7
      %v2457 = vsel %vm582, %v2455, %v2456
      %v2458 = vrot.slane %v2444, 7
      %v2459 = vrot.slane %v2446, 7
      %v2460 = vsel %vm582, %v2458, %v2459
      %v2461 = vrot.slane %v2447, 7
      %v2462 = vsel %vm582, %v2456, %v2461
      %v2463 = vrot.slane %v2448, 7
      %v2464 = vsel %vm582, %v2459, %v2463
      %2465 = vrot.lane.b32.xlu0 %v2457, 120
      %v2466 = vpop.permute.xlu0 %2465
      %2467 = vrot.lane.b32.xlu0 %v2460, 120
      %v2468 = vpop.permute.xlu0 %2467
      %2469 = vrot.lane.b32.xlu0 %v2462, 120
      %v2470 = vpop.permute.xlu0 %2469
      %2471 = vrot.lane.b32.xlu0 %v2464, 120
      %v2472 = vpop.permute.xlu0 %2471
      %v2473 = vsel %vm670, %v2466, %v2468
      %v2474 = vsel %vm670, %v2470, %v2472
      %v2477 = vadd.f32 %v2429, %v2473
      %v2478 = vadd.f32 %v2430, %v2474
      %v2479 = vld [vmem:[#allocation2 + $0x30] sm:$0xff]
      %v2480 = vld [vmem:[%s2353 + $0x3] sm:$0x1]
      %v2481 = vlaneseq
      %v2482 = vshrl.u32 %v2481, 7
      %v2483 = vsub.s32 0, %v2482
      %v2484 = vrot.slane %v2480, %v2483
      %2486 = vrot.lane.b32.xlu0 %v2484, 120
      %v2487 = vpop.permute.xlu0 %2486
      %v2489 = vmul.f32 %v2363, %v2487
      %v2490 = vmul.f32 %v2351, %v2487
      %v2491 = vmul.f32 %v2479, %v2487
      %v2492 = vmul.f32 %v2352, %v2487
      %2497 = vrot.lane.b32.xlu0 %v2489, 8
      %v2498 = vpop.permute.xlu0 %2497
      %2499 = vrot.lane.b32.xlu0 %v2490, 8
      %v2500 = vpop.permute.xlu0 %2499
      %2501 = vrot.lane.b32.xlu0 %v2491, 8
      %v2502 = vpop.permute.xlu0 %2501
      %2503 = vrot.lane.b32.xlu0 %v2492, 8
      %v2504 = vpop.permute.xlu0 %2503
      %v2505 = vsel %vm601, %v2498, %v2500
      %v2506 = vsel %vm601, %v2502, %v2504
      %v2509 = vadd.f32 %v2477, %v2505
      %v2510 = vadd.f32 %v2478, %v2506
      %v2511 = vld [vmem:[#allocation2 + $0x40] sm:$0xff]
      %v2512 = vld [vmem:[%s2353 + $0x5] sm:$0x1]
      %v2513 = vlaneseq
      %v2514 = vshrl.u32 %v2513, 7
      %v2515 = vsub.s32 0, %v2514
      %v2516 = vrot.slane %v2512, %v2515
      %2518 = vrot.lane.b32.xlu0 %v2516, 8
      %v2519 = vpop.permute.xlu0 %2518
      %v2521 = vmul.f32 %v2351, %v2519
      %v2522 = vmul.f32 %v2432, %v2519
      %v2523 = vmul.f32 %v2352, %v2519
      %v2524 = vmul.f32 %v2511, %v2519
      %2529 = vrot.lane.b32.xlu0 %v2521, 120
      %v2530 = vpop.permute.xlu0 %2529
      %2531 = vrot.lane.b32.xlu0 %v2522, 120
      %v2532 = vpop.permute.xlu0 %2531
      %2533 = vrot.lane.b32.xlu0 %v2523, 120
      %v2534 = vpop.permute.xlu0 %2533
      %2535 = vrot.lane.b32.xlu0 %v2524, 120
      %v2536 = vpop.permute.xlu0 %2535
      %v2537 = vsel %vm670, %v2530, %v2532
      %v2538 = vsel %vm670, %v2534, %v2536
      %v2541 = vadd.f32 %v2509, %v2537
      %v2542 = vadd.f32 %v2510, %v2538
      %v2543 = vld [vmem:[#allocation2 + $0x18] sm:$0xfe]
      %v2544 = vld [vmem:[#allocation2 + $0x20] sm:$0xfe]
      %v2545 = vld [vmem:[#allocation2 + $0x48] sm:$0x1]
      %v2546 = vld [vmem:[#allocation2 + $0x50] sm:$0x1]
      %v2547 = vld [vmem:[%s2353 + $0x6] sm:$0x1]
      %v2548 = vlaneseq
      %v2549 = vshrl.u32 %v2548, 7
      %v2550 = vsub.s32 0, %v2549
      %v2551 = vrot.slane %v2547, %v2550
      %2553 = vrot.lane.b32.xlu0 %v2551, 120
      %v2554 = vpop.permute.xlu0 %2553
      %v2556 = vmul.f32 %v2543, %v2554
      %v2557 = vmul.f32 %v2544, %v2554
      %v2558 = vmul.f32 %v2479, %v2554
      %v2559 = vmul.f32 %v2352, %v2554
      %v2560 = vmul.f32 %v2545, %v2554
      %v2561 = vmul.f32 %v2546, %v2554
      %v2568 = vrot.slane %v2556, 1
      %v2569 = vrot.slane %v2558, 1
      %v2570 = vsel %vm766, %v2568, %v2569
      %v2571 = vrot.slane %v2557, 1
      %v2572 = vrot.slane %v2559, 1
      %v2573 = vsel %vm766, %v2571, %v2572
      %v2574 = vrot.slane %v2560, 1
      %v2575 = vsel %vm766, %v2569, %v2574
      %v2576 = vrot.slane %v2561, 1
      %v2577 = vsel %vm766, %v2572, %v2576
      %2578 = vrot.lane.b32.xlu0 %v2570, 8
      %v2579 = vpop.permute.xlu0 %2578
      %2580 = vrot.lane.b32.xlu0 %v2573, 8
      %v2581 = vpop.permute.xlu0 %2580
      %2582 = vrot.lane.b32.xlu0 %v2575, 8
      %v2583 = vpop.permute.xlu0 %2582
      %2584 = vrot.lane.b32.xlu0 %v2577, 8
      %v2585 = vpop.permute.xlu0 %2584
      %v2586 = vsel %vm601, %v2579, %v2581
      %v2587 = vsel %vm601, %v2583, %v2585
      %v2590 = vadd.f32 %v2541, %v2586
      %v2591 = vadd.f32 %v2542, %v2587
      %v2592 = vld [vmem:[%s2353 + $0x7] sm:$0x1]
      %v2593 = vlaneseq
      %v2594 = vshrl.u32 %v2593, 7
      %v2595 = vsub.s32 0, %v2594
      %v2596 = vrot.slane %v2592, %v2595
      %v2597 = vmul.f32 %v2544, %v2596
      %v2598 = vmul.f32 %v2352, %v2596
      %v2599 = vmul.f32 %v2546, %v2596
      %v2603 = vrot.slane %v2597, 1
      %v2604 = vrot.slane %v2598, 1
      %v2605 = vsel %vm766, %v2603, %v2604
      %v2606 = vrot.slane %v2599, 1
      %v2607 = vsel %vm766, %v2604, %v2606
      %v2610 = vadd.f32 %v2590, %v2605
      %v2611 = vadd.f32 %v2591, %v2607
      %v2612 = vld [vmem:[#allocation2 + $0x20] sm:$0xfe]
      %v2613 = vld [vmem:[#allocation2 + $0x28] sm:$0xfe]
      %v2614 = vld [vmem:[#allocation2 + $0x38] sm:$0xff]
      %v2615 = vld [vmem:[#allocation2 + $0x40] sm:$0xff]
      %v2616 = vld [vmem:[#allocation2 + $0x50] sm:$0x1]
      %v2617 = vld [vmem:[#allocation2 + $0x58] sm:$0x1]
      %v2618 = vld [vmem:[%s2353 + $0x8] sm:$0x1]
      %v2619 = vlaneseq
      %v2620 = vshrl.u32 %v2619, 7
      %v2621 = vsub.s32 0, %v2620
      %v2622 = vrot.slane %v2618, %v2621
      %2624 = vrot.lane.b32.xlu0 %v2622, 8
      %v2625 = vpop.permute.xlu0 %2624
      %v2627 = vmul.f32 %v2612, %v2625
      %v2628 = vmul.f32 %v2613, %v2625
      %v2629 = vmul.f32 %v2614, %v2625
      %v2630 = vmul.f32 %v2615, %v2625
      %v2631 = vmul.f32 %v2616, %v2625
      %v2632 = vmul.f32 %v2617, %v2625
      %v2639 = vrot.slane %v2627, 1
      %v2640 = vrot.slane %v2629, 1
      %v2641 = vsel %vm766, %v2639, %v2640
      %v2642 = vrot.slane %v2628, 1
      %v2643 = vrot.slane %v2630, 1
      %v2644 = vsel %vm766, %v2642, %v2643
      %v2645 = vrot.slane %v2631, 1
      %v2646 = vsel %vm766, %v2640, %v2645
      %v2647 = vrot.slane %v2632, 1
      %v2648 = vsel %vm766, %v2643, %v2647
      %2649 = vrot.lane.b32.xlu0 %v2641, 120
      %v2650 = vpop.permute.xlu0 %2649
      %2651 = vrot.lane.b32.xlu0 %v2644, 120
      %v2652 = vpop.permute.xlu0 %2651
      %2653 = vrot.lane.b32.xlu0 %v2646, 120
      %v2654 = vpop.permute.xlu0 %2653
      %2655 = vrot.lane.b32.xlu0 %v2648, 120
      %v2656 = vpop.permute.xlu0 %2655
      %v2657 = vsel %vm670, %v2650, %v2652
      %v2658 = vsel %vm670, %v2654, %v2656
      %v2661 = vadd.f32 %v2610, %v2657
      %v2662 = vadd.f32 %v2611, %v2658
      %s2663 = scalar_lea.vmem %s5, 384
      %v2664 = vld [vmem:[%s2663] sm:$0xff]
      %v2665 = vld [vmem:[%s2663 + $0x8] sm:$0xff]
      %v2666 = vld [vmem:[%s2663 + $0x10] sm:$0xff]
      %v2667 = vld [vmem:[%s2663 + $0x18] sm:$0xff]
      %v2668 = vld [vmem:[%s2663 + $0x20] sm:$0xff]
      %v2669 = vld [vmem:[%s2663 + $0x28] sm:$0xff]
      %v2670 = vld [vmem:[%s2663 + $0x30] sm:$0xff]
      %v2671 = vld [vmem:[%s2663 + $0x38] sm:$0xff]
      %v2672 = vld [vmem:[%s2663 + $0x40] sm:$0xff]
      %v2673 = vld [vmem:[%s2663 + $0x48] sm:$0xff]
      %v2674 = vld [vmem:[%s2663 + $0x50] sm:$0xff]
      %v2675 = vld [vmem:[%s2663 + $0x58] sm:$0xff]
      %v2676 = vld [vmem:[%s2663 + $0x60] sm:$0xff]
      %v2677 = vld [vmem:[%s2663 + $0x68] sm:$0xff]
      %v2678 = vld [vmem:[%s2663 + $0x70] sm:$0xff]
      %v2679 = vld [vmem:[%s2663 + $0x78] sm:$0xff]
      %s2680 = scalar_lea.vmem %s4, 5
      %v2681 = vld [vmem:[%s2680] sm:$0x1]
      %v2683 = vlaneseq
      %v2684 = vshrl.u32 %v2683, 7
      %v2685 = vsub.s32 0, %v2684
      %v2686 = vrot.slane %v2681, %v2685
      %2688 = vmatprep.subr.mxu0 0.0
      %2689 = vmatpush1.msra.mxu0 %v2664
      %2690 = vmatprep.subr.mxu0 0.0
      %2691 = vmatpush1.msra.mxu0 %v2665
      %2692 = vmatprep.subr.mxu0 0.0
      %2693 = vmatpush1.msra.mxu0 %v2666
      %2694 = vmatprep.subr.mxu0 0.0
      %2695 = vmatpush1.msra.mxu0 %v2667
      %2696 = vmatprep.subr.mxu0 0.0
      %2697 = vmatpush1.msra.mxu0 %v2668
      %2698 = vmatprep.subr.mxu0 0.0
      %2699 = vmatpush1.msra.mxu0 %v2669
      %2700 = vmatprep.subr.mxu0 0.0
      %2701 = vmatpush1.msra.mxu0 %v2670
      %2702 = vmatprep.subr.mxu0 0.0
      %2703 = vmatpush1.msra.mxu0 %v2671
      %2704 = vmatprep.subr.mxu0 0.0
      %2705 = vmatpush1.msra.mxu0 %v2672
      %2706 = vmatprep.subr.mxu0 0.0
      %2707 = vmatpush1.msra.mxu0 %v2673
      %2708 = vmatprep.subr.mxu0 0.0
      %2709 = vmatpush1.msra.mxu0 %v2674
      %2710 = vmatprep.subr.mxu0 0.0
      %2711 = vmatpush1.msra.mxu0 %v2675
      %2712 = vmatprep.subr.mxu0 0.0
      %2713 = vmatpush1.msra.mxu0 %v2676
      %2714 = vmatprep.subr.mxu0 0.0
      %2715 = vmatpush1.msra.mxu0 %v2677
      %2716 = vmatprep.subr.mxu0 0.0
      %2717 = vmatpush1.msra.mxu0 %v2678
      %2718 = vmatprep.subr.mxu0 0.0
      %2719 = vmatpush1.msra.mxu0 %v2679
      %2720 = vmatprep.subr.mxu0 0.0
      %2721 = vmatpush1.msra.mxu0 0.0
      %2722 = vmatprep.subr.mxu0 0.0
      %2723 = vmatpush1.msra.mxu0 0.0
      %2724 = vmatprep.subr.mxu0 0.0
      %2725 = vmatpush1.msra.mxu0 0.0
      %2726 = vmatprep.subr.mxu0 0.0
      %2727 = vmatpush1.msra.mxu0 0.0
      %2728 = vmatprep.subr.mxu0 0.0
      %2729 = vmatpush1.msra.mxu0 0.0
      %2730 = vmatprep.subr.mxu0 0.0
      %2731 = vmatpush1.msra.mxu0 0.0
      %2732 = vmatprep.subr.mxu0 0.0
      %2733 = vmatpush1.msra.mxu0 0.0
      %2734 = vmatprep.subr.mxu0 0.0
      %2735 = vmatpush1.msra.mxu0 0.0
      %2736 = vmatprep.subr.mxu0 0.0
      %2737 = vmatpush1.msra.mxu0 0.0
      %2738 = vmatprep.subr.mxu0 0.0
      %2739 = vmatpush1.msra.mxu0 0.0
      %2740 = vmatprep.subr.mxu0 0.0
      %2741 = vmatpush1.msra.mxu0 0.0
      %2742 = vmatprep.subr.mxu0 0.0
      %2743 = vmatpush1.msra.mxu0 0.0
      %2744 = vmatprep.subr.mxu0 0.0
      %2745 = vmatpush1.msra.mxu0 0.0
      %2746 = vmatprep.subr.mxu0 0.0
      %2747 = vmatpush1.msra.mxu0 0.0
      %2748 = vmatprep.subr.mxu0 0.0
      %2749 = vmatpush1.msra.mxu0 0.0
      %2750 = vmatprep.subr.mxu0 0.0
      %2751 = vmatpush1.msra.mxu0 0.0
      %2752 = vmatprep.mubr.f32.mxu0 0.0
      %2753 = vmatmul.mubr.f32.gmra.mrb[0].mxu0 %v2661
      %v2754 = vpop.f32.mrb[0].mxu0
      %v2755 = vadd.f32 %v2686, %v2754
      %v2756 = vpop.f32.mrb[0].mxu0
      %2757 = vmatprep.mubr.f32.mxu0 0.0
      %2758 = vmatmul.mubr.f32.gmra.mrb[0].mxu0 %v2662
      %v2759 = vpop.f32.mrb[0].mxu0
      %v2760 = vadd.f32 %v2686, %v2759
      %v2761 = vpop.f32.mrb[0].mxu0
      %2762 = vdwg.mxu0
      %v2763 = vmax.f32 %v2755, 0.0
      %v2764 = vmax.f32 %v2760, 0.0
      %2765 = vst [vmem:[#allocation2 + $0x20] sm:$0xff] %v2763
      %2766 = vst [vmem:[#allocation2 + $0x38] sm:$0xff] %v2764
      %v2767 = vld [vmem:[#allocation2 + $0x20] sm:$0xff]
      %v2768 = vld [vmem:[#allocation2 + $0x38] sm:$0xff]
      %s2769 = scalar_lea.vmem %s6, 64
      %v2770 = vld [vmem:[%s2769 + $0x4] sm:$0x1]
      %v2771 = vlaneseq
      %v2772 = vshrl.u32 %v2771, 7
      %v2773 = vsub.s32 0, %v2772
      %v2774 = vrot.slane %v2770, %v2773
      %v2775 = vmul.f32 %v2767, %v2774
      %v2776 = vmul.f32 %v2768, %v2774
      %v2777 = vld [vmem:[#allocation2] sm:$0x80]
      %v2778 = vld [vmem:[#allocation2 + $0x8] sm:$0x80]
      %v2779 = vld [vmem:[#allocation2 + $0x18] sm:$0xff]
      %v2780 = vld [vmem:[#allocation2 + $0x30] sm:$0x7f]
      %v2781 = vld [vmem:[#allocation2 + $0x38] sm:$0x7f]
      %v2782 = vld [vmem:[%s2769] sm:$0x1]
      %v2783 = vlaneseq
      %v2784 = vshrl.u32 %v2783, 7
      %v2785 = vsub.s32 0, %v2784
      %v2786 = vrot.slane %v2782, %v2785
      %2788 = vrot.lane.b32.xlu0 %v2786, 120
      %v2789 = vpop.permute.xlu0 %2788
      %v2791 = vmul.f32 %v2777, %v2789
      %v2792 = vmul.f32 %v2778, %v2789
      %v2793 = vmul.f32 %v2779, %v2789
      %v2794 = vmul.f32 %v2767, %v2789
      %v2795 = vmul.f32 %v2780, %v2789
      %v2796 = vmul.f32 %v2781, %v2789
      %v2803 = vrot.slane %v2791, 7
      %v2804 = vrot.slane %v2793, 7
      %v2805 = vsel %vm582, %v2803, %v2804
      %v2806 = vrot.slane %v2792, 7
      %v2807 = vrot.slane %v2794, 7
      %v2808 = vsel %vm582, %v2806, %v2807
      %v2809 = vrot.slane %v2795, 7
      %v2810 = vsel %vm582, %v2804, %v2809
      %v2811 = vrot.slane %v2796, 7
      %v2812 = vsel %vm582, %v2807, %v2811
      %2813 = vrot.lane.b32.xlu0 %v2805, 8
      %v2814 = vpop.permute.xlu0 %2813
      %2815 = vrot.lane.b32.xlu0 %v2808, 8
      %v2816 = vpop.permute.xlu0 %2815
      %2817 = vrot.lane.b32.xlu0 %v2810, 8
      %v2818 = vpop.permute.xlu0 %2817
      %2819 = vrot.lane.b32.xlu0 %v2812, 8
      %v2820 = vpop.permute.xlu0 %2819
      %v2821 = vsel %vm601, %v2814, %v2816
      %v2822 = vsel %vm601, %v2818, %v2820
      %v2825 = vadd.f32 %v2775, %v2821
      %v2826 = vadd.f32 %v2776, %v2822
      %v2827 = vld [vmem:[%s2769 + $0x1] sm:$0x1]
      %v2828 = vlaneseq
      %v2829 = vshrl.u32 %v2828, 7
      %v2830 = vsub.s32 0, %v2829
      %v2831 = vrot.slane %v2827, %v2830
      %v2832 = vmul.f32 %v2778, %v2831
      %v2833 = vmul.f32 %v2767, %v2831
      %v2834 = vmul.f32 %v2781, %v2831
      %v2838 = vrot.slane %v2832, 7
      %v2839 = vrot.slane %v2833, 7
      %v2840 = vsel %vm582, %v2838, %v2839
      %v2841 = vrot.slane %v2834, 7
      %v2842 = vsel %vm582, %v2839, %v2841
      %v2845 = vadd.f32 %v2825, %v2840
      %v2846 = vadd.f32 %v2826, %v2842
      %v2847 = vld [vmem:[#allocation2 + $0x10] sm:$0x80]
      %v2848 = vld [vmem:[#allocation2 + $0x28] sm:$0xff]
      %v2849 = vld [vmem:[#allocation2 + $0x40] sm:$0x7f]
      %v2850 = vld [vmem:[%s2769 + $0x2] sm:$0x1]
      %v2851 = vlaneseq
      %v2852 = vshrl.u32 %v2851, 7
      %v2853 = vsub.s32 0, %v2852
      %v2854 = vrot.slane %v2850, %v2853
      %2856 = vrot.lane.b32.xlu0 %v2854, 8
      %v2857 = vpop.permute.xlu0 %2856
      %v2859 = vmul.f32 %v2778, %v2857
      %v2860 = vmul.f32 %v2847, %v2857
      %v2861 = vmul.f32 %v2767, %v2857
      %v2862 = vmul.f32 %v2848, %v2857
      %v2863 = vmul.f32 %v2781, %v2857
      %v2864 = vmul.f32 %v2849, %v2857
      %v2871 = vrot.slane %v2859, 7
      %v2872 = vrot.slane %v2861, 7
      %v2873 = vsel %vm582, %v2871, %v2872
      %v2874 = vrot.slane %v2860, 7
      %v2875 = vrot.slane %v2862, 7
      %v2876 = vsel %vm582, %v2874, %v2875
      %v2877 = vrot.slane %v2863, 7
      %v2878 = vsel %vm582, %v2872, %v2877
      %v2879 = vrot.slane %v2864, 7
      %v2880 = vsel %vm582, %v2875, %v2879
      %2881 = vrot.lane.b32.xlu0 %v2873, 120
      %v2882 = vpop.permute.xlu0 %2881
      %2883 = vrot.lane.b32.xlu0 %v2876, 120
      %v2884 = vpop.permute.xlu0 %2883
      %2885 = vrot.lane.b32.xlu0 %v2878, 120
      %v2886 = vpop.permute.xlu0 %2885
      %2887 = vrot.lane.b32.xlu0 %v2880, 120
      %v2888 = vpop.permute.xlu0 %2887
      %v2889 = vsel %vm670, %v2882, %v2884
      %v2890 = vsel %vm670, %v2886, %v2888
      %v2893 = vadd.f32 %v2845, %v2889
      %v2894 = vadd.f32 %v2846, %v2890
      %v2895 = vld [vmem:[#allocation2 + $0x30] sm:$0xff]
      %v2896 = vld [vmem:[%s2769 + $0x3] sm:$0x1]
      %v2897 = vlaneseq
      %v2898 = vshrl.u32 %v2897, 7
      %v2899 = vsub.s32 0, %v2898
      %v2900 = vrot.slane %v2896, %v2899
      %2902 = vrot.lane.b32.xlu0 %v2900, 120
      %v2903 = vpop.permute.xlu0 %2902
      %v2905 = vmul.f32 %v2779, %v2903
      %v2906 = vmul.f32 %v2767, %v2903
      %v2907 = vmul.f32 %v2895, %v2903
      %v2908 = vmul.f32 %v2768, %v2903
      %2913 = vrot.lane.b32.xlu0 %v2905, 8
      %v2914 = vpop.permute.xlu0 %2913
      %2915 = vrot.lane.b32.xlu0 %v2906, 8
      %v2916 = vpop.permute.xlu0 %2915
      %2917 = vrot.lane.b32.xlu0 %v2907, 8
      %v2918 = vpop.permute.xlu0 %2917
      %2919 = vrot.lane.b32.xlu0 %v2908, 8
      %v2920 = vpop.permute.xlu0 %2919
      %v2921 = vsel %vm601, %v2914, %v2916
      %v2922 = vsel %vm601, %v2918, %v2920
      %v2925 = vadd.f32 %v2893, %v2921
      %v2926 = vadd.f32 %v2894, %v2922
      %v2927 = vld [vmem:[#allocation2 + $0x40] sm:$0xff]
      %v2928 = vld [vmem:[%s2769 + $0x5] sm:$0x1]
      %v2929 = vlaneseq
      %v2930 = vshrl.u32 %v2929, 7
      %v2931 = vsub.s32 0, %v2930
      %v2932 = vrot.slane %v2928, %v2931
      %2934 = vrot.lane.b32.xlu0 %v2932, 8
      %v2935 = vpop.permute.xlu0 %2934
      %v2937 = vmul.f32 %v2767, %v2935
      %v2938 = vmul.f32 %v2848, %v2935
      %v2939 = vmul.f32 %v2768, %v2935
      %v2940 = vmul.f32 %v2927, %v2935
      %2945 = vrot.lane.b32.xlu0 %v2937, 120
      %v2946 = vpop.permute.xlu0 %2945
      %2947 = vrot.lane.b32.xlu0 %v2938, 120
      %v2948 = vpop.permute.xlu0 %2947
      %2949 = vrot.lane.b32.xlu0 %v2939, 120
      %v2950 = vpop.permute.xlu0 %2949
      %2951 = vrot.lane.b32.xlu0 %v2940, 120
      %v2952 = vpop.permute.xlu0 %2951
      %v2953 = vsel %vm670, %v2946, %v2948
      %v2954 = vsel %vm670, %v2950, %v2952
      %v2957 = vadd.f32 %v2925, %v2953
      %v2958 = vadd.f32 %v2926, %v2954
      %v2959 = vld [vmem:[#allocation2 + $0x18] sm:$0xfe]
      %v2960 = vld [vmem:[#allocation2 + $0x20] sm:$0xfe]
      %v2961 = vld [vmem:[#allocation2 + $0x48] sm:$0x1]
      %v2962 = vld [vmem:[#allocation2 + $0x50] sm:$0x1]
      %v2963 = vld [vmem:[%s2769 + $0x6] sm:$0x1]
      %v2964 = vlaneseq
      %v2965 = vshrl.u32 %v2964, 7
      %v2966 = vsub.s32 0, %v2965
      %v2967 = vrot.slane %v2963, %v2966
      %2969 = vrot.lane.b32.xlu0 %v2967, 120
      %v2970 = vpop.permute.xlu0 %2969
      %v2972 = vmul.f32 %v2959, %v2970
      %v2973 = vmul.f32 %v2960, %v2970
      %v2974 = vmul.f32 %v2895, %v2970
      %v2975 = vmul.f32 %v2768, %v2970
      %v2976 = vmul.f32 %v2961, %v2970
      %v2977 = vmul.f32 %v2962, %v2970
      %v2984 = vrot.slane %v2972, 1
      %v2985 = vrot.slane %v2974, 1
      %v2986 = vsel %vm766, %v2984, %v2985
      %v2987 = vrot.slane %v2973, 1
      %v2988 = vrot.slane %v2975, 1
      %v2989 = vsel %vm766, %v2987, %v2988
      %v2990 = vrot.slane %v2976, 1
      %v2991 = vsel %vm766, %v2985, %v2990
      %v2992 = vrot.slane %v2977, 1
      %v2993 = vsel %vm766, %v2988, %v2992
      %2994 = vrot.lane.b32.xlu0 %v2986, 8
      %v2995 = vpop.permute.xlu0 %2994
      %2996 = vrot.lane.b32.xlu0 %v2989, 8
      %v2997 = vpop.permute.xlu0 %2996
      %2998 = vrot.lane.b32.xlu0 %v2991, 8
      %v2999 = vpop.permute.xlu0 %2998
      %3000 = vrot.lane.b32.xlu0 %v2993, 8
      %v3001 = vpop.permute.xlu0 %3000
      %v3002 = vsel %vm601, %v2995, %v2997
      %v3003 = vsel %vm601, %v2999, %v3001
      %v3006 = vadd.f32 %v2957, %v3002
      %v3007 = vadd.f32 %v2958, %v3003
      %v3008 = vld [vmem:[%s2769 + $0x7] sm:$0x1]
      %v3009 = vlaneseq
      %v3010 = vshrl.u32 %v3009, 7
      %v3011 = vsub.s32 0, %v3010
      %v3012 = vrot.slane %v3008, %v3011
      %v3013 = vmul.f32 %v2960, %v3012
      %v3014 = vmul.f32 %v2768, %v3012
      %v3015 = vmul.f32 %v2962, %v3012
      %v3019 = vrot.slane %v3013, 1
      %v3020 = vrot.slane %v3014, 1
      %v3021 = vsel %vm766, %v3019, %v3020
      %v3022 = vrot.slane %v3015, 1
      %v3023 = vsel %vm766, %v3020, %v3022
      %v3026 = vadd.f32 %v3006, %v3021
      %v3027 = vadd.f32 %v3007, %v3023
      %v3028 = vld [vmem:[#allocation2 + $0x20] sm:$0xfe]
      %v3029 = vld [vmem:[#allocation2 + $0x28] sm:$0xfe]
      %v3030 = vld [vmem:[#allocation2 + $0x38] sm:$0xff]
      %v3031 = vld [vmem:[#allocation2 + $0x40] sm:$0xff]
      %v3032 = vld [vmem:[#allocation2 + $0x50] sm:$0x1]
      %v3033 = vld [vmem:[#allocation2 + $0x58] sm:$0x1]
      %v3034 = vld [vmem:[%s2769 + $0x8] sm:$0x1]
      %v3035 = vlaneseq
      %v3036 = vshrl.u32 %v3035, 7
      %v3037 = vsub.s32 0, %v3036
      %v3038 = vrot.slane %v3034, %v3037
      %3040 = vrot.lane.b32.xlu0 %v3038, 8
      %v3041 = vpop.permute.xlu0 %3040
      %v3043 = vmul.f32 %v3028, %v3041
      %v3044 = vmul.f32 %v3029, %v3041
      %v3045 = vmul.f32 %v3030, %v3041
      %v3046 = vmul.f32 %v3031, %v3041
      %v3047 = vmul.f32 %v3032, %v3041
      %v3048 = vmul.f32 %v3033, %v3041
      %v3055 = vrot.slane %v3043, 1
      %v3056 = vrot.slane %v3045, 1
      %v3057 = vsel %vm766, %v3055, %v3056
      %v3058 = vrot.slane %v3044, 1
      %v3059 = vrot.slane %v3046, 1
      %v3060 = vsel %vm766, %v3058, %v3059
      %v3061 = vrot.slane %v3047, 1
      %v3062 = vsel %vm766, %v3056, %v3061
      %v3063 = vrot.slane %v3048, 1
      %v3064 = vsel %vm766, %v3059, %v3063
      %3065 = vrot.lane.b32.xlu0 %v3057, 120
      %v3066 = vpop.permute.xlu0 %3065
      %3067 = vrot.lane.b32.xlu0 %v3060, 120
      %v3068 = vpop.permute.xlu0 %3067
      %3069 = vrot.lane.b32.xlu0 %v3062, 120
      %v3070 = vpop.permute.xlu0 %3069
      %3071 = vrot.lane.b32.xlu0 %v3064, 120
      %v3072 = vpop.permute.xlu0 %3071
      %v3073 = vsel %vm670, %v3066, %v3068
      %v3074 = vsel %vm670, %v3070, %v3072
      %v3077 = vadd.f32 %v3026, %v3073
      %v3078 = vadd.f32 %v3027, %v3074
      %s3079 = scalar_lea.vmem %s5, 512
      %v3080 = vld [vmem:[%s3079] sm:$0xff]
      %v3081 = vld [vmem:[%s3079 + $0x8] sm:$0xff]
      %v3082 = vld [vmem:[%s3079 + $0x10] sm:$0xff]
      %v3083 = vld [vmem:[%s3079 + $0x18] sm:$0xff]
      %v3084 = vld [vmem:[%s3079 + $0x20] sm:$0xff]
      %v3085 = vld [vmem:[%s3079 + $0x28] sm:$0xff]
      %v3086 = vld [vmem:[%s3079 + $0x30] sm:$0xff]
      %v3087 = vld [vmem:[%s3079 + $0x38] sm:$0xff]
      %v3088 = vld [vmem:[%s3079 + $0x40] sm:$0xff]
      %v3089 = vld [vmem:[%s3079 + $0x48] sm:$0xff]
      %v3090 = vld [vmem:[%s3079 + $0x50] sm:$0xff]
      %v3091 = vld [vmem:[%s3079 + $0x58] sm:$0xff]
      %v3092 = vld [vmem:[%s3079 + $0x60] sm:$0xff]
      %v3093 = vld [vmem:[%s3079 + $0x68] sm:$0xff]
      %v3094 = vld [vmem:[%s3079 + $0x70] sm:$0xff]
      %v3095 = vld [vmem:[%s3079 + $0x78] sm:$0xff]
      %s3096 = scalar_lea.vmem %s4, 6
      %v3097 = vld [vmem:[%s3096] sm:$0x1]
      %v3099 = vlaneseq
      %v3100 = vshrl.u32 %v3099, 7
      %v3101 = vsub.s32 0, %v3100
      %v3102 = vrot.slane %v3097, %v3101
      %3104 = vmatprep.subr.mxu0 0.0
      %3105 = vmatpush1.msra.mxu0 %v3080
      %3106 = vmatprep.subr.mxu0 0.0
      %3107 = vmatpush1.msra.mxu0 %v3081
      %3108 = vmatprep.subr.mxu0 0.0
      %3109 = vmatpush1.msra.mxu0 %v3082
      %3110 = vmatprep.subr.mxu0 0.0
      %3111 = vmatpush1.msra.mxu0 %v3083
      %3112 = vmatprep.subr.mxu0 0.0
      %3113 = vmatpush1.msra.mxu0 %v3084
      %3114 = vmatprep.subr.mxu0 0.0
      %3115 = vmatpush1.msra.mxu0 %v3085
      %3116 = vmatprep.subr.mxu0 0.0
      %3117 = vmatpush1.msra.mxu0 %v3086
      %3118 = vmatprep.subr.mxu0 0.0
      %3119 = vmatpush1.msra.mxu0 %v3087
      %3120 = vmatprep.subr.mxu0 0.0
      %3121 = vmatpush1.msra.mxu0 %v3088
      %3122 = vmatprep.subr.mxu0 0.0
      %3123 = vmatpush1.msra.mxu0 %v3089
      %3124 = vmatprep.subr.mxu0 0.0
      %3125 = vmatpush1.msra.mxu0 %v3090
      %3126 = vmatprep.subr.mxu0 0.0
      %3127 = vmatpush1.msra.mxu0 %v3091
      %3128 = vmatprep.subr.mxu0 0.0
      %3129 = vmatpush1.msra.mxu0 %v3092
      %3130 = vmatprep.subr.mxu0 0.0
      %3131 = vmatpush1.msra.mxu0 %v3093
      %3132 = vmatprep.subr.mxu0 0.0
      %3133 = vmatpush1.msra.mxu0 %v3094
      %3134 = vmatprep.subr.mxu0 0.0
      %3135 = vmatpush1.msra.mxu0 %v3095
      %3136 = vmatprep.subr.mxu0 0.0
      %3137 = vmatpush1.msra.mxu0 0.0
      %3138 = vmatprep.subr.mxu0 0.0
      %3139 = vmatpush1.msra.mxu0 0.0
      %3140 = vmatprep.subr.mxu0 0.0
      %3141 = vmatpush1.msra.mxu0 0.0
      %3142 = vmatprep.subr.mxu0 0.0
      %3143 = vmatpush1.msra.mxu0 0.0
      %3144 = vmatprep.subr.mxu0 0.0
      %3145 = vmatpush1.msra.mxu0 0.0
      %3146 = vmatprep.subr.mxu0 0.0
      %3147 = vmatpush1.msra.mxu0 0.0
      %3148 = vmatprep.subr.mxu0 0.0
      %3149 = vmatpush1.msra.mxu0 0.0
      %3150 = vmatprep.subr.mxu0 0.0
      %3151 = vmatpush1.msra.mxu0 0.0
      %3152 = vmatprep.subr.mxu0 0.0
      %3153 = vmatpush1.msra.mxu0 0.0
      %3154 = vmatprep.subr.mxu0 0.0
      %3155 = vmatpush1.msra.mxu0 0.0
      %3156 = vmatprep.subr.mxu0 0.0
      %3157 = vmatpush1.msra.mxu0 0.0
      %3158 = vmatprep.subr.mxu0 0.0
      %3159 = vmatpush1.msra.mxu0 0.0
      %3160 = vmatprep.subr.mxu0 0.0
      %3161 = vmatpush1.msra.mxu0 0.0
      %3162 = vmatprep.subr.mxu0 0.0
      %3163 = vmatpush1.msra.mxu0 0.0
      %3164 = vmatprep.subr.mxu0 0.0
      %3165 = vmatpush1.msra.mxu0 0.0
      %3166 = vmatprep.subr.mxu0 0.0
      %3167 = vmatpush1.msra.mxu0 0.0
      %3168 = vmatprep.mubr.f32.mxu0 0.0
      %3169 = vmatmul.mubr.f32.gmra.mrb[0].mxu0 %v3077
      %v3170 = vpop.f32.mrb[0].mxu0
      %v3171 = vadd.f32 %v3102, %v3170
      %v3172 = vpop.f32.mrb[0].mxu0
      %3173 = vmatprep.mubr.f32.mxu0 0.0
      %3174 = vmatmul.mubr.f32.gmra.mrb[0].mxu0 %v3078
      %v3175 = vpop.f32.mrb[0].mxu0
      %v3176 = vadd.f32 %v3102, %v3175
      %v3177 = vpop.f32.mrb[0].mxu0
      %3178 = vdwg.mxu0
      %v3179 = vadd.f32 %v3171, %v420
      %v3180 = vadd.f32 %v3176, %v425
      %3181 = vst [vmem:[%s325] sm:$0xff] %v1377
      %3182 = vst [vmem:[%s325 + $0x8] sm:$0xff] %v1378
      %s3183 = scalar_lea.vmem %s325, 16
      %3184 = vst [vmem:[%s3183] sm:$0xff] %v2078
      %3185 = vst [vmem:[%s3183 + $0x8] sm:$0xff] %v2079
      %3192 = vrot.lane.b32.xlu0 %v2329, 8
      %v3193 = vpop.permute.xlu0 %3192
      %3194 = vrot.lane.b32.xlu0 %v2330, 8
      %v3195 = vpop.permute.xlu0 %3194
      %3196 = vrot.lane.b32.xlu0 %v2331, 8
      %v3197 = vpop.permute.xlu0 %3196
      %3198 = vrot.lane.b32.xlu0 %v2332, 8
      %v3199 = vpop.permute.xlu0 %3198
      %3200 = vrot.lane.b32.xlu0 %v2333, 8
      %v3201 = vpop.permute.xlu0 %3200
      %3202 = vrot.lane.b32.xlu0 %v2334, 8
      %v3203 = vpop.permute.xlu0 %3202
      %v3204 = vsel %vm601, %v3193, %v3195
      %v3205 = vsel %vm601, %v3197, %v3199
      %v3206 = vsel %vm601, %v3201, %v3203
      %s3210 = scalar_lea.vmem %s325, 32
      %3211 = vst [vmem:[%s3210 - $0x7] sm:$0x80] %v3204
      %3212 = vst [vmem:[%s3210 + $0x1] sm:$0xff] %v3205
      %3213 = vst [vmem:[%s3210 + $0x9] sm:$0x7f] %v3206
      %s3214 = scalar_lea.vmem %s325, 48
      %3215 = vst [vmem:[%s3214] sm:$0xff] %v3179
      %3216 = vst [vmem:[%s3214 + $0x8] sm:$0xff] %v3180
      %p3217 = scmp.lt.s32.totalorder %s19, 1
      %s3218 = scalar_select %p3217, %s19, 1
      %s3219 = smul.addr %s3218, 8
      %s3220 = smul.addr %s3219, 8
      %s3221 = scalar_lea.vmem %s8, %s3220
      // Predicated region
      $region53: #{cell_forward.1} parent=51 // pred_check
        %p3222 = pneg %p215
      $region54: #{cell_forward.1} parent=51 // pred_check_branch
        %3224 = sbr.rel (%p3222) target = $region56
      $region55: #{cell_forward.1} parent=51 // pred_region
        _
      $region56: #{cell_forward.1} parent=51 // pred_fallthru
        _
    $region52: #{cell_forward.1} parent=5 // pred_fallthru
      _
    %p3225 = scmp.le.s32.totalorder 2, %s14
    // Predicated region
    $region57: #{cell_forward.1} parent=5 // pred_check
      %p3226 = pneg %p3225
    $region58: #{cell_forward.1} parent=5 // pred_check_branch
      %3228 = sbr.rel (%p3226) target = $region60
    $region59: #{cell_forward.1} parent=5 // pred_region
      %s3229 = ssub.s32 %s14, 2
      // Predicated region
      $region61: #{cell_forward.1} parent=59 // pred_check
        %p3230 = pneg %p221
      $region62: #{cell_forward.1} parent=59 // pred_check_branch
        %3232 = sbr.rel (%p3230) target = $region64
      $region63: #{cell_forward.1} parent=59 // pred_region
        %p3233 = scmp.lt.s32.totalorder %s20, 1
        %s3234 = scalar_select %p3233, %s20, 1
        %s3235 = smul.addr %s3234, 8
        %s3236 = smul.addr %s3235, 8
        %s3237 = scalar_lea.vmem %s8, %s3236
      $region64: #{cell_forward.1} parent=59 // pred_fallthru
        _
    $region60: #{cell_forward.1} parent=5 // pred_fallthru
      _
  $region6: #{cell_forward.1} parent=0 // loop_footer
    %s18 = sadd.s32 1, %s14
  $region7: #{cell_forward.1} parent=0 // loop_footer_branch
    %13 = sbr.rel target = $region3
  $region8: #{cell_forward.1} parent=0 // loop_exit
    _

</llo_original>
